<compile_context>
chip_gen: v6e
topology: v6e:2x2x1
jax: 0.10.0
libtpu: 0.0.40
codegen_flags: <defaults>
</compile_context>

<pallas_src>
import functools
import random

import jax
import jax.numpy as jnp
from jax.experimental import pallas as pl
from jax.experimental.pallas import tpu as pltpu

# ----------------- static configuration (mirrors TCNLSTMModel.__init__) -----------------
NUM_LAYERS = 2            # LSTM num_layers
HIDDEN_SIZE = 32          # LSTM hidden_size
TCN_NUM_LAYERS = 2
NUM_OBS = 4               # Conv1d input channels
NUM_PRED = 8              # last TCN layer channels == LSTM sequence length
NUM_FEATURE_INPUT = 16    # Conv1d length (preserved by k=1 convs) == LSTM input_size
NUM_FEATURE_OUTPUT = 6
BATCH = 2
BN_EPS = 1e-5

random.seed(0)  # deterministic stand-in for random.randint(2, 10) in __init__
CNN_CHANNELS = []
for _i in range(TCN_NUM_LAYERS):
    if _i == TCN_NUM_LAYERS - 1:
        CNN_CHANNELS.append(NUM_PRED)
    else:
        CNN_CHANNELS.append(NUM_PRED * random.randint(2, 10))


# ------------------------------------ Pallas kernel -------------------------------------
def tcn_lstm_kernel(*refs, tcn_n, lstm_n, batch, seq_len, hidden):
    """Single invocation, whole batch.  Ref order:
       x(B,C_in,L), [tcn: w'(C_out,C_in), b'(C_out,1)]*,
       [lstm: w_ih(D,4H), w_hh(H,4H), bias(1,4H)]*, fc_w(H,F), fc_b(1,F), out(T*B,F)
       Gate order along the stacked 4H lane axis is (i, f, o, g).
    """
    pos = 0
    x_ref = refs[pos]; pos += 1
    tcn_refs = [refs[pos + 2 * i: pos + 2 * i + 2] for i in range(tcn_n)]
    pos += 2 * tcn_n
    lstm_refs = [refs[pos + 3 * i: pos + 3 * i + 3] for i in range(lstm_n)]
    pos += 3 * lstm_n
    fc_w_ref, fc_b_ref, out_ref = refs[pos], refs[pos + 1], refs[pos + 2]

    B, T, H = batch, seq_len, hidden

    # ---- TCN: per-batch pointwise convs (channel-mix matmuls) with BN folded in + ReLU ----
    tcn_out = []
    for b in range(B):
        hb = x_ref[b]                                     # (C_in, L)
        for (w_ref, b_ref) in tcn_refs:
            hb = jnp.maximum(
                jnp.dot(w_ref[...], hb, preferred_element_type=jnp.float32) + b_ref[...],
                0.0)
        tcn_out.append(hb)                                # (T, L)

    # ---- LSTM stack.  Sequence rows are (time-major, batch-inner): row = t*B + b ----
    def run_layer(gproj, w_hh):
        # gproj: (T*B, 4H) input projections + bias.  w_hh: (H, 4H).
        h = jnp.zeros((B, H), jnp.float32)
        c = jnp.zeros((B, H), jnp.float32)
        hs = []
        for t in range(T):                                # static unroll: T is tiny & known
            z = gproj[t * B:(t + 1) * B, :] + jnp.dot(
                h, w_hh, preferred_element_type=jnp.float32)          # (B, 4H)
            sz = jax.nn.sigmoid(z[:, :3 * H])             # one contiguous sigmoid (i,f,o)
            i_t = sz[:, :H]
            f_t = sz[:, H:2 * H]
            o_t = sz[:, 2 * H:3 * H]
            g_t = jnp.tanh(z[:, 3 * H:])                  # one tanh (g)
            c = f_t * c + i_t * g_t
            h = o_t * jnp.tanh(c)
            hs.append(h)
        return jnp.concatenate(hs, axis=0)                # (T*B, H)

    # Layer 0: one fused 4-gate input projection per batch element, interleaved once
    # (off the recurrent critical path) into (T*B, 4H).
    w_ih0, w_hh0, bias0 = lstm_refs[0]
    gp = [jnp.dot(tcn_out[b], w_ih0[...], preferred_element_type=jnp.float32)
          for b in range(B)]                              # each (T, 4H)
    gproj = jnp.concatenate(
        [gp[b][t:t + 1, :] for t in range(T) for b in range(B)], axis=0) + bias0[...]
    seq = run_layer(gproj, w_hh0[...])

    for layer in range(1, lstm_n):
        w_ih, w_hh, bias = lstm_refs[layer]
        gproj = jnp.dot(seq, w_ih[...], preferred_element_type=jnp.float32) + bias[...]
        seq = run_layer(gproj, w_hh[...])

    # ---- final Linear ----
    out_ref[...] = (jnp.dot(seq, fc_w_ref[...], preferred_element_type=jnp.float32)
                    + fc_b_ref[...]).astype(out_ref.dtype)


# --------------------------- host-side parameter re-layout -------------------------------
def prepare_kernel_params(params):
    """Fold BN(eval) into the conv weights and stack/reorder the LSTM gates to (i,f,o,g)."""
    flat = []
    for (w, b, gamma, beta, mean, var) in params["tcn"]:
        scale = gamma / jnp.sqrt(var + BN_EPS)            # (C_out, 1)
        w_f = scale * w                                   # (C_out, C_in)
        b_f = scale * (b - mean) + beta                   # (C_out, 1)
        flat += [w_f, b_f]
    for (w_ih, w_hh, b_ih, b_hh) in params["lstm"]:
        order = (0, 1, 3, 2)                              # PyTorch (i,f,g,o) -> (i,f,o,g)
        w_ih_s = jnp.concatenate([w_ih[g] for g in order], axis=1)            # (D, 4H)
        w_hh_s = jnp.concatenate([w_hh[g] for g in order], axis=1)            # (H, 4H)
        bias_s = jnp.concatenate([b_ih[g] + b_hh[g] for g in order], axis=1)  # (1, 4H)
        flat += [w_ih_s, w_hh_s, bias_s]
    flat += [params["fc_w"], params["fc_b"]]
    return flat


# ------------------------------------ wrapper --------------------------------------------
def tcn_lstm_forward(x, params):
    B, C_in, L = x.shape
    T = CNN_CHANNELS[-1]          # num_pred == LSTM seq length
    H = HIDDEN_SIZE
    F_out = NUM_FEATURE_OUTPUT

    flat_inputs = [x] + prepare_kernel_params(params)

    def full_spec(a):
        nd = a.ndim
        return pl.BlockSpec(a.shape, lambda i, _nd=nd: (0,) * _nd)

    in_specs = [full_spec(a) for a in flat_inputs]

    kernel = functools.partial(
        tcn_lstm_kernel,
        tcn_n=len(params["tcn"]),
        lstm_n=len(params["lstm"]),
        batch=B, seq_len=T, hidden=H)

    out_flat = pl.pallas_call(
        kernel,
        out_shape=jax.ShapeDtypeStruct((T * B, F_out), jnp.float32),
        grid_spec=pltpu.PrefetchScalarGridSpec(
            num_scalar_prefetch=0,
            grid=(1,),
            in_specs=in_specs,
            out_specs=pl.BlockSpec((T * B, F_out), lambda i: (0, 0)),
        ),
        compiler_params=pltpu.CompilerParams(dimension_semantics=("arbitrary",)),
    )(*flat_inputs)

    # rows are (t*B + b) -> reshape/transpose back to PyTorch's (B, T, F_out)
    return out_flat.reshape(T, B, F_out).transpose(1, 0, 2)


# ----------------------------- deterministic parameter init ------------------------------
def init_params(key):
    keys = iter(jax.random.split(key, 64))
    params = {"tcn": [], "lstm": []}

    in_ch = NUM_OBS
    for out_ch in CNN_CHANNELS:
        w = jax.random.normal(next(keys), (out_ch, in_ch), jnp.float32) / jnp.sqrt(in_ch)
        b = 0.1 * jax.random.normal(next(keys), (out_ch, 1), jnp.float32)
        gamma = 1.0 + 0.1 * jax.random.normal(next(keys), (out_ch, 1), jnp.float32)
        beta = 0.1 * jax.random.normal(next(keys), (out_ch, 1), jnp.float32)
        r_mean = 0.1 * jax.random.normal(next(keys), (out_ch, 1), jnp.float32)
        r_var = 1.0 + 0.1 * jnp.abs(jax.random.normal(next(keys), (out_ch, 1), jnp.float32))
        params["tcn"].append((w, b, gamma, beta, r_mean, r_var))
        in_ch = out_ch

    for layer in range(NUM_LAYERS):
        d_in = NUM_FEATURE_INPUT if layer == 0 else HIDDEN_SIZE
        k = 1.0 / jnp.sqrt(HIDDEN_SIZE)
        # per-gate weights stored pre-transposed (D, H); PyTorch gate order (i, f, g, o)
        w_ih = jax.random.uniform(next(keys), (4, d_in, HIDDEN_SIZE), jnp.float32, -k, k)
        w_hh = jax.random.uniform(next(keys), (4, HIDDEN_SIZE, HIDDEN_SIZE), jnp.float32, -k, k)
        b_ih = jax.random.uniform(next(keys), (4, 1, HIDDEN_SIZE), jnp.float32, -k, k)
        b_hh = jax.random.uniform(next(keys), (4, 1, HIDDEN_SIZE), jnp.float32, -k, k)
        params["lstm"].append((w_ih, w_hh, b_ih, b_hh))

    kf = 1.0 / jnp.sqrt(HIDDEN_SIZE)
    params["fc_w"] = jax.random.uniform(next(keys), (HIDDEN_SIZE, NUM_FEATURE_OUTPUT),
                                        jnp.float32, -kf, kf)
    params["fc_b"] = jax.random.uniform(next(keys), (1, NUM_FEATURE_OUTPUT),
                                        jnp.float32, -kf, kf)
    return params


# --------------------------------- pure-JAX reference ------------------------------------
def reference_forward(x, params):
    B = x.shape[0]
    h = x
    for (w, b, gamma, beta, mean, var) in params["tcn"]:
        pre = jnp.einsum("oc,bcl->bol", w, h) + b[None]
        bn = (pre - mean[None]) / jnp.sqrt(var[None] + BN_EPS) * gamma[None] + beta[None]
        h = jnp.maximum(bn, 0.0)
    seq = h  # (B, T, L)
    for (w_ih, w_hh, b_ih, b_hh) in params["lstm"]:
        T = seq.shape[1]
        hs = jnp.zeros((B, HIDDEN_SIZE), jnp.float32)
        cs = jnp.zeros((B, HIDDEN_SIZE), jnp.float32)
        outs = []
        for t in range(T):
            x_t = seq[:, t, :]
            g = [x_t @ w_ih[i] + hs @ w_hh[i] + b_ih[i] + b_hh[i] for i in range(4)]
            i_t = jax.nn.sigmoid(g[0])
            f_t = jax.nn.sigmoid(g[1])
            g_t = jnp.tanh(g[2])
            o_t = jax.nn.sigmoid(g[3])
            cs = f_t * cs + i_t * g_t
            hs = o_t * jnp.tanh(cs)
            outs.append(hs)
        seq = jnp.stack(outs, axis=1)
    return seq @ params["fc_w"] + params["fc_b"]


if __name__ == "__main__":
    key = jax.random.PRNGKey(0)
    k_params, k_x = jax.random.split(key)
    params = init_params(k_params)
    x = jax.random.normal(k_x, (BATCH, NUM_OBS, NUM_FEATURE_INPUT), jnp.float32)

    out = tcn_lstm_forward(x, params)
    jax.block_until_ready(out)

    assert out.shape == (BATCH, NUM_PRED, NUM_FEATURE_OUTPUT), out.shape
    ref = reference_forward(x, params)
    err = float(jnp.max(jnp.abs(out - ref)))
    if err < 1e-3:
        print("KERNEL_OK")
    else:
        raise SystemExit(f"max abs error too large: {err}")
</pallas_src>

<mosaic_0001>
module attributes {stable_mosaic.version = 11 : i64} {
  func.func @tcn_lstm_kernel(%arg0: i32, %arg1: memref<2x4x16xf32, #tpu.memory_space<vmem>>, %arg2: memref<64x4xf32, #tpu.memory_space<vmem>>, %arg3: memref<64x1xf32, #tpu.memory_space<vmem>>, %arg4: memref<8x64xf32, #tpu.memory_space<vmem>>, %arg5: memref<8x1xf32, #tpu.memory_space<vmem>>, %arg6: memref<16x128xf32, #tpu.memory_space<vmem>>, %arg7: memref<32x128xf32, #tpu.memory_space<vmem>>, %arg8: memref<1x128xf32, #tpu.memory_space<vmem>>, %arg9: memref<32x128xf32, #tpu.memory_space<vmem>>, %arg10: memref<32x128xf32, #tpu.memory_space<vmem>>, %arg11: memref<1x128xf32, #tpu.memory_space<vmem>>, %arg12: memref<32x6xf32, #tpu.memory_space<vmem>>, %arg13: memref<1x6xf32, #tpu.memory_space<vmem>>, %arg14: memref<16x6xf32, #tpu.memory_space<vmem>>) attributes {dimension_semantics = [#tpu.dimension_semantics<arbitrary>], iteration_bounds = array<i64: 1>, scalar_prefetch = 0 : i64, scratch_operands = 0 : i64, tpu.core_type = #tpu.core_type<tc>, window_params = [{pipeline_mode = #tpu.pipeline_mode<synchronous>, transform_indices = @transform_0, window_bounds = array<i64: 2, 4, 16>}, {pipeline_mode = #tpu.pipeline_mode<synchronous>, transform_indices = @transform_1, window_bounds = array<i64: 64, 4>}, {pipeline_mode = #tpu.pipeline_mode<synchronous>, transform_indices = @transform_2, window_bounds = array<i64: 64, 1>}, {pipeline_mode = #tpu.pipeline_mode<synchronous>, transform_indices = @transform_3, window_bounds = array<i64: 8, 64>}, {pipeline_mode = #tpu.pipeline_mode<synchronous>, transform_indices = @transform_4, window_bounds = array<i64: 8, 1>}, {pipeline_mode = #tpu.pipeline_mode<synchronous>, transform_indices = @transform_5, window_bounds = array<i64: 16, 128>}, {pipeline_mode = #tpu.pipeline_mode<synchronous>, transform_indices = @transform_6, window_bounds = array<i64: 32, 128>}, {pipeline_mode = #tpu.pipeline_mode<synchronous>, transform_indices = @transform_7, window_bounds = array<i64: 1, 128>}, {pipeline_mode = #tpu.pipeline_mode<synchronous>, transform_indices = @transform_8, window_bounds = array<i64: 32, 128>}, {pipeline_mode = #tpu.pipeline_mode<synchronous>, transform_indices = @transform_9, window_bounds = array<i64: 32, 128>}, {pipeline_mode = #tpu.pipeline_mode<synchronous>, transform_indices = @transform_10, window_bounds = array<i64: 1, 128>}, {pipeline_mode = #tpu.pipeline_mode<synchronous>, transform_indices = @transform_11, window_bounds = array<i64: 32, 6>}, {pipeline_mode = #tpu.pipeline_mode<synchronous>, transform_indices = @transform_12, window_bounds = array<i64: 1, 6>}, {pipeline_mode = #tpu.pipeline_mode<synchronous>, transform_indices = @transform_13, window_bounds = array<i64: 16, 6>}]} {
    %c0 = arith.constant 0 : index
    %c0_0 = arith.constant 0 : index
    %c0_1 = arith.constant 0 : index
    %0 = vector.load %arg1[%c0, %c0_0, %c0_1] : memref<2x4x16xf32, #tpu.memory_space<vmem>>, vector<1x4x16xf32>
    %1 = vector.shape_cast %0 : vector<1x4x16xf32> to vector<4x16xf32>
    %c0_2 = arith.constant 0 : index
    %c0_3 = arith.constant 0 : index
    %2 = vector.load %arg2[%c0_2, %c0_3] : memref<64x4xf32, #tpu.memory_space<vmem>>, vector<64x4xf32>
    %cst = arith.constant dense<0.000000e+00> : vector<64x16xf32>
    %3 = tpu.matmul %2, %1, %cst {dimension_numbers = #tpu.dot_dimension_numbers<[1], [0], [0], [1], [0, 0, 1, 1], [], []>} : vector<64x4xf32>, vector<4x16xf32>, vector<64x16xf32> -> vector<64x16xf32>
    %c0_4 = arith.constant 0 : index
    %c0_5 = arith.constant 0 : index
    %4 = vector.load %arg3[%c0_4, %c0_5] : memref<64x1xf32, #tpu.memory_space<vmem>>, vector<64x1xf32>
    %5 = vector.broadcast %4 : vector<64x1xf32> to vector<64x16xf32>
    %6 = arith.addf %3, %5 : vector<64x16xf32>
    %cst_6 = arith.constant 0.000000e+00 : f32
    %7 = vector.broadcast %cst_6 : f32 to vector<64x16xf32>
    %8 = arith.maximumf %6, %7 : vector<64x16xf32>
    %c0_7 = arith.constant 0 : index
    %c0_8 = arith.constant 0 : index
    %9 = vector.load %arg4[%c0_7, %c0_8] : memref<8x64xf32, #tpu.memory_space<vmem>>, vector<8x64xf32>
    %cst_9 = arith.constant dense<0.000000e+00> : vector<8x16xf32>
    %10 = tpu.matmul %9, %8, %cst_9 {dimension_numbers = #tpu.dot_dimension_numbers<[1], [0], [0], [1], [0, 0, 1, 1], [], []>} : vector<8x64xf32>, vector<64x16xf32>, vector<8x16xf32> -> vector<8x16xf32>
    %c0_10 = arith.constant 0 : index
    %c0_11 = arith.constant 0 : index
    %11 = vector.load %arg5[%c0_10, %c0_11] : memref<8x1xf32, #tpu.memory_space<vmem>>, vector<8x1xf32>
    %12 = vector.broadcast %11 : vector<8x1xf32> to vector<8x16xf32>
    %13 = arith.addf %10, %12 : vector<8x16xf32>
    %cst_12 = arith.constant 0.000000e+00 : f32
    %14 = vector.broadcast %cst_12 : f32 to vector<8x16xf32>
    %15 = arith.maximumf %13, %14 : vector<8x16xf32>
    %c1 = arith.constant 1 : index
    %c0_13 = arith.constant 0 : index
    %c0_14 = arith.constant 0 : index
    %16 = vector.load %arg1[%c1, %c0_13, %c0_14] : memref<2x4x16xf32, #tpu.memory_space<vmem>>, vector<1x4x16xf32>
    %17 = vector.shape_cast %16 : vector<1x4x16xf32> to vector<4x16xf32>
    %c0_15 = arith.constant 0 : index
    %c0_16 = arith.constant 0 : index
    %18 = vector.load %arg2[%c0_15, %c0_16] : memref<64x4xf32, #tpu.memory_space<vmem>>, vector<64x4xf32>
    %cst_17 = arith.constant dense<0.000000e+00> : vector<64x16xf32>
    %19 = tpu.matmul %18, %17, %cst_17 {dimension_numbers = #tpu.dot_dimension_numbers<[1], [0], [0], [1], [0, 0, 1, 1], [], []>} : vector<64x4xf32>, vector<4x16xf32>, vector<64x16xf32> -> vector<64x16xf32>
    %c0_18 = arith.constant 0 : index
    %c0_19 = arith.constant 0 : index
    %20 = vector.load %arg3[%c0_18, %c0_19] : memref<64x1xf32, #tpu.memory_space<vmem>>, vector<64x1xf32>
    %21 = vector.broadcast %20 : vector<64x1xf32> to vector<64x16xf32>
    %22 = arith.addf %19, %21 : vector<64x16xf32>
    %cst_20 = arith.constant 0.000000e+00 : f32
    %23 = vector.broadcast %cst_20 : f32 to vector<64x16xf32>
    %24 = arith.maximumf %22, %23 : vector<64x16xf32>
    %c0_21 = arith.constant 0 : index
    %c0_22 = arith.constant 0 : index
    %25 = vector.load %arg4[%c0_21, %c0_22] : memref<8x64xf32, #tpu.memory_space<vmem>>, vector<8x64xf32>
    %cst_23 = arith.constant dense<0.000000e+00> : vector<8x16xf32>
    %26 = tpu.matmul %25, %24, %cst_23 {dimension_numbers = #tpu.dot_dimension_numbers<[1], [0], [0], [1], [0, 0, 1, 1], [], []>} : vector<8x64xf32>, vector<64x16xf32>, vector<8x16xf32> -> vector<8x16xf32>
    %c0_24 = arith.constant 0 : index
    %c0_25 = arith.constant 0 : index
    %27 = vector.load %arg5[%c0_24, %c0_25] : memref<8x1xf32, #tpu.memory_space<vmem>>, vector<8x1xf32>
    %28 = vector.broadcast %27 : vector<8x1xf32> to vector<8x16xf32>
    %29 = arith.addf %26, %28 : vector<8x16xf32>
    %cst_26 = arith.constant 0.000000e+00 : f32
    %30 = vector.broadcast %cst_26 : f32 to vector<8x16xf32>
    %31 = arith.maximumf %29, %30 : vector<8x16xf32>
    %c0_27 = arith.constant 0 : index
    %c0_28 = arith.constant 0 : index
    %32 = vector.load %arg6[%c0_27, %c0_28] : memref<16x128xf32, #tpu.memory_space<vmem>>, vector<16x128xf32>
    %cst_29 = arith.constant dense<0.000000e+00> : vector<8x128xf32>
    %33 = tpu.matmul %15, %32, %cst_29 {dimension_numbers = #tpu.dot_dimension_numbers<[1], [0], [0], [1], [0, 0, 1, 1], [], []>} : vector<8x16xf32>, vector<16x128xf32>, vector<8x128xf32> -> vector<8x128xf32>
    %c0_30 = arith.constant 0 : index
    %c0_31 = arith.constant 0 : index
    %34 = vector.load %arg6[%c0_30, %c0_31] : memref<16x128xf32, #tpu.memory_space<vmem>>, vector<16x128xf32>
    %cst_32 = arith.constant dense<0.000000e+00> : vector<8x128xf32>
    %35 = tpu.matmul %31, %34, %cst_32 {dimension_numbers = #tpu.dot_dimension_numbers<[1], [0], [0], [1], [0, 0, 1, 1], [], []>} : vector<8x16xf32>, vector<16x128xf32>, vector<8x128xf32> -> vector<8x128xf32>
    %36 = vector.extract_strided_slice %33 {offsets = [0, 0], sizes = [1, 128], strides = [1, 1]} : vector<8x128xf32> to vector<1x128xf32>
    %37 = vector.extract_strided_slice %35 {offsets = [0, 0], sizes = [1, 128], strides = [1, 1]} : vector<8x128xf32> to vector<1x128xf32>
    %38 = vector.extract_strided_slice %33 {offsets = [1, 0], sizes = [1, 128], strides = [1, 1]} : vector<8x128xf32> to vector<1x128xf32>
    %39 = vector.extract_strided_slice %35 {offsets = [1, 0], sizes = [1, 128], strides = [1, 1]} : vector<8x128xf32> to vector<1x128xf32>
    %40 = vector.extract_strided_slice %33 {offsets = [2, 0], sizes = [1, 128], strides = [1, 1]} : vector<8x128xf32> to vector<1x128xf32>
    %41 = vector.extract_strided_slice %35 {offsets = [2, 0], sizes = [1, 128], strides = [1, 1]} : vector<8x128xf32> to vector<1x128xf32>
    %42 = vector.extract_strided_slice %33 {offsets = [3, 0], sizes = [1, 128], strides = [1, 1]} : vector<8x128xf32> to vector<1x128xf32>
    %43 = vector.extract_strided_slice %35 {offsets = [3, 0], sizes = [1, 128], strides = [1, 1]} : vector<8x128xf32> to vector<1x128xf32>
    %44 = vector.extract_strided_slice %33 {offsets = [4, 0], sizes = [1, 128], strides = [1, 1]} : vector<8x128xf32> to vector<1x128xf32>
    %45 = vector.extract_strided_slice %35 {offsets = [4, 0], sizes = [1, 128], strides = [1, 1]} : vector<8x128xf32> to vector<1x128xf32>
    %46 = vector.extract_strided_slice %33 {offsets = [5, 0], sizes = [1, 128], strides = [1, 1]} : vector<8x128xf32> to vector<1x128xf32>
    %47 = vector.extract_strided_slice %35 {offsets = [5, 0], sizes = [1, 128], strides = [1, 1]} : vector<8x128xf32> to vector<1x128xf32>
    %48 = vector.extract_strided_slice %33 {offsets = [6, 0], sizes = [1, 128], strides = [1, 1]} : vector<8x128xf32> to vector<1x128xf32>
    %49 = vector.extract_strided_slice %35 {offsets = [6, 0], sizes = [1, 128], strides = [1, 1]} : vector<8x128xf32> to vector<1x128xf32>
    %50 = vector.extract_strided_slice %33 {offsets = [7, 0], sizes = [1, 128], strides = [1, 1]} : vector<8x128xf32> to vector<1x128xf32>
    %51 = vector.extract_strided_slice %35 {offsets = [7, 0], sizes = [1, 128], strides = [1, 1]} : vector<8x128xf32> to vector<1x128xf32>
    %52 = tpu.concatenate %36, %37, %38, %39, %40, %41, %42, %43, %44, %45, %46, %47, %48, %49, %50, %51 in 0 : vector<1x128xf32>, vector<1x128xf32>, vector<1x128xf32>, vector<1x128xf32>, vector<1x128xf32>, vector<1x128xf32>, vector<1x128xf32>, vector<1x128xf32>, vector<1x128xf32>, vector<1x128xf32>, vector<1x128xf32>, vector<1x128xf32>, vector<1x128xf32>, vector<1x128xf32>, vector<1x128xf32>, vector<1x128xf32> -> vector<16x128xf32>
    %c0_33 = arith.constant 0 : index
    %c0_34 = arith.constant 0 : index
    %53 = vector.load %arg8[%c0_33, %c0_34] : memref<1x128xf32, #tpu.memory_space<vmem>>, vector<1x128xf32>
    %54 = vector.broadcast %53 : vector<1x128xf32> to vector<16x128xf32>
    %55 = arith.addf %52, %54 : vector<16x128xf32>
    %c0_35 = arith.constant 0 : index
    %c0_36 = arith.constant 0 : index
    %56 = vector.load %arg7[%c0_35, %c0_36] : memref<32x128xf32, #tpu.memory_space<vmem>>, vector<32x128xf32>
    %cst_37 = arith.constant 0.000000e+00 : f32
    %57 = vector.broadcast %cst_37 : f32 to vector<2x32xf32>
    %cst_38 = arith.constant 0.000000e+00 : f32
    %58 = vector.broadcast %cst_38 : f32 to vector<2x32xf32>
    %59 = vector.extract_strided_slice %55 {offsets = [0, 0], sizes = [2, 128], strides = [1, 1]} : vector<16x128xf32> to vector<2x128xf32>
    %cst_39 = arith.constant dense<0.000000e+00> : vector<2x128xf32>
    %60 = tpu.matmul %57, %56, %cst_39 {dimension_numbers = #tpu.dot_dimension_numbers<[1], [0], [0], [1], [0, 0, 1, 1], [], []>} : vector<2x32xf32>, vector<32x128xf32>, vector<2x128xf32> -> vector<2x128xf32>
    %61 = arith.addf %59, %60 : vector<2x128xf32>
    %62 = vector.extract_strided_slice %61 {offsets = [0, 0], sizes = [2, 96], strides = [1, 1]} : vector<2x128xf32> to vector<2x96xf32>
    %63 = arith.negf %62 : vector<2x96xf32>
    %64 = math.exp %63 : vector<2x96xf32>
    %cst_40 = arith.constant 1.000000e+00 : f32
    %65 = vector.broadcast %cst_40 : f32 to vector<2x96xf32>
    %66 = arith.addf %65, %64 : vector<2x96xf32>
    %67 = arith.divf %65, %66 : vector<2x96xf32>
    %68 = vector.extract_strided_slice %67 {offsets = [0, 0], sizes = [2, 32], strides = [1, 1]} : vector<2x96xf32> to vector<2x32xf32>
    %69 = vector.extract_strided_slice %67 {offsets = [0, 32], sizes = [2, 32], strides = [1, 1]} : vector<2x96xf32> to vector<2x32xf32>
    %70 = vector.extract_strided_slice %67 {offsets = [0, 64], sizes = [2, 32], strides = [1, 1]} : vector<2x96xf32> to vector<2x32xf32>
    %71 = vector.extract_strided_slice %61 {offsets = [0, 96], sizes = [2, 32], strides = [1, 1]} : vector<2x128xf32> to vector<2x32xf32>
    %72 = math.tanh %71 : vector<2x32xf32>
    %73 = arith.mulf %69, %58 : vector<2x32xf32>
    %74 = arith.mulf %68, %72 : vector<2x32xf32>
    %75 = arith.addf %73, %74 : vector<2x32xf32>
    %76 = math.tanh %75 : vector<2x32xf32>
    %77 = arith.mulf %70, %76 : vector<2x32xf32>
    %78 = vector.extract_strided_slice %55 {offsets = [2, 0], sizes = [2, 128], strides = [1, 1]} : vector<16x128xf32> to vector<2x128xf32>
    %cst_41 = arith.constant dense<0.000000e+00> : vector<2x128xf32>
    %79 = tpu.matmul %77, %56, %cst_41 {dimension_numbers = #tpu.dot_dimension_numbers<[1], [0], [0], [1], [0, 0, 1, 1], [], []>} : vector<2x32xf32>, vector<32x128xf32>, vector<2x128xf32> -> vector<2x128xf32>
    %80 = arith.addf %78, %79 : vector<2x128xf32>
    %81 = vector.extract_strided_slice %80 {offsets = [0, 0], sizes = [2, 96], strides = [1, 1]} : vector<2x128xf32> to vector<2x96xf32>
    %82 = arith.negf %81 : vector<2x96xf32>
    %83 = math.exp %82 : vector<2x96xf32>
    %cst_42 = arith.constant 1.000000e+00 : f32
    %84 = vector.broadcast %cst_42 : f32 to vector<2x96xf32>
    %85 = arith.addf %84, %83 : vector<2x96xf32>
    %86 = arith.divf %84, %85 : vector<2x96xf32>
    %87 = vector.extract_strided_slice %86 {offsets = [0, 0], sizes = [2, 32], strides = [1, 1]} : vector<2x96xf32> to vector<2x32xf32>
    %88 = vector.extract_strided_slice %86 {offsets = [0, 32], sizes = [2, 32], strides = [1, 1]} : vector<2x96xf32> to vector<2x32xf32>
    %89 = vector.extract_strided_slice %86 {offsets = [0, 64], sizes = [2, 32], strides = [1, 1]} : vector<2x96xf32> to vector<2x32xf32>
    %90 = vector.extract_strided_slice %80 {offsets = [0, 96], sizes = [2, 32], strides = [1, 1]} : vector<2x128xf32> to vector<2x32xf32>
    %91 = math.tanh %90 : vector<2x32xf32>
    %92 = arith.mulf %88, %75 : vector<2x32xf32>
    %93 = arith.mulf %87, %91 : vector<2x32xf32>
    %94 = arith.addf %92, %93 : vector<2x32xf32>
    %95 = math.tanh %94 : vector<2x32xf32>
    %96 = arith.mulf %89, %95 : vector<2x32xf32>
    %97 = vector.extract_strided_slice %55 {offsets = [4, 0], sizes = [2, 128], strides = [1, 1]} : vector<16x128xf32> to vector<2x128xf32>
    %cst_43 = arith.constant dense<0.000000e+00> : vector<2x128xf32>
    %98 = tpu.matmul %96, %56, %cst_43 {dimension_numbers = #tpu.dot_dimension_numbers<[1], [0], [0], [1], [0, 0, 1, 1], [], []>} : vector<2x32xf32>, vector<32x128xf32>, vector<2x128xf32> -> vector<2x128xf32>
    %99 = arith.addf %97, %98 : vector<2x128xf32>
    %100 = vector.extract_strided_slice %99 {offsets = [0, 0], sizes = [2, 96], strides = [1, 1]} : vector<2x128xf32> to vector<2x96xf32>
    %101 = arith.negf %100 : vector<2x96xf32>
    %102 = math.exp %101 : vector<2x96xf32>
    %cst_44 = arith.constant 1.000000e+00 : f32
    %103 = vector.broadcast %cst_44 : f32 to vector<2x96xf32>
    %104 = arith.addf %103, %102 : vector<2x96xf32>
    %105 = arith.divf %103, %104 : vector<2x96xf32>
    %106 = vector.extract_strided_slice %105 {offsets = [0, 0], sizes = [2, 32], strides = [1, 1]} : vector<2x96xf32> to vector<2x32xf32>
    %107 = vector.extract_strided_slice %105 {offsets = [0, 32], sizes = [2, 32], strides = [1, 1]} : vector<2x96xf32> to vector<2x32xf32>
    %108 = vector.extract_strided_slice %105 {offsets = [0, 64], sizes = [2, 32], strides = [1, 1]} : vector<2x96xf32> to vector<2x32xf32>
    %109 = vector.extract_strided_slice %99 {offsets = [0, 96], sizes = [2, 32], strides = [1, 1]} : vector<2x128xf32> to vector<2x32xf32>
    %110 = math.tanh %109 : vector<2x32xf32>
    %111 = arith.mulf %107, %94 : vector<2x32xf32>
    %112 = arith.mulf %106, %110 : vector<2x32xf32>
    %113 = arith.addf %111, %112 : vector<2x32xf32>
    %114 = math.tanh %113 : vector<2x32xf32>
    %115 = arith.mulf %108, %114 : vector<2x32xf32>
    %116 = vector.extract_strided_slice %55 {offsets = [6, 0], sizes = [2, 128], strides = [1, 1]} : vector<16x128xf32> to vector<2x128xf32>
    %cst_45 = arith.constant dense<0.000000e+00> : vector<2x128xf32>
    %117 = tpu.matmul %115, %56, %cst_45 {dimension_numbers = #tpu.dot_dimension_numbers<[1], [0], [0], [1], [0, 0, 1, 1], [], []>} : vector<2x32xf32>, vector<32x128xf32>, vector<2x128xf32> -> vector<2x128xf32>
    %118 = arith.addf %116, %117 : vector<2x128xf32>
    %119 = vector.extract_strided_slice %118 {offsets = [0, 0], sizes = [2, 96], strides = [1, 1]} : vector<2x128xf32> to vector<2x96xf32>
    %120 = arith.negf %119 : vector<2x96xf32>
    %121 = math.exp %120 : vector<2x96xf32>
    %cst_46 = arith.constant 1.000000e+00 : f32
    %122 = vector.broadcast %cst_46 : f32 to vector<2x96xf32>
    %123 = arith.addf %122, %121 : vector<2x96xf32>
    %124 = arith.divf %122, %123 : vector<2x96xf32>
    %125 = vector.extract_strided_slice %124 {offsets = [0, 0], sizes = [2, 32], strides = [1, 1]} : vector<2x96xf32> to vector<2x32xf32>
    %126 = vector.extract_strided_slice %124 {offsets = [0, 32], sizes = [2, 32], strides = [1, 1]} : vector<2x96xf32> to vector<2x32xf32>
    %127 = vector.extract_strided_slice %124 {offsets = [0, 64], sizes = [2, 32], strides = [1, 1]} : vector<2x96xf32> to vector<2x32xf32>
    %128 = vector.extract_strided_slice %118 {offsets = [0, 96], sizes = [2, 32], strides = [1, 1]} : vector<2x128xf32> to vector<2x32xf32>
    %129 = math.tanh %128 : vector<2x32xf32>
    %130 = arith.mulf %126, %113 : vector<2x32xf32>
    %131 = arith.mulf %125, %129 : vector<2x32xf32>
    %132 = arith.addf %130, %131 : vector<2x32xf32>
    %133 = math.tanh %132 : vector<2x32xf32>
    %134 = arith.mulf %127, %133 : vector<2x32xf32>
    %135 = vector.extract_strided_slice %55 {offsets = [8, 0], sizes = [2, 128], strides = [1, 1]} : vector<16x128xf32> to vector<2x128xf32>
    %cst_47 = arith.constant dense<0.000000e+00> : vector<2x128xf32>
    %136 = tpu.matmul %134, %56, %cst_47 {dimension_numbers = #tpu.dot_dimension_numbers<[1], [0], [0], [1], [0, 0, 1, 1], [], []>} : vector<2x32xf32>, vector<32x128xf32>, vector<2x128xf32> -> vector<2x128xf32>
    %137 = arith.addf %135, %136 : vector<2x128xf32>
    %138 = vector.extract_strided_slice %137 {offsets = [0, 0], sizes = [2, 96], strides = [1, 1]} : vector<2x128xf32> to vector<2x96xf32>
    %139 = arith.negf %138 : vector<2x96xf32>
    %140 = math.exp %139 : vector<2x96xf32>
    %cst_48 = arith.constant 1.000000e+00 : f32
    %141 = vector.broadcast %cst_48 : f32 to vector<2x96xf32>
    %142 = arith.addf %141, %140 : vector<2x96xf32>
    %143 = arith.divf %141, %142 : vector<2x96xf32>
    %144 = vector.extract_strided_slice %143 {offsets = [0, 0], sizes = [2, 32], strides = [1, 1]} : vector<2x96xf32> to vector<2x32xf32>
    %145 = vector.extract_strided_slice %143 {offsets = [0, 32], sizes = [2, 32], strides = [1, 1]} : vector<2x96xf32> to vector<2x32xf32>
    %146 = vector.extract_strided_slice %143 {offsets = [0, 64], sizes = [2, 32], strides = [1, 1]} : vector<2x96xf32> to vector<2x32xf32>
    %147 = vector.extract_strided_slice %137 {offsets = [0, 96], sizes = [2, 32], strides = [1, 1]} : vector<2x128xf32> to vector<2x32xf32>
    %148 = math.tanh %147 : vector<2x32xf32>
    %149 = arith.mulf %145, %132 : vector<2x32xf32>
    %150 = arith.mulf %144, %148 : vector<2x32xf32>
    %151 = arith.addf %149, %150 : vector<2x32xf32>
    %152 = math.tanh %151 : vector<2x32xf32>
    %153 = arith.mulf %146, %152 : vector<2x32xf32>
    %154 = vector.extract_strided_slice %55 {offsets = [10, 0], sizes = [2, 128], strides = [1, 1]} : vector<16x128xf32> to vector<2x128xf32>
    %cst_49 = arith.constant dense<0.000000e+00> : vector<2x128xf32>
    %155 = tpu.matmul %153, %56, %cst_49 {dimension_numbers = #tpu.dot_dimension_numbers<[1], [0], [0], [1], [0, 0, 1, 1], [], []>} : vector<2x32xf32>, vector<32x128xf32>, vector<2x128xf32> -> vector<2x128xf32>
    %156 = arith.addf %154, %155 : vector<2x128xf32>
    %157 = vector.extract_strided_slice %156 {offsets = [0, 0], sizes = [2, 96], strides = [1, 1]} : vector<2x128xf32> to vector<2x96xf32>
    %158 = arith.negf %157 : vector<2x96xf32>
    %159 = math.exp %158 : vector<2x96xf32>
    %cst_50 = arith.constant 1.000000e+00 : f32
    %160 = vector.broadcast %cst_50 : f32 to vector<2x96xf32>
    %161 = arith.addf %160, %159 : vector<2x96xf32>
    %162 = arith.divf %160, %161 : vector<2x96xf32>
    %163 = vector.extract_strided_slice %162 {offsets = [0, 0], sizes = [2, 32], strides = [1, 1]} : vector<2x96xf32> to vector<2x32xf32>
    %164 = vector.extract_strided_slice %162 {offsets = [0, 32], sizes = [2, 32], strides = [1, 1]} : vector<2x96xf32> to vector<2x32xf32>
    %165 = vector.extract_strided_slice %162 {offsets = [0, 64], sizes = [2, 32], strides = [1, 1]} : vector<2x96xf32> to vector<2x32xf32>
    %166 = vector.extract_strided_slice %156 {offsets = [0, 96], sizes = [2, 32], strides = [1, 1]} : vector<2x128xf32> to vector<2x32xf32>
    %167 = math.tanh %166 : vector<2x32xf32>
    %168 = arith.mulf %164, %151 : vector<2x32xf32>
    %169 = arith.mulf %163, %167 : vector<2x32xf32>
    %170 = arith.addf %168, %169 : vector<2x32xf32>
    %171 = math.tanh %170 : vector<2x32xf32>
    %172 = arith.mulf %165, %171 : vector<2x32xf32>
    %173 = vector.extract_strided_slice %55 {offsets = [12, 0], sizes = [2, 128], strides = [1, 1]} : vector<16x128xf32> to vector<2x128xf32>
    %cst_51 = arith.constant dense<0.000000e+00> : vector<2x128xf32>
    %174 = tpu.matmul %172, %56, %cst_51 {dimension_numbers = #tpu.dot_dimension_numbers<[1], [0], [0], [1], [0, 0, 1, 1], [], []>} : vector<2x32xf32>, vector<32x128xf32>, vector<2x128xf32> -> vector<2x128xf32>
    %175 = arith.addf %173, %174 : vector<2x128xf32>
    %176 = vector.extract_strided_slice %175 {offsets = [0, 0], sizes = [2, 96], strides = [1, 1]} : vector<2x128xf32> to vector<2x96xf32>
    %177 = arith.negf %176 : vector<2x96xf32>
    %178 = math.exp %177 : vector<2x96xf32>
    %cst_52 = arith.constant 1.000000e+00 : f32
    %179 = vector.broadcast %cst_52 : f32 to vector<2x96xf32>
    %180 = arith.addf %179, %178 : vector<2x96xf32>
    %181 = arith.divf %179, %180 : vector<2x96xf32>
    %182 = vector.extract_strided_slice %181 {offsets = [0, 0], sizes = [2, 32], strides = [1, 1]} : vector<2x96xf32> to vector<2x32xf32>
    %183 = vector.extract_strided_slice %181 {offsets = [0, 32], sizes = [2, 32], strides = [1, 1]} : vector<2x96xf32> to vector<2x32xf32>
    %184 = vector.extract_strided_slice %181 {offsets = [0, 64], sizes = [2, 32], strides = [1, 1]} : vector<2x96xf32> to vector<2x32xf32>
    %185 = vector.extract_strided_slice %175 {offsets = [0, 96], sizes = [2, 32], strides = [1, 1]} : vector<2x128xf32> to vector<2x32xf32>
    %186 = math.tanh %185 : vector<2x32xf32>
    %187 = arith.mulf %183, %170 : vector<2x32xf32>
    %188 = arith.mulf %182, %186 : vector<2x32xf32>
    %189 = arith.addf %187, %188 : vector<2x32xf32>
    %190 = math.tanh %189 : vector<2x32xf32>
    %191 = arith.mulf %184, %190 : vector<2x32xf32>
    %192 = vector.extract_strided_slice %55 {offsets = [14, 0], sizes = [2, 128], strides = [1, 1]} : vector<16x128xf32> to vector<2x128xf32>
    %cst_53 = arith.constant dense<0.000000e+00> : vector<2x128xf32>
    %193 = tpu.matmul %191, %56, %cst_53 {dimension_numbers = #tpu.dot_dimension_numbers<[1], [0], [0], [1], [0, 0, 1, 1], [], []>} : vector<2x32xf32>, vector<32x128xf32>, vector<2x128xf32> -> vector<2x128xf32>
    %194 = arith.addf %192, %193 : vector<2x128xf32>
    %195 = vector.extract_strided_slice %194 {offsets = [0, 0], sizes = [2, 96], strides = [1, 1]} : vector<2x128xf32> to vector<2x96xf32>
    %196 = arith.negf %195 : vector<2x96xf32>
    %197 = math.exp %196 : vector<2x96xf32>
    %cst_54 = arith.constant 1.000000e+00 : f32
    %198 = vector.broadcast %cst_54 : f32 to vector<2x96xf32>
    %199 = arith.addf %198, %197 : vector<2x96xf32>
    %200 = arith.divf %198, %199 : vector<2x96xf32>
    %201 = vector.extract_strided_slice %200 {offsets = [0, 0], sizes = [2, 32], strides = [1, 1]} : vector<2x96xf32> to vector<2x32xf32>
    %202 = vector.extract_strided_slice %200 {offsets = [0, 32], sizes = [2, 32], strides = [1, 1]} : vector<2x96xf32> to vector<2x32xf32>
    %203 = vector.extract_strided_slice %200 {offsets = [0, 64], sizes = [2, 32], strides = [1, 1]} : vector<2x96xf32> to vector<2x32xf32>
    %204 = vector.extract_strided_slice %194 {offsets = [0, 96], sizes = [2, 32], strides = [1, 1]} : vector<2x128xf32> to vector<2x32xf32>
    %205 = math.tanh %204 : vector<2x32xf32>
    %206 = arith.mulf %202, %189 : vector<2x32xf32>
    %207 = arith.mulf %201, %205 : vector<2x32xf32>
    %208 = arith.addf %206, %207 : vector<2x32xf32>
    %209 = math.tanh %208 : vector<2x32xf32>
    %210 = arith.mulf %203, %209 : vector<2x32xf32>
    %211 = tpu.concatenate %77, %96, %115, %134, %153, %172, %191, %210 in 0 : vector<2x32xf32>, vector<2x32xf32>, vector<2x32xf32>, vector<2x32xf32>, vector<2x32xf32>, vector<2x32xf32>, vector<2x32xf32>, vector<2x32xf32> -> vector<16x32xf32>
    %c0_55 = arith.constant 0 : index
    %c0_56 = arith.constant 0 : index
    %212 = vector.load %arg9[%c0_55, %c0_56] : memref<32x128xf32, #tpu.memory_space<vmem>>, vector<32x128xf32>
    %cst_57 = arith.constant dense<0.000000e+00> : vector<16x128xf32>
    %213 = tpu.matmul %211, %212, %cst_57 {dimension_numbers = #tpu.dot_dimension_numbers<[1], [0], [0], [1], [0, 0, 1, 1], [], []>} : vector<16x32xf32>, vector<32x128xf32>, vector<16x128xf32> -> vector<16x128xf32>
    %c0_58 = arith.constant 0 : index
    %c0_59 = arith.constant 0 : index
    %214 = vector.load %arg11[%c0_58, %c0_59] : memref<1x128xf32, #tpu.memory_space<vmem>>, vector<1x128xf32>
    %215 = vector.broadcast %214 : vector<1x128xf32> to vector<16x128xf32>
    %216 = arith.addf %213, %215 : vector<16x128xf32>
    %c0_60 = arith.constant 0 : index
    %c0_61 = arith.constant 0 : index
    %217 = vector.load %arg10[%c0_60, %c0_61] : memref<32x128xf32, #tpu.memory_space<vmem>>, vector<32x128xf32>
    %cst_62 = arith.constant 0.000000e+00 : f32
    %218 = vector.broadcast %cst_62 : f32 to vector<2x32xf32>
    %cst_63 = arith.constant 0.000000e+00 : f32
    %219 = vector.broadcast %cst_63 : f32 to vector<2x32xf32>
    %220 = vector.extract_strided_slice %216 {offsets = [0, 0], sizes = [2, 128], strides = [1, 1]} : vector<16x128xf32> to vector<2x128xf32>
    %cst_64 = arith.constant dense<0.000000e+00> : vector<2x128xf32>
    %221 = tpu.matmul %218, %217, %cst_64 {dimension_numbers = #tpu.dot_dimension_numbers<[1], [0], [0], [1], [0, 0, 1, 1], [], []>} : vector<2x32xf32>, vector<32x128xf32>, vector<2x128xf32> -> vector<2x128xf32>
    %222 = arith.addf %220, %221 : vector<2x128xf32>
    %223 = vector.extract_strided_slice %222 {offsets = [0, 0], sizes = [2, 96], strides = [1, 1]} : vector<2x128xf32> to vector<2x96xf32>
    %224 = arith.negf %223 : vector<2x96xf32>
    %225 = math.exp %224 : vector<2x96xf32>
    %cst_65 = arith.constant 1.000000e+00 : f32
    %226 = vector.broadcast %cst_65 : f32 to vector<2x96xf32>
    %227 = arith.addf %226, %225 : vector<2x96xf32>
    %228 = arith.divf %226, %227 : vector<2x96xf32>
    %229 = vector.extract_strided_slice %228 {offsets = [0, 0], sizes = [2, 32], strides = [1, 1]} : vector<2x96xf32> to vector<2x32xf32>
    %230 = vector.extract_strided_slice %228 {offsets = [0, 32], sizes = [2, 32], strides = [1, 1]} : vector<2x96xf32> to vector<2x32xf32>
    %231 = vector.extract_strided_slice %228 {offsets = [0, 64], sizes = [2, 32], strides = [1, 1]} : vector<2x96xf32> to vector<2x32xf32>
    %232 = vector.extract_strided_slice %222 {offsets = [0, 96], sizes = [2, 32], strides = [1, 1]} : vector<2x128xf32> to vector<2x32xf32>
    %233 = math.tanh %232 : vector<2x32xf32>
    %234 = arith.mulf %230, %219 : vector<2x32xf32>
    %235 = arith.mulf %229, %233 : vector<2x32xf32>
    %236 = arith.addf %234, %235 : vector<2x32xf32>
    %237 = math.tanh %236 : vector<2x32xf32>
    %238 = arith.mulf %231, %237 : vector<2x32xf32>
    %239 = vector.extract_strided_slice %216 {offsets = [2, 0], sizes = [2, 128], strides = [1, 1]} : vector<16x128xf32> to vector<2x128xf32>
    %cst_66 = arith.constant dense<0.000000e+00> : vector<2x128xf32>
    %240 = tpu.matmul %238, %217, %cst_66 {dimension_numbers = #tpu.dot_dimension_numbers<[1], [0], [0], [1], [0, 0, 1, 1], [], []>} : vector<2x32xf32>, vector<32x128xf32>, vector<2x128xf32> -> vector<2x128xf32>
    %241 = arith.addf %239, %240 : vector<2x128xf32>
    %242 = vector.extract_strided_slice %241 {offsets = [0, 0], sizes = [2, 96], strides = [1, 1]} : vector<2x128xf32> to vector<2x96xf32>
    %243 = arith.negf %242 : vector<2x96xf32>
    %244 = math.exp %243 : vector<2x96xf32>
    %cst_67 = arith.constant 1.000000e+00 : f32
    %245 = vector.broadcast %cst_67 : f32 to vector<2x96xf32>
    %246 = arith.addf %245, %244 : vector<2x96xf32>
    %247 = arith.divf %245, %246 : vector<2x96xf32>
    %248 = vector.extract_strided_slice %247 {offsets = [0, 0], sizes = [2, 32], strides = [1, 1]} : vector<2x96xf32> to vector<2x32xf32>
    %249 = vector.extract_strided_slice %247 {offsets = [0, 32], sizes = [2, 32], strides = [1, 1]} : vector<2x96xf32> to vector<2x32xf32>
    %250 = vector.extract_strided_slice %247 {offsets = [0, 64], sizes = [2, 32], strides = [1, 1]} : vector<2x96xf32> to vector<2x32xf32>
    %251 = vector.extract_strided_slice %241 {offsets = [0, 96], sizes = [2, 32], strides = [1, 1]} : vector<2x128xf32> to vector<2x32xf32>
    %252 = math.tanh %251 : vector<2x32xf32>
    %253 = arith.mulf %249, %236 : vector<2x32xf32>
    %254 = arith.mulf %248, %252 : vector<2x32xf32>
    %255 = arith.addf %253, %254 : vector<2x32xf32>
    %256 = math.tanh %255 : vector<2x32xf32>
    %257 = arith.mulf %250, %256 : vector<2x32xf32>
    %258 = vector.extract_strided_slice %216 {offsets = [4, 0], sizes = [2, 128], strides = [1, 1]} : vector<16x128xf32> to vector<2x128xf32>
    %cst_68 = arith.constant dense<0.000000e+00> : vector<2x128xf32>
    %259 = tpu.matmul %257, %217, %cst_68 {dimension_numbers = #tpu.dot_dimension_numbers<[1], [0], [0], [1], [0, 0, 1, 1], [], []>} : vector<2x32xf32>, vector<32x128xf32>, vector<2x128xf32> -> vector<2x128xf32>
    %260 = arith.addf %258, %259 : vector<2x128xf32>
    %261 = vector.extract_strided_slice %260 {offsets = [0, 0], sizes = [2, 96], strides = [1, 1]} : vector<2x128xf32> to vector<2x96xf32>
    %262 = arith.negf %261 : vector<2x96xf32>
    %263 = math.exp %262 : vector<2x96xf32>
    %cst_69 = arith.constant 1.000000e+00 : f32
    %264 = vector.broadcast %cst_69 : f32 to vector<2x96xf32>
    %265 = arith.addf %264, %263 : vector<2x96xf32>
    %266 = arith.divf %264, %265 : vector<2x96xf32>
    %267 = vector.extract_strided_slice %266 {offsets = [0, 0], sizes = [2, 32], strides = [1, 1]} : vector<2x96xf32> to vector<2x32xf32>
    %268 = vector.extract_strided_slice %266 {offsets = [0, 32], sizes = [2, 32], strides = [1, 1]} : vector<2x96xf32> to vector<2x32xf32>
    %269 = vector.extract_strided_slice %266 {offsets = [0, 64], sizes = [2, 32], strides = [1, 1]} : vector<2x96xf32> to vector<2x32xf32>
    %270 = vector.extract_strided_slice %260 {offsets = [0, 96], sizes = [2, 32], strides = [1, 1]} : vector<2x128xf32> to vector<2x32xf32>
    %271 = math.tanh %270 : vector<2x32xf32>
    %272 = arith.mulf %268, %255 : vector<2x32xf32>
    %273 = arith.mulf %267, %271 : vector<2x32xf32>
    %274 = arith.addf %272, %273 : vector<2x32xf32>
    %275 = math.tanh %274 : vector<2x32xf32>
    %276 = arith.mulf %269, %275 : vector<2x32xf32>
    %277 = vector.extract_strided_slice %216 {offsets = [6, 0], sizes = [2, 128], strides = [1, 1]} : vector<16x128xf32> to vector<2x128xf32>
    %cst_70 = arith.constant dense<0.000000e+00> : vector<2x128xf32>
    %278 = tpu.matmul %276, %217, %cst_70 {dimension_numbers = #tpu.dot_dimension_numbers<[1], [0], [0], [1], [0, 0, 1, 1], [], []>} : vector<2x32xf32>, vector<32x128xf32>, vector<2x128xf32> -> vector<2x128xf32>
    %279 = arith.addf %277, %278 : vector<2x128xf32>
    %280 = vector.extract_strided_slice %279 {offsets = [0, 0], sizes = [2, 96], strides = [1, 1]} : vector<2x128xf32> to vector<2x96xf32>
    %281 = arith.negf %280 : vector<2x96xf32>
    %282 = math.exp %281 : vector<2x96xf32>
    %cst_71 = arith.constant 1.000000e+00 : f32
    %283 = vector.broadcast %cst_71 : f32 to vector<2x96xf32>
    %284 = arith.addf %283, %282 : vector<2x96xf32>
    %285 = arith.divf %283, %284 : vector<2x96xf32>
    %286 = vector.extract_strided_slice %285 {offsets = [0, 0], sizes = [2, 32], strides = [1, 1]} : vector<2x96xf32> to vector<2x32xf32>
    %287 = vector.extract_strided_slice %285 {offsets = [0, 32], sizes = [2, 32], strides = [1, 1]} : vector<2x96xf32> to vector<2x32xf32>
    %288 = vector.extract_strided_slice %285 {offsets = [0, 64], sizes = [2, 32], strides = [1, 1]} : vector<2x96xf32> to vector<2x32xf32>
    %289 = vector.extract_strided_slice %279 {offsets = [0, 96], sizes = [2, 32], strides = [1, 1]} : vector<2x128xf32> to vector<2x32xf32>
    %290 = math.tanh %289 : vector<2x32xf32>
    %291 = arith.mulf %287, %274 : vector<2x32xf32>
    %292 = arith.mulf %286, %290 : vector<2x32xf32>
    %293 = arith.addf %291, %292 : vector<2x32xf32>
    %294 = math.tanh %293 : vector<2x32xf32>
    %295 = arith.mulf %288, %294 : vector<2x32xf32>
    %296 = vector.extract_strided_slice %216 {offsets = [8, 0], sizes = [2, 128], strides = [1, 1]} : vector<16x128xf32> to vector<2x128xf32>
    %cst_72 = arith.constant dense<0.000000e+00> : vector<2x128xf32>
    %297 = tpu.matmul %295, %217, %cst_72 {dimension_numbers = #tpu.dot_dimension_numbers<[1], [0], [0], [1], [0, 0, 1, 1], [], []>} : vector<2x32xf32>, vector<32x128xf32>, vector<2x128xf32> -> vector<2x128xf32>
    %298 = arith.addf %296, %297 : vector<2x128xf32>
    %299 = vector.extract_strided_slice %298 {offsets = [0, 0], sizes = [2, 96], strides = [1, 1]} : vector<2x128xf32> to vector<2x96xf32>
    %300 = arith.negf %299 : vector<2x96xf32>
    %301 = math.exp %300 : vector<2x96xf32>
    %cst_73 = arith.constant 1.000000e+00 : f32
    %302 = vector.broadcast %cst_73 : f32 to vector<2x96xf32>
    %303 = arith.addf %302, %301 : vector<2x96xf32>
    %304 = arith.divf %302, %303 : vector<2x96xf32>
    %305 = vector.extract_strided_slice %304 {offsets = [0, 0], sizes = [2, 32], strides = [1, 1]} : vector<2x96xf32> to vector<2x32xf32>
    %306 = vector.extract_strided_slice %304 {offsets = [0, 32], sizes = [2, 32], strides = [1, 1]} : vector<2x96xf32> to vector<2x32xf32>
    %307 = vector.extract_strided_slice %304 {offsets = [0, 64], sizes = [2, 32], strides = [1, 1]} : vector<2x96xf32> to vector<2x32xf32>
    %308 = vector.extract_strided_slice %298 {offsets = [0, 96], sizes = [2, 32], strides = [1, 1]} : vector<2x128xf32> to vector<2x32xf32>
    %309 = math.tanh %308 : vector<2x32xf32>
    %310 = arith.mulf %306, %293 : vector<2x32xf32>
    %311 = arith.mulf %305, %309 : vector<2x32xf32>
    %312 = arith.addf %310, %311 : vector<2x32xf32>
    %313 = math.tanh %312 : vector<2x32xf32>
    %314 = arith.mulf %307, %313 : vector<2x32xf32>
    %315 = vector.extract_strided_slice %216 {offsets = [10, 0], sizes = [2, 128], strides = [1, 1]} : vector<16x128xf32> to vector<2x128xf32>
    %cst_74 = arith.constant dense<0.000000e+00> : vector<2x128xf32>
    %316 = tpu.matmul %314, %217, %cst_74 {dimension_numbers = #tpu.dot_dimension_numbers<[1], [0], [0], [1], [0, 0, 1, 1], [], []>} : vector<2x32xf32>, vector<32x128xf32>, vector<2x128xf32> -> vector<2x128xf32>
    %317 = arith.addf %315, %316 : vector<2x128xf32>
    %318 = vector.extract_strided_slice %317 {offsets = [0, 0], sizes = [2, 96], strides = [1, 1]} : vector<2x128xf32> to vector<2x96xf32>
    %319 = arith.negf %318 : vector<2x96xf32>
    %320 = math.exp %319 : vector<2x96xf32>
    %cst_75 = arith.constant 1.000000e+00 : f32
    %321 = vector.broadcast %cst_75 : f32 to vector<2x96xf32>
    %322 = arith.addf %321, %320 : vector<2x96xf32>
    %323 = arith.divf %321, %322 : vector<2x96xf32>
    %324 = vector.extract_strided_slice %323 {offsets = [0, 0], sizes = [2, 32], strides = [1, 1]} : vector<2x96xf32> to vector<2x32xf32>
    %325 = vector.extract_strided_slice %323 {offsets = [0, 32], sizes = [2, 32], strides = [1, 1]} : vector<2x96xf32> to vector<2x32xf32>
    %326 = vector.extract_strided_slice %323 {offsets = [0, 64], sizes = [2, 32], strides = [1, 1]} : vector<2x96xf32> to vector<2x32xf32>
    %327 = vector.extract_strided_slice %317 {offsets = [0, 96], sizes = [2, 32], strides = [1, 1]} : vector<2x128xf32> to vector<2x32xf32>
    %328 = math.tanh %327 : vector<2x32xf32>
    %329 = arith.mulf %325, %312 : vector<2x32xf32>
    %330 = arith.mulf %324, %328 : vector<2x32xf32>
    %331 = arith.addf %329, %330 : vector<2x32xf32>
    %332 = math.tanh %331 : vector<2x32xf32>
    %333 = arith.mulf %326, %332 : vector<2x32xf32>
    %334 = vector.extract_strided_slice %216 {offsets = [12, 0], sizes = [2, 128], strides = [1, 1]} : vector<16x128xf32> to vector<2x128xf32>
    %cst_76 = arith.constant dense<0.000000e+00> : vector<2x128xf32>
    %335 = tpu.matmul %333, %217, %cst_76 {dimension_numbers = #tpu.dot_dimension_numbers<[1], [0], [0], [1], [0, 0, 1, 1], [], []>} : vector<2x32xf32>, vector<32x128xf32>, vector<2x128xf32> -> vector<2x128xf32>
    %336 = arith.addf %334, %335 : vector<2x128xf32>
    %337 = vector.extract_strided_slice %336 {offsets = [0, 0], sizes = [2, 96], strides = [1, 1]} : vector<2x128xf32> to vector<2x96xf32>
    %338 = arith.negf %337 : vector<2x96xf32>
    %339 = math.exp %338 : vector<2x96xf32>
    %cst_77 = arith.constant 1.000000e+00 : f32
    %340 = vector.broadcast %cst_77 : f32 to vector<2x96xf32>
    %341 = arith.addf %340, %339 : vector<2x96xf32>
    %342 = arith.divf %340, %341 : vector<2x96xf32>
    %343 = vector.extract_strided_slice %342 {offsets = [0, 0], sizes = [2, 32], strides = [1, 1]} : vector<2x96xf32> to vector<2x32xf32>
    %344 = vector.extract_strided_slice %342 {offsets = [0, 32], sizes = [2, 32], strides = [1, 1]} : vector<2x96xf32> to vector<2x32xf32>
    %345 = vector.extract_strided_slice %342 {offsets = [0, 64], sizes = [2, 32], strides = [1, 1]} : vector<2x96xf32> to vector<2x32xf32>
    %346 = vector.extract_strided_slice %336 {offsets = [0, 96], sizes = [2, 32], strides = [1, 1]} : vector<2x128xf32> to vector<2x32xf32>
    %347 = math.tanh %346 : vector<2x32xf32>
    %348 = arith.mulf %344, %331 : vector<2x32xf32>
    %349 = arith.mulf %343, %347 : vector<2x32xf32>
    %350 = arith.addf %348, %349 : vector<2x32xf32>
    %351 = math.tanh %350 : vector<2x32xf32>
    %352 = arith.mulf %345, %351 : vector<2x32xf32>
    %353 = vector.extract_strided_slice %216 {offsets = [14, 0], sizes = [2, 128], strides = [1, 1]} : vector<16x128xf32> to vector<2x128xf32>
    %cst_78 = arith.constant dense<0.000000e+00> : vector<2x128xf32>
    %354 = tpu.matmul %352, %217, %cst_78 {dimension_numbers = #tpu.dot_dimension_numbers<[1], [0], [0], [1], [0, 0, 1, 1], [], []>} : vector<2x32xf32>, vector<32x128xf32>, vector<2x128xf32> -> vector<2x128xf32>
    %355 = arith.addf %353, %354 : vector<2x128xf32>
    %356 = vector.extract_strided_slice %355 {offsets = [0, 0], sizes = [2, 96], strides = [1, 1]} : vector<2x128xf32> to vector<2x96xf32>
    %357 = arith.negf %356 : vector<2x96xf32>
    %358 = math.exp %357 : vector<2x96xf32>
    %cst_79 = arith.constant 1.000000e+00 : f32
    %359 = vector.broadcast %cst_79 : f32 to vector<2x96xf32>
    %360 = arith.addf %359, %358 : vector<2x96xf32>
    %361 = arith.divf %359, %360 : vector<2x96xf32>
    %362 = vector.extract_strided_slice %361 {offsets = [0, 0], sizes = [2, 32], strides = [1, 1]} : vector<2x96xf32> to vector<2x32xf32>
    %363 = vector.extract_strided_slice %361 {offsets = [0, 32], sizes = [2, 32], strides = [1, 1]} : vector<2x96xf32> to vector<2x32xf32>
    %364 = vector.extract_strided_slice %361 {offsets = [0, 64], sizes = [2, 32], strides = [1, 1]} : vector<2x96xf32> to vector<2x32xf32>
    %365 = vector.extract_strided_slice %355 {offsets = [0, 96], sizes = [2, 32], strides = [1, 1]} : vector<2x128xf32> to vector<2x32xf32>
    %366 = math.tanh %365 : vector<2x32xf32>
    %367 = arith.mulf %363, %350 : vector<2x32xf32>
    %368 = arith.mulf %362, %366 : vector<2x32xf32>
    %369 = arith.addf %367, %368 : vector<2x32xf32>
    %370 = math.tanh %369 : vector<2x32xf32>
    %371 = arith.mulf %364, %370 : vector<2x32xf32>
    %372 = tpu.concatenate %238, %257, %276, %295, %314, %333, %352, %371 in 0 : vector<2x32xf32>, vector<2x32xf32>, vector<2x32xf32>, vector<2x32xf32>, vector<2x32xf32>, vector<2x32xf32>, vector<2x32xf32>, vector<2x32xf32> -> vector<16x32xf32>
    %c0_80 = arith.constant 0 : index
    %c0_81 = arith.constant 0 : index
    %373 = vector.load %arg12[%c0_80, %c0_81] : memref<32x6xf32, #tpu.memory_space<vmem>>, vector<32x6xf32>
    %cst_82 = arith.constant dense<0.000000e+00> : vector<16x6xf32>
    %374 = tpu.matmul %372, %373, %cst_82 {dimension_numbers = #tpu.dot_dimension_numbers<[1], [0], [0], [1], [0, 0, 1, 1], [], []>} : vector<16x32xf32>, vector<32x6xf32>, vector<16x6xf32> -> vector<16x6xf32>
    %c0_83 = arith.constant 0 : index
    %c0_84 = arith.constant 0 : index
    %375 = vector.load %arg13[%c0_83, %c0_84] : memref<1x6xf32, #tpu.memory_space<vmem>>, vector<1x6xf32>
    %376 = vector.broadcast %375 : vector<1x6xf32> to vector<16x6xf32>
    %377 = arith.addf %374, %376 : vector<16x6xf32>
    %c0_85 = arith.constant 0 : index
    %c0_86 = arith.constant 0 : index
    %378 = vector.load %arg14[%c0_85, %c0_86] : memref<16x6xf32, #tpu.memory_space<vmem>>, vector<16x6xf32>
    tpu.vector_store %arg14[%c0_85, %c0_86], %377 {strides = array<i32>} : memref<16x6xf32, #tpu.memory_space<vmem>>, vector<16x6xf32>,
    return
  }
  func.func @transform_0(%arg0: i32) -> (i32, i32, i32) {
    %c0_i32 = arith.constant 0 : i32
    %c0_i32_0 = arith.constant 0 : i32
    %c0_i32_1 = arith.constant 0 : i32
    %c0_i32_2 = arith.constant 0 : i32
    return %c0_i32, %c0_i32_0, %c0_i32_1 : i32, i32, i32
  }
  func.func @transform_1(%arg0: i32) -> (i32, i32) {
    %c0_i32 = arith.constant 0 : i32
    %c0_i32_0 = arith.constant 0 : i32
    %c0_i32_1 = arith.constant 0 : i32
    return %c0_i32, %c0_i32_0 : i32, i32
  }
  func.func @transform_2(%arg0: i32) -> (i32, i32) {
    %c0_i32 = arith.constant 0 : i32
    %c0_i32_0 = arith.constant 0 : i32
    %c0_i32_1 = arith.constant 0 : i32
    return %c0_i32, %c0_i32_0 : i32, i32
  }
  func.func @transform_3(%arg0: i32) -> (i32, i32) {
    %c0_i32 = arith.constant 0 : i32
    %c0_i32_0 = arith.constant 0 : i32
    %c0_i32_1 = arith.constant 0 : i32
    return %c0_i32, %c0_i32_0 : i32, i32
  }
  func.func @transform_4(%arg0: i32) -> (i32, i32) {
    %c0_i32 = arith.constant 0 : i32
    %c0_i32_0 = arith.constant 0 : i32
    %c0_i32_1 = arith.constant 0 : i32
    return %c0_i32, %c0_i32_0 : i32, i32
  }
  func.func @transform_5(%arg0: i32) -> (i32, i32) {
    %c0_i32 = arith.constant 0 : i32
    %c0_i32_0 = arith.constant 0 : i32
    %c0_i32_1 = arith.constant 0 : i32
    return %c0_i32, %c0_i32_0 : i32, i32
  }
  func.func @transform_6(%arg0: i32) -> (i32, i32) {
    %c0_i32 = arith.constant 0 : i32
    %c0_i32_0 = arith.constant 0 : i32
    %c0_i32_1 = arith.constant 0 : i32
    return %c0_i32, %c0_i32_0 : i32, i32
  }
  func.func @transform_7(%arg0: i32) -> (i32, i32) {
    %c0_i32 = arith.constant 0 : i32
    %c0_i32_0 = arith.constant 0 : i32
    %c0_i32_1 = arith.constant 0 : i32
    return %c0_i32, %c0_i32_0 : i32, i32
  }
  func.func @transform_8(%arg0: i32) -> (i32, i32) {
    %c0_i32 = arith.constant 0 : i32
    %c0_i32_0 = arith.constant 0 : i32
    %c0_i32_1 = arith.constant 0 : i32
    return %c0_i32, %c0_i32_0 : i32, i32
  }
  func.func @transform_9(%arg0: i32) -> (i32, i32) {
    %c0_i32 = arith.constant 0 : i32
    %c0_i32_0 = arith.constant 0 : i32
    %c0_i32_1 = arith.constant 0 : i32
    return %c0_i32, %c0_i32_0 : i32, i32
  }
  func.func @transform_10(%arg0: i32) -> (i32, i32) {
    %c0_i32 = arith.constant 0 : i32
    %c0_i32_0 = arith.constant 0 : i32
    %c0_i32_1 = arith.constant 0 : i32
    return %c0_i32, %c0_i32_0 : i32, i32
  }
  func.func @transform_11(%arg0: i32) -> (i32, i32) {
    %c0_i32 = arith.constant 0 : i32
    %c0_i32_0 = arith.constant 0 : i32
    %c0_i32_1 = arith.constant 0 : i32
    return %c0_i32, %c0_i32_0 : i32, i32
  }
  func.func @transform_12(%arg0: i32) -> (i32, i32) {
    %c0_i32 = arith.constant 0 : i32
    %c0_i32_0 = arith.constant 0 : i32
    %c0_i32_1 = arith.constant 0 : i32
    return %c0_i32, %c0_i32_0 : i32, i32
  }
  func.func @transform_13(%arg0: i32) -> (i32, i32) {
    %c0_i32 = arith.constant 0 : i32
    %c0_i32_0 = arith.constant 0 : i32
    %c0_i32_1 = arith.constant 0 : i32
    return %c0_i32, %c0_i32_0 : i32, i32
  }
}

</mosaic_0001>

<llo_original>
// kernel: tpu_custom_call.1
$region0: #{tpu_custom_call.1}
  #allocation0 [shape = 'u32[]', space=smem, size = 0x4, offset = 0x4, fixed_abs, tag = 'smem constant byte address 0x4 - core index']
  #allocation1 [shape = 'u32[144,128]{1,0:T(1,128)}', space=vmem, size = 0x12000, scoped, tag = 'internal scratch']
  %s0 = inlined_call_operand.vmem [shape: f32[2,4,16], index: 0, kind: input, shape index: {}]
  %s1 = inlined_call_operand.vmem [shape: f32[64,4], index: 1, kind: input, shape index: {}]
  %s2 = inlined_call_operand.vmem [shape: f32[64,1], index: 2, kind: input, shape index: {}]
  %s3 = inlined_call_operand.vmem [shape: f32[8,64], index: 3, kind: input, shape index: {}]
  %s4 = inlined_call_operand.vmem [shape: f32[8,1], index: 4, kind: input, shape index: {}]
  %s5 = inlined_call_operand.vmem [shape: f32[16,128], index: 5, kind: input, shape index: {}]
  %s6 = inlined_call_operand.vmem [shape: f32[32,128], index: 6, kind: input, shape index: {}]
  %s7 = inlined_call_operand.vmem [shape: f32[1,128], index: 7, kind: input, shape index: {}]
  %s8 = inlined_call_operand.vmem [shape: f32[32,128], index: 8, kind: input, shape index: {}]
  %s9 = inlined_call_operand.vmem [shape: f32[32,128], index: 9, kind: input, shape index: {}]
  %s10 = inlined_call_operand.vmem [shape: f32[1,128], index: 10, kind: input, shape index: {}]
  %s11 = inlined_call_operand.vmem [shape: f32[32,6], index: 11, kind: input, shape index: {}]
  %s12 = inlined_call_operand.vmem [shape: f32[1,6], index: 12, kind: input, shape index: {}]
  %s13 = inlined_call_operand.vmem [shape: f32[16,6], index: 13, kind: output, shape index: {}]
  %s14 = sld [smem:[#allocation0]]
  $region62: #{tpu_custom_call.1} parent=0
    _
  %s16 = ssub.s32 1, %s14
  %s17 = scalar_select 0, %s16, %s14
  // Predicated region
  $region2: #{tpu_custom_call.1} parent=0 // pred_check
    _
  $region3: #{tpu_custom_call.1} parent=0 // pred_check_branch
    %19 = sbr.rel (0) target = $region5
  $region4: #{tpu_custom_call.1} parent=0 // pred_region
    _
  $region5: #{tpu_custom_call.1} parent=0 // pred_fallthru
    _
  // Predicated region
  $region6: #{tpu_custom_call.1} parent=0 // pred_check
    _
  $region7: #{tpu_custom_call.1} parent=0 // pred_check_branch
    %21 = sbr.rel (0) target = $region9
  $region8: #{tpu_custom_call.1} parent=0 // pred_region
    _
  $region9: #{tpu_custom_call.1} parent=0 // pred_fallthru
    _
  // Predicated region
  $region10: #{tpu_custom_call.1} parent=0 // pred_check
    _
  $region11: #{tpu_custom_call.1} parent=0 // pred_check_branch
    %23 = sbr.rel (0) target = $region13
  $region12: #{tpu_custom_call.1} parent=0 // pred_region
    _
  $region13: #{tpu_custom_call.1} parent=0 // pred_fallthru
    _
  // Predicated region
  $region14: #{tpu_custom_call.1} parent=0 // pred_check
    _
  $region15: #{tpu_custom_call.1} parent=0 // pred_check_branch
    %25 = sbr.rel (0) target = $region17
  $region16: #{tpu_custom_call.1} parent=0 // pred_region
    _
  $region17: #{tpu_custom_call.1} parent=0 // pred_fallthru
    _
  // Predicated region
  $region18: #{tpu_custom_call.1} parent=0 // pred_check
    _
  $region19: #{tpu_custom_call.1} parent=0 // pred_check_branch
    %27 = sbr.rel (0) target = $region21
  $region20: #{tpu_custom_call.1} parent=0 // pred_region
    _
  $region21: #{tpu_custom_call.1} parent=0 // pred_fallthru
    _
  // Predicated region
  $region22: #{tpu_custom_call.1} parent=0 // pred_check
    _
  $region23: #{tpu_custom_call.1} parent=0 // pred_check_branch
    %29 = sbr.rel (0) target = $region25
  $region24: #{tpu_custom_call.1} parent=0 // pred_region
    _
  $region25: #{tpu_custom_call.1} parent=0 // pred_fallthru
    _
  // Predicated region
  $region26: #{tpu_custom_call.1} parent=0 // pred_check
    _
  $region27: #{tpu_custom_call.1} parent=0 // pred_check_branch
    %31 = sbr.rel (0) target = $region29
  $region28: #{tpu_custom_call.1} parent=0 // pred_region
    _
  $region29: #{tpu_custom_call.1} parent=0 // pred_fallthru
    _
  // Predicated region
  $region30: #{tpu_custom_call.1} parent=0 // pred_check
    _
  $region31: #{tpu_custom_call.1} parent=0 // pred_check_branch
    %33 = sbr.rel (0) target = $region33
  $region32: #{tpu_custom_call.1} parent=0 // pred_region
    _
  $region33: #{tpu_custom_call.1} parent=0 // pred_fallthru
    _
  // Predicated region
  $region34: #{tpu_custom_call.1} parent=0 // pred_check
    _
  $region35: #{tpu_custom_call.1} parent=0 // pred_check_branch
    %35 = sbr.rel (0) target = $region37
  $region36: #{tpu_custom_call.1} parent=0 // pred_region
    _
  $region37: #{tpu_custom_call.1} parent=0 // pred_fallthru
    _
  // Predicated region
  $region38: #{tpu_custom_call.1} parent=0 // pred_check
    _
  $region39: #{tpu_custom_call.1} parent=0 // pred_check_branch
    %37 = sbr.rel (0) target = $region41
  $region40: #{tpu_custom_call.1} parent=0 // pred_region
    _
  $region41: #{tpu_custom_call.1} parent=0 // pred_fallthru
    _
  // Predicated region
  $region42: #{tpu_custom_call.1} parent=0 // pred_check
    _
  $region43: #{tpu_custom_call.1} parent=0 // pred_check_branch
    %39 = sbr.rel (0) target = $region45
  $region44: #{tpu_custom_call.1} parent=0 // pred_region
    _
  $region45: #{tpu_custom_call.1} parent=0 // pred_fallthru
    _
  // Predicated region
  $region46: #{tpu_custom_call.1} parent=0 // pred_check
    _
  $region47: #{tpu_custom_call.1} parent=0 // pred_check_branch
    %41 = sbr.rel (0) target = $region49
  $region48: #{tpu_custom_call.1} parent=0 // pred_region
    _
  $region49: #{tpu_custom_call.1} parent=0 // pred_fallthru
    _
  // Predicated region
  $region50: #{tpu_custom_call.1} parent=0 // pred_check
    _
  $region51: #{tpu_custom_call.1} parent=0 // pred_check_branch
    %43 = sbr.rel (0) target = $region53
  $region52: #{tpu_custom_call.1} parent=0 // pred_region
    _
  $region53: #{tpu_custom_call.1} parent=0 // pred_fallthru
    _
  %v44 = vld [vmem:[%s0] sm:$0xf]
  %v45 = vld [vmem:[%s1] sm:$0xff]
  %v46 = vld [vmem:[%s1 + $0x8] sm:$0xff]
  %v47 = vld [vmem:[%s1 + $0x10] sm:$0xff]
  %v48 = vld [vmem:[%s1 + $0x18] sm:$0xff]
  %v49 = vld [vmem:[%s1 + $0x20] sm:$0xff]
  %v50 = vld [vmem:[%s1 + $0x28] sm:$0xff]
  %v51 = vld [vmem:[%s1 + $0x30] sm:$0xff]
  %v52 = vld [vmem:[%s1 + $0x38] sm:$0xff]
  %v53 = vld [vmem:[%s2] sm:$0xff]
  %v54 = vld [vmem:[%s2 + $0x8] sm:$0xff]
  %v55 = vld [vmem:[%s2 + $0x10] sm:$0xff]
  %v56 = vld [vmem:[%s2 + $0x18] sm:$0xff]
  %v57 = vld [vmem:[%s2 + $0x20] sm:$0xff]
  %v58 = vld [vmem:[%s2 + $0x28] sm:$0xff]
  %v59 = vld [vmem:[%s2 + $0x30] sm:$0xff]
  %v60 = vld [vmem:[%s2 + $0x38] sm:$0xff]
  %62 = vset.pattern.permute.xlu0 0
  %63 = vperm.xlu0 %62, %v53
  %v64 = vpop.permute.xlu0 %63
  %67 = vset.pattern.permute.xlu0 0
  %68 = vperm.xlu0 %67, %v54
  %v69 = vpop.permute.xlu0 %68
  %72 = vset.pattern.permute.xlu0 0
  %73 = vperm.xlu0 %72, %v55
  %v74 = vpop.permute.xlu0 %73
  %77 = vset.pattern.permute.xlu0 0
  %78 = vperm.xlu0 %77, %v56
  %v79 = vpop.permute.xlu0 %78
  %82 = vset.pattern.permute.xlu0 0
  %83 = vperm.xlu0 %82, %v57
  %v84 = vpop.permute.xlu0 %83
  %87 = vset.pattern.permute.xlu0 0
  %88 = vperm.xlu0 %87, %v58
  %v89 = vpop.permute.xlu0 %88
  %92 = vset.pattern.permute.xlu0 0
  %93 = vperm.xlu0 %92, %v59
  %v94 = vpop.permute.xlu0 %93
  %97 = vset.pattern.permute.xlu0 0
  %98 = vperm.xlu0 %97, %v60
  %v99 = vpop.permute.xlu0 %98
  %vm101 = vcmask 31744
  %v103 = vsel %vm101, %v45, 0
  %v106 = vsel %vm101, %v46, 0
  %v109 = vsel %vm101, %v47, 0
  %v112 = vsel %vm101, %v48, 0
  %v115 = vsel %vm101, %v49, 0
  %v118 = vsel %vm101, %v50, 0
  %v121 = vsel %vm101, %v51, 0
  %v124 = vsel %vm101, %v52, 0
  %vm126 = vcmask 1043456
  %v128 = vsel %vm126, %v44, 0
  %130 = vmatprep.subr.mxu0 0.0
  %131 = vmatpush1.msra.mxu0 0.0
  %132 = vmatprep.subr.mxu0 0.0
  %133 = vmatpush1.msra.mxu0 0.0
  %134 = vmatprep.subr.mxu0 0.0
  %135 = vmatpush1.msra.mxu0 0.0
  %136 = vmatprep.subr.mxu0 0.0
  %137 = vmatpush1.msra.mxu0 0.0
  %138 = vmatprep.subr.mxu0 0.0
  %139 = vmatpush1.msra.mxu0 0.0
  %140 = vmatprep.subr.mxu0 0.0
  %141 = vmatpush1.msra.mxu0 0.0
  %142 = vmatprep.subr.mxu0 0.0
  %143 = vmatpush1.msra.mxu0 0.0
  %144 = vmatprep.subr.mxu0 0.0
  %145 = vmatpush1.msra.mxu0 0.0
  %146 = vmatprep.subr.mxu0 0.0
  %147 = vmatpush1.msra.mxu0 0.0
  %148 = vmatprep.subr.mxu0 0.0
  %149 = vmatpush1.msra.mxu0 0.0
  %150 = vmatprep.subr.mxu0 0.0
  %151 = vmatpush1.msra.mxu0 0.0
  %152 = vmatprep.subr.mxu0 0.0
  %153 = vmatpush1.msra.mxu0 0.0
  %154 = vmatprep.subr.mxu0 0.0
  %155 = vmatpush1.msra.mxu0 0.0
  %156 = vmatprep.subr.mxu0 0.0
  %157 = vmatpush1.msra.mxu0 0.0
  %158 = vmatprep.subr.mxu0 0.0
  %159 = vmatpush1.msra.mxu0 0.0
  %160 = vmatprep.subr.mxu0 0.0
  %161 = vmatpush1.msra.mxu0 %v128
  %162 = vmatprep.subr.mxu0 0.0
  %163 = vmatpush2.msra.mxu0 0.0
  %164 = vmatprep.subr.mxu0 0.0
  %165 = vmatpush2.msra.mxu0 0.0
  %166 = vmatprep.subr.mxu0 0.0
  %167 = vmatpush2.msra.mxu0 0.0
  %168 = vmatprep.subr.mxu0 0.0
  %169 = vmatpush2.msra.mxu0 0.0
  %170 = vmatprep.subr.mxu0 0.0
  %171 = vmatpush2.msra.mxu0 0.0
  %172 = vmatprep.subr.mxu0 0.0
  %173 = vmatpush2.msra.mxu0 0.0
  %174 = vmatprep.subr.mxu0 0.0
  %175 = vmatpush2.msra.mxu0 0.0
  %176 = vmatprep.subr.mxu0 0.0
  %177 = vmatpush2.msra.mxu0 0.0
  %178 = vmatprep.subr.mxu0 0.0
  %179 = vmatpush2.msra.mxu0 0.0
  %180 = vmatprep.subr.mxu0 0.0
  %181 = vmatpush2.msra.mxu0 0.0
  %182 = vmatprep.subr.mxu0 0.0
  %183 = vmatpush2.msra.mxu0 0.0
  %184 = vmatprep.subr.mxu0 0.0
  %185 = vmatpush2.msra.mxu0 0.0
  %186 = vmatprep.subr.mxu0 0.0
  %187 = vmatpush2.msra.mxu0 0.0
  %188 = vmatprep.subr.mxu0 0.0
  %189 = vmatpush2.msra.mxu0 0.0
  %190 = vmatprep.subr.mxu0 0.0
  %191 = vmatpush2.msra.mxu0 0.0
  %192 = vmatprep.subr.mxu0 0.0
  %193 = vmatpush2.msra.mxu0 0.0
  %194 = vmatprep.mubr.f32.mxu0 0.0
  %195 = vmatmul.mubr.f32.gmra.mxu0 %v103
  %v196 = vpop.f32.mrf.mxu0
  %v197 = vadd.f32 %v64, %v196
  %v198 = vpop.f32.mrf.mxu0
  %199 = vmatprep.mubr.f32.mxu0 0.0
  %200 = vmatmul.mubr.f32.gmra.mxu0 %v106
  %v201 = vpop.f32.mrf.mxu0
  %v202 = vadd.f32 %v69, %v201
  %v203 = vpop.f32.mrf.mxu0
  %204 = vmatprep.mubr.f32.mxu0 0.0
  %205 = vmatmul.mubr.f32.gmra.mxu0 %v109
  %v206 = vpop.f32.mrf.mxu0
  %v207 = vadd.f32 %v74, %v206
  %v208 = vpop.f32.mrf.mxu0
  %209 = vmatprep.mubr.f32.mxu0 0.0
  %210 = vmatmul.mubr.f32.gmra.mxu0 %v112
  %v211 = vpop.f32.mrf.mxu0
  %v212 = vadd.f32 %v79, %v211
  %v213 = vpop.f32.mrf.mxu0
  %214 = vmatprep.mubr.f32.mxu0 0.0
  %215 = vmatmul.mubr.f32.gmra.mxu0 %v115
  %v216 = vpop.f32.mrf.mxu0
  %v217 = vadd.f32 %v84, %v216
  %v218 = vpop.f32.mrf.mxu0
  %219 = vmatprep.mubr.f32.mxu0 0.0
  %220 = vmatmul.mubr.f32.gmra.mxu0 %v118
  %v221 = vpop.f32.mrf.mxu0
  %v222 = vadd.f32 %v89, %v221
  %v223 = vpop.f32.mrf.mxu0
  %224 = vmatprep.mubr.f32.mxu0 0.0
  %225 = vmatmul.mubr.f32.gmra.mxu0 %v121
  %v226 = vpop.f32.mrf.mxu0
  %v227 = vadd.f32 %v94, %v226
  %v228 = vpop.f32.mrf.mxu0
  %229 = vmatprep.mubr.f32.mxu0 0.0
  %230 = vmatmul.mubr.f32.gmra.mxu0 %v124
  %v231 = vpop.f32.mrf.mxu0
  %v232 = vadd.f32 %v99, %v231
  %v233 = vpop.f32.mrf.mxu0
  %234 = vdwg.mxu0
  %v235 = vmax.f32 %v197, 0.0
  %v236 = vmax.f32 %v202, 0.0
  %v237 = vmax.f32 %v207, 0.0
  %v238 = vmax.f32 %v212, 0.0
  %v239 = vmax.f32 %v217, 0.0
  %v240 = vmax.f32 %v222, 0.0
  %v241 = vmax.f32 %v227, 0.0
  %v242 = vmax.f32 %v232, 0.0
  %v243 = vld [vmem:[%s3] sm:$0xff]
  %v244 = vld [vmem:[%s4] sm:$0xff]
  %246 = vset.pattern.permute.xlu0 0
  %247 = vperm.xlu0 %246, %v244
  %v248 = vpop.permute.xlu0 %247
  %vm250 = vcmask 523264
  %v252 = vsel %vm250, %v243, 0
  %254 = vmatprep.subr.mxu0 0.0
  %255 = vmatpush1.msra.mxu0 0.0
  %256 = vmatprep.subr.mxu0 0.0
  %257 = vmatpush1.msra.mxu0 0.0
  %258 = vmatprep.subr.mxu0 0.0
  %259 = vmatpush1.msra.mxu0 0.0
  %260 = vmatprep.subr.mxu0 0.0
  %261 = vmatpush1.msra.mxu0 0.0
  %262 = vmatprep.subr.mxu0 0.0
  %263 = vmatpush1.msra.mxu0 0.0
  %264 = vmatprep.subr.mxu0 0.0
  %265 = vmatpush1.msra.mxu0 0.0
  %266 = vmatprep.subr.mxu0 0.0
  %267 = vmatpush1.msra.mxu0 0.0
  %268 = vmatprep.subr.mxu0 0.0
  %269 = vmatpush1.msra.mxu0 0.0
  %270 = vmatprep.subr.mxu0 0.0
  %271 = vmatpush1.msra.mxu0 %v242
  %272 = vmatprep.subr.mxu0 0.0
  %273 = vmatpush1.msra.mxu0 %v241
  %274 = vmatprep.subr.mxu0 0.0
  %275 = vmatpush1.msra.mxu0 %v240
  %276 = vmatprep.subr.mxu0 0.0
  %277 = vmatpush1.msra.mxu0 %v239
  %278 = vmatprep.subr.mxu0 0.0
  %279 = vmatpush1.msra.mxu0 %v238
  %280 = vmatprep.subr.mxu0 0.0
  %281 = vmatpush1.msra.mxu0 %v237
  %282 = vmatprep.subr.mxu0 0.0
  %283 = vmatpush1.msra.mxu0 %v236
  %284 = vmatprep.subr.mxu0 0.0
  %285 = vmatpush1.msra.mxu0 %v235
  %286 = vmatprep.subr.mxu0 0.0
  %287 = vmatpush2.msra.mxu0 0.0
  %288 = vmatprep.subr.mxu0 0.0
  %289 = vmatpush2.msra.mxu0 0.0
  %290 = vmatprep.subr.mxu0 0.0
  %291 = vmatpush2.msra.mxu0 0.0
  %292 = vmatprep.subr.mxu0 0.0
  %293 = vmatpush2.msra.mxu0 0.0
  %294 = vmatprep.subr.mxu0 0.0
  %295 = vmatpush2.msra.mxu0 0.0
  %296 = vmatprep.subr.mxu0 0.0
  %297 = vmatpush2.msra.mxu0 0.0
  %298 = vmatprep.subr.mxu0 0.0
  %299 = vmatpush2.msra.mxu0 0.0
  %300 = vmatprep.subr.mxu0 0.0
  %301 = vmatpush2.msra.mxu0 0.0
  %302 = vmatprep.subr.mxu0 0.0
  %303 = vmatpush2.msra.mxu0 0.0
  %304 = vmatprep.subr.mxu0 0.0
  %305 = vmatpush2.msra.mxu0 0.0
  %306 = vmatprep.subr.mxu0 0.0
  %307 = vmatpush2.msra.mxu0 0.0
  %308 = vmatprep.subr.mxu0 0.0
  %309 = vmatpush2.msra.mxu0 0.0
  %310 = vmatprep.subr.mxu0 0.0
  %311 = vmatpush2.msra.mxu0 0.0
  %312 = vmatprep.subr.mxu0 0.0
  %313 = vmatpush2.msra.mxu0 0.0
  %314 = vmatprep.subr.mxu0 0.0
  %315 = vmatpush2.msra.mxu0 0.0
  %316 = vmatprep.subr.mxu0 0.0
  %317 = vmatpush2.msra.mxu0 0.0
  %318 = vmatprep.mubr.f32.mxu0 0.0
  %319 = vmatmul.mubr.f32.gmra.mxu0 %v252
  %v320 = vpop.f32.mrf.mxu0
  %v321 = vadd.f32 %v248, %v320
  %v322 = vpop.f32.mrf.mxu0
  %323 = vdwg.mxu0
  %v324 = vmax.f32 %v321, 0.0
  %s325 = scalar_lea.vmem %s0, 4
  %v326 = vld [vmem:[%s325] sm:$0xf]
  %v328 = vsel %vm126, %v326, 0
  %330 = vmatprep.subr.mxu0 0.0
  %331 = vmatpush1.msra.mxu0 0.0
  %332 = vmatprep.subr.mxu0 0.0
  %333 = vmatpush1.msra.mxu0 0.0
  %334 = vmatprep.subr.mxu0 0.0
  %335 = vmatpush1.msra.mxu0 0.0
  %336 = vmatprep.subr.mxu0 0.0
  %337 = vmatpush1.msra.mxu0 0.0
  %338 = vmatprep.subr.mxu0 0.0
  %339 = vmatpush1.msra.mxu0 0.0
  %340 = vmatprep.subr.mxu0 0.0
  %341 = vmatpush1.msra.mxu0 0.0
  %342 = vmatprep.subr.mxu0 0.0
  %343 = vmatpush1.msra.mxu0 0.0
  %344 = vmatprep.subr.mxu0 0.0
  %345 = vmatpush1.msra.mxu0 0.0
  %346 = vmatprep.subr.mxu0 0.0
  %347 = vmatpush1.msra.mxu0 0.0
  %348 = vmatprep.subr.mxu0 0.0
  %349 = vmatpush1.msra.mxu0 0.0
  %350 = vmatprep.subr.mxu0 0.0
  %351 = vmatpush1.msra.mxu0 0.0
  %352 = vmatprep.subr.mxu0 0.0
  %353 = vmatpush1.msra.mxu0 0.0
  %354 = vmatprep.subr.mxu0 0.0
  %355 = vmatpush1.msra.mxu0 0.0
  %356 = vmatprep.subr.mxu0 0.0
  %357 = vmatpush1.msra.mxu0 0.0
  %358 = vmatprep.subr.mxu0 0.0
  %359 = vmatpush1.msra.mxu0 0.0
  %360 = vmatprep.subr.mxu0 0.0
  %361 = vmatpush1.msra.mxu0 %v328
  %362 = vmatprep.subr.mxu0 0.0
  %363 = vmatpush2.msra.mxu0 0.0
  %364 = vmatprep.subr.mxu0 0.0
  %365 = vmatpush2.msra.mxu0 0.0
  %366 = vmatprep.subr.mxu0 0.0
  %367 = vmatpush2.msra.mxu0 0.0
  %368 = vmatprep.subr.mxu0 0.0
  %369 = vmatpush2.msra.mxu0 0.0
  %370 = vmatprep.subr.mxu0 0.0
  %371 = vmatpush2.msra.mxu0 0.0
  %372 = vmatprep.subr.mxu0 0.0
  %373 = vmatpush2.msra.mxu0 0.0
  %374 = vmatprep.subr.mxu0 0.0
  %375 = vmatpush2.msra.mxu0 0.0
  %376 = vmatprep.subr.mxu0 0.0
  %377 = vmatpush2.msra.mxu0 0.0
  %378 = vmatprep.subr.mxu0 0.0
  %379 = vmatpush2.msra.mxu0 0.0
  %380 = vmatprep.subr.mxu0 0.0
  %381 = vmatpush2.msra.mxu0 0.0
  %382 = vmatprep.subr.mxu0 0.0
  %383 = vmatpush2.msra.mxu0 0.0
  %384 = vmatprep.subr.mxu0 0.0
  %385 = vmatpush2.msra.mxu0 0.0
  %386 = vmatprep.subr.mxu0 0.0
  %387 = vmatpush2.msra.mxu0 0.0
  %388 = vmatprep.subr.mxu0 0.0
  %389 = vmatpush2.msra.mxu0 0.0
  %390 = vmatprep.subr.mxu0 0.0
  %391 = vmatpush2.msra.mxu0 0.0
  %392 = vmatprep.subr.mxu0 0.0
  %393 = vmatpush2.msra.mxu0 0.0
  %394 = vmatprep.mubr.f32.mxu0 0.0
  %395 = vmatmul.mubr.f32.gmra.mxu0 %v103
  %v396 = vpop.f32.mrf.mxu0
  %v397 = vadd.f32 %v64, %v396
  %v398 = vpop.f32.mrf.mxu0
  %399 = vmatprep.mubr.f32.mxu0 0.0
  %400 = vmatmul.mubr.f32.gmra.mxu0 %v106
  %v401 = vpop.f32.mrf.mxu0
  %v402 = vadd.f32 %v69, %v401
  %v403 = vpop.f32.mrf.mxu0
  %404 = vmatprep.mubr.f32.mxu0 0.0
  %405 = vmatmul.mubr.f32.gmra.mxu0 %v109
  %v406 = vpop.f32.mrf.mxu0
  %v407 = vadd.f32 %v74, %v406
  %v408 = vpop.f32.mrf.mxu0
  %409 = vmatprep.mubr.f32.mxu0 0.0
  %410 = vmatmul.mubr.f32.gmra.mxu0 %v112
  %v411 = vpop.f32.mrf.mxu0
  %v412 = vadd.f32 %v79, %v411
  %v413 = vpop.f32.mrf.mxu0
  %414 = vmatprep.mubr.f32.mxu0 0.0
  %415 = vmatmul.mubr.f32.gmra.mxu0 %v115
  %v416 = vpop.f32.mrf.mxu0
  %v417 = vadd.f32 %v84, %v416
  %v418 = vpop.f32.mrf.mxu0
  %419 = vmatprep.mubr.f32.mxu0 0.0
  %420 = vmatmul.mubr.f32.gmra.mxu0 %v118
  %v421 = vpop.f32.mrf.mxu0
  %v422 = vadd.f32 %v89, %v421
  %v423 = vpop.f32.mrf.mxu0
  %424 = vmatprep.mubr.f32.mxu0 0.0
  %425 = vmatmul.mubr.f32.gmra.mxu0 %v121
  %v426 = vpop.f32.mrf.mxu0
  %v427 = vadd.f32 %v94, %v426
  %v428 = vpop.f32.mrf.mxu0
  %429 = vmatprep.mubr.f32.mxu0 0.0
  %430 = vmatmul.mubr.f32.gmra.mxu0 %v124
  %v431 = vpop.f32.mrf.mxu0
  %v432 = vadd.f32 %v99, %v431
  %v433 = vpop.f32.mrf.mxu0
  %434 = vdwg.mxu0
  %v435 = vmax.f32 %v397, 0.0
  %v436 = vmax.f32 %v402, 0.0
  %v437 = vmax.f32 %v407, 0.0
  %v438 = vmax.f32 %v412, 0.0
  %v439 = vmax.f32 %v417, 0.0
  %v440 = vmax.f32 %v422, 0.0
  %v441 = vmax.f32 %v427, 0.0
  %v442 = vmax.f32 %v432, 0.0
  %443 = vmatprep.subr.mxu0 0.0
  %444 = vmatpush1.msra.mxu0 0.0
  %445 = vmatprep.subr.mxu0 0.0
  %446 = vmatpush1.msra.mxu0 0.0
  %447 = vmatprep.subr.mxu0 0.0
  %448 = vmatpush1.msra.mxu0 0.0
  %449 = vmatprep.subr.mxu0 0.0
  %450 = vmatpush1.msra.mxu0 0.0
  %451 = vmatprep.subr.mxu0 0.0
  %452 = vmatpush1.msra.mxu0 0.0
  %453 = vmatprep.subr.mxu0 0.0
  %454 = vmatpush1.msra.mxu0 0.0
  %455 = vmatprep.subr.mxu0 0.0
  %456 = vmatpush1.msra.mxu0 0.0
  %457 = vmatprep.subr.mxu0 0.0
  %458 = vmatpush1.msra.mxu0 0.0
  %459 = vmatprep.subr.mxu0 0.0
  %460 = vmatpush1.msra.mxu0 %v442
  %461 = vmatprep.subr.mxu0 0.0
  %462 = vmatpush1.msra.mxu0 %v441
  %463 = vmatprep.subr.mxu0 0.0
  %464 = vmatpush1.msra.mxu0 %v440
  %465 = vmatprep.subr.mxu0 0.0
  %466 = vmatpush1.msra.mxu0 %v439
  %467 = vmatprep.subr.mxu0 0.0
  %468 = vmatpush1.msra.mxu0 %v438
  %469 = vmatprep.subr.mxu0 0.0
  %470 = vmatpush1.msra.mxu0 %v437
  %471 = vmatprep.subr.mxu0 0.0
  %472 = vmatpush1.msra.mxu0 %v436
  %473 = vmatprep.subr.mxu0 0.0
  %474 = vmatpush1.msra.mxu0 %v435
  %475 = vmatprep.subr.mxu0 0.0
  %476 = vmatpush2.msra.mxu0 0.0
  %477 = vmatprep.subr.mxu0 0.0
  %478 = vmatpush2.msra.mxu0 0.0
  %479 = vmatprep.subr.mxu0 0.0
  %480 = vmatpush2.msra.mxu0 0.0
  %481 = vmatprep.subr.mxu0 0.0
  %482 = vmatpush2.msra.mxu0 0.0
  %483 = vmatprep.subr.mxu0 0.0
  %484 = vmatpush2.msra.mxu0 0.0
  %485 = vmatprep.subr.mxu0 0.0
  %486 = vmatpush2.msra.mxu0 0.0
  %487 = vmatprep.subr.mxu0 0.0
  %488 = vmatpush2.msra.mxu0 0.0
  %489 = vmatprep.subr.mxu0 0.0
  %490 = vmatpush2.msra.mxu0 0.0
  %491 = vmatprep.subr.mxu0 0.0
  %492 = vmatpush2.msra.mxu0 0.0
  %493 = vmatprep.subr.mxu0 0.0
  %494 = vmatpush2.msra.mxu0 0.0
  %495 = vmatprep.subr.mxu0 0.0
  %496 = vmatpush2.msra.mxu0 0.0
  %497 = vmatprep.subr.mxu0 0.0
  %498 = vmatpush2.msra.mxu0 0.0
  %499 = vmatprep.subr.mxu0 0.0
  %500 = vmatpush2.msra.mxu0 0.0
  %501 = vmatprep.subr.mxu0 0.0
  %502 = vmatpush2.msra.mxu0 0.0
  %503 = vmatprep.subr.mxu0 0.0
  %504 = vmatpush2.msra.mxu0 0.0
  %505 = vmatprep.subr.mxu0 0.0
  %506 = vmatpush2.msra.mxu0 0.0
  %507 = vmatprep.mubr.f32.mxu0 0.0
  %508 = vmatmul.mubr.f32.gmra.mxu0 %v252
  %v509 = vpop.f32.mrf.mxu0
  %v510 = vadd.f32 %v248, %v509
  %v511 = vpop.f32.mrf.mxu0
  %512 = vdwg.mxu0
  %v513 = vmax.f32 %v510, 0.0
  %v514 = vld [vmem:[%s5] sm:$0xff]
  %v515 = vld [vmem:[%s5 + $0x8] sm:$0xff]
  %vm516 = vcmask 130048
  %v518 = vsel %vm516, %v324, 0
  %520 = vmatprep.subr.mxu0 0.0
  %521 = vmatpush1.msra.mxu0 0.0
  %522 = vmatprep.subr.mxu0 0.0
  %523 = vmatpush1.msra.mxu0 0.0
  %524 = vmatprep.subr.mxu0 0.0
  %525 = vmatpush1.msra.mxu0 0.0
  %526 = vmatprep.subr.mxu0 0.0
  %527 = vmatpush1.msra.mxu0 0.0
  %528 = vmatprep.subr.mxu0 0.0
  %529 = vmatpush1.msra.mxu0 0.0
  %530 = vmatprep.subr.mxu0 0.0
  %531 = vmatpush1.msra.mxu0 0.0
  %532 = vmatprep.subr.mxu0 0.0
  %533 = vmatpush1.msra.mxu0 0.0
  %534 = vmatprep.subr.mxu0 0.0
  %535 = vmatpush1.msra.mxu0 0.0
  %536 = vmatprep.subr.mxu0 0.0
  %537 = vmatpush1.msra.mxu0 0.0
  %538 = vmatprep.subr.mxu0 0.0
  %539 = vmatpush1.msra.mxu0 0.0
  %540 = vmatprep.subr.mxu0 0.0
  %541 = vmatpush1.msra.mxu0 0.0
  %542 = vmatprep.subr.mxu0 0.0
  %543 = vmatpush1.msra.mxu0 0.0
  %544 = vmatprep.subr.mxu0 0.0
  %545 = vmatpush1.msra.mxu0 0.0
  %546 = vmatprep.subr.mxu0 0.0
  %547 = vmatpush1.msra.mxu0 0.0
  %548 = vmatprep.subr.mxu0 0.0
  %549 = vmatpush1.msra.mxu0 %v515
  %550 = vmatprep.subr.mxu0 0.0
  %551 = vmatpush1.msra.mxu0 %v514
  %552 = vmatprep.subr.mxu0 0.0
  %553 = vmatpush2.msra.mxu0 0.0
  %554 = vmatprep.subr.mxu0 0.0
  %555 = vmatpush2.msra.mxu0 0.0
  %556 = vmatprep.subr.mxu0 0.0
  %557 = vmatpush2.msra.mxu0 0.0
  %558 = vmatprep.subr.mxu0 0.0
  %559 = vmatpush2.msra.mxu0 0.0
  %560 = vmatprep.subr.mxu0 0.0
  %561 = vmatpush2.msra.mxu0 0.0
  %562 = vmatprep.subr.mxu0 0.0
  %563 = vmatpush2.msra.mxu0 0.0
  %564 = vmatprep.subr.mxu0 0.0
  %565 = vmatpush2.msra.mxu0 0.0
  %566 = vmatprep.subr.mxu0 0.0
  %567 = vmatpush2.msra.mxu0 0.0
  %568 = vmatprep.subr.mxu0 0.0
  %569 = vmatpush2.msra.mxu0 0.0
  %570 = vmatprep.subr.mxu0 0.0
  %571 = vmatpush2.msra.mxu0 0.0
  %572 = vmatprep.subr.mxu0 0.0
  %573 = vmatpush2.msra.mxu0 0.0
  %574 = vmatprep.subr.mxu0 0.0
  %575 = vmatpush2.msra.mxu0 0.0
  %576 = vmatprep.subr.mxu0 0.0
  %577 = vmatpush2.msra.mxu0 0.0
  %578 = vmatprep.subr.mxu0 0.0
  %579 = vmatpush2.msra.mxu0 0.0
  %580 = vmatprep.subr.mxu0 0.0
  %581 = vmatpush2.msra.mxu0 0.0
  %582 = vmatprep.subr.mxu0 0.0
  %583 = vmatpush2.msra.mxu0 0.0
  %584 = vmatprep.mubr.f32.mxu0 0.0
  %585 = vmatmul.mubr.f32.gmra.mxu0 %v518
  %v586 = vpop.f32.mrf.mxu0
  %v587 = vadd.f32 0.0, %v586
  %v588 = vpop.f32.mrf.mxu0
  %589 = vdwg.mxu0
  %v591 = vsel %vm516, %v513, 0
  %593 = vmatprep.subr.mxu0 0.0
  %594 = vmatpush1.msra.mxu0 0.0
  %595 = vmatprep.subr.mxu0 0.0
  %596 = vmatpush1.msra.mxu0 0.0
  %597 = vmatprep.subr.mxu0 0.0
  %598 = vmatpush1.msra.mxu0 0.0
  %599 = vmatprep.subr.mxu0 0.0
  %600 = vmatpush1.msra.mxu0 0.0
  %601 = vmatprep.subr.mxu0 0.0
  %602 = vmatpush1.msra.mxu0 0.0
  %603 = vmatprep.subr.mxu0 0.0
  %604 = vmatpush1.msra.mxu0 0.0
  %605 = vmatprep.subr.mxu0 0.0
  %606 = vmatpush1.msra.mxu0 0.0
  %607 = vmatprep.subr.mxu0 0.0
  %608 = vmatpush1.msra.mxu0 0.0
  %609 = vmatprep.subr.mxu0 0.0
  %610 = vmatpush1.msra.mxu0 0.0
  %611 = vmatprep.subr.mxu0 0.0
  %612 = vmatpush1.msra.mxu0 0.0
  %613 = vmatprep.subr.mxu0 0.0
  %614 = vmatpush1.msra.mxu0 0.0
  %615 = vmatprep.subr.mxu0 0.0
  %616 = vmatpush1.msra.mxu0 0.0
  %617 = vmatprep.subr.mxu0 0.0
  %618 = vmatpush1.msra.mxu0 0.0
  %619 = vmatprep.subr.mxu0 0.0
  %620 = vmatpush1.msra.mxu0 0.0
  %621 = vmatprep.subr.mxu0 0.0
  %622 = vmatpush1.msra.mxu0 %v515
  %623 = vmatprep.subr.mxu0 0.0
  %624 = vmatpush1.msra.mxu0 %v514
  %625 = vmatprep.subr.mxu0 0.0
  %626 = vmatpush2.msra.mxu0 0.0
  %627 = vmatprep.subr.mxu0 0.0
  %628 = vmatpush2.msra.mxu0 0.0
  %629 = vmatprep.subr.mxu0 0.0
  %630 = vmatpush2.msra.mxu0 0.0
  %631 = vmatprep.subr.mxu0 0.0
  %632 = vmatpush2.msra.mxu0 0.0
  %633 = vmatprep.subr.mxu0 0.0
  %634 = vmatpush2.msra.mxu0 0.0
  %635 = vmatprep.subr.mxu0 0.0
  %636 = vmatpush2.msra.mxu0 0.0
  %637 = vmatprep.subr.mxu0 0.0
  %638 = vmatpush2.msra.mxu0 0.0
  %639 = vmatprep.subr.mxu0 0.0
  %640 = vmatpush2.msra.mxu0 0.0
  %641 = vmatprep.subr.mxu0 0.0
  %642 = vmatpush2.msra.mxu0 0.0
  %643 = vmatprep.subr.mxu0 0.0
  %644 = vmatpush2.msra.mxu0 0.0
  %645 = vmatprep.subr.mxu0 0.0
  %646 = vmatpush2.msra.mxu0 0.0
  %647 = vmatprep.subr.mxu0 0.0
  %648 = vmatpush2.msra.mxu0 0.0
  %649 = vmatprep.subr.mxu0 0.0
  %650 = vmatpush2.msra.mxu0 0.0
  %651 = vmatprep.subr.mxu0 0.0
  %652 = vmatpush2.msra.mxu0 0.0
  %653 = vmatprep.subr.mxu0 0.0
  %654 = vmatpush2.msra.mxu0 0.0
  %655 = vmatprep.subr.mxu0 0.0
  %656 = vmatpush2.msra.mxu0 0.0
  %657 = vmatprep.mubr.f32.mxu0 0.0
  %658 = vmatmul.mubr.f32.gmra.mxu0 %v591
  %v659 = vpop.f32.mrf.mxu0
  %v660 = vadd.f32 0.0, %v659
  %v661 = vpop.f32.mrf.mxu0
  %662 = vdwg.mxu0
  %v664 = vrot.slane %v660, 7
  %v667 = vrot.slane %v587, 7
  %v669 = vrot.slane %v660, 6
  %v671 = vrot.slane %v587, 6
  %v673 = vrot.slane %v660, 5
  %v675 = vrot.slane %v587, 5
  %v677 = vrot.slane %v660, 4
  %v679 = vrot.slane %v587, 4
  %v681 = vrot.slane %v660, 3
  %v683 = vrot.slane %v587, 3
  %v685 = vrot.slane %v660, 2
  %v687 = vrot.slane %v587, 2
  %v689 = vrot.slane %v660, 1
  %v691 = vrot.slane %v587, 1
  %vm693 = vcmask 1040384
  %v694 = vsel %vm693, %v587, %v664
  %vm695 = vcmask 1041408
  %v696 = vsel %vm695, %v694, %v667
  %vm697 = vcmask 1042432
  %v698 = vsel %vm697, %v696, %v669
  %v699 = vsel %vm126, %v698, %v671
  %vm700 = vcmask 1044480
  %v701 = vsel %vm700, %v699, %v673
  %vm702 = vcmask 1045504
  %v703 = vsel %vm702, %v701, %v675
  %vm704 = vcmask 1046528
  %v705 = vsel %vm704, %v703, %v677
  %v706 = vsel %vm693, %v679, %v681
  %v707 = vsel %vm695, %v706, %v683
  %v708 = vsel %vm697, %v707, %v685
  %v709 = vsel %vm126, %v708, %v687
  %v710 = vsel %vm700, %v709, %v689
  %v711 = vsel %vm702, %v710, %v691
  %v712 = vsel %vm704, %v711, %v660
  %v713 = vld [vmem:[%s7] sm:$0x1]
  %v715 = vlaneseq
  %v716 = vshrl.u32 %v715, 7
  %v717 = vsub.s32 0, %v716
  %v718 = vrot.slane %v713, %v717
  %v720 = vadd.f32 %v705, %v718
  %v721 = vadd.f32 %v712, %v718
  %v722 = vld [vmem:[%s6] sm:$0xff]
  %v723 = vld [vmem:[%s6 + $0x8] sm:$0xff]
  %v724 = vld [vmem:[%s6 + $0x10] sm:$0xff]
  %v725 = vld [vmem:[%s6 + $0x18] sm:$0xff]
  %vm726 = vcmask 261120
  %v728 = vsel %vm726, 0.0, 0
  %730 = vmatprep.subr.mxu0 0.0
  %731 = vmatpush1.msra.mxu0 0.0
  %732 = vmatprep.subr.mxu0 0.0
  %733 = vmatpush1.msra.mxu0 0.0
  %734 = vmatprep.subr.mxu0 0.0
  %735 = vmatpush1.msra.mxu0 0.0
  %736 = vmatprep.subr.mxu0 0.0
  %737 = vmatpush1.msra.mxu0 0.0
  %738 = vmatprep.subr.mxu0 0.0
  %739 = vmatpush1.msra.mxu0 0.0
  %740 = vmatprep.subr.mxu0 0.0
  %741 = vmatpush1.msra.mxu0 0.0
  %742 = vmatprep.subr.mxu0 0.0
  %743 = vmatpush1.msra.mxu0 0.0
  %744 = vmatprep.subr.mxu0 0.0
  %745 = vmatpush1.msra.mxu0 0.0
  %746 = vmatprep.subr.mxu0 0.0
  %747 = vmatpush1.msra.mxu0 0.0
  %748 = vmatprep.subr.mxu0 0.0
  %749 = vmatpush1.msra.mxu0 0.0
  %750 = vmatprep.subr.mxu0 0.0
  %751 = vmatpush1.msra.mxu0 0.0
  %752 = vmatprep.subr.mxu0 0.0
  %753 = vmatpush1.msra.mxu0 0.0
  %754 = vmatprep.subr.mxu0 0.0
  %755 = vmatpush1.msra.mxu0 %v725
  %756 = vmatprep.subr.mxu0 0.0
  %757 = vmatpush1.msra.mxu0 %v724
  %758 = vmatprep.subr.mxu0 0.0
  %759 = vmatpush1.msra.mxu0 %v723
  %760 = vmatprep.subr.mxu0 0.0
  %761 = vmatpush1.msra.mxu0 %v722
  %762 = vmatprep.subr.mxu0 0.0
  %763 = vmatpush2.msra.mxu0 0.0
  %764 = vmatprep.subr.mxu0 0.0
  %765 = vmatpush2.msra.mxu0 0.0
  %766 = vmatprep.subr.mxu0 0.0
  %767 = vmatpush2.msra.mxu0 0.0
  %768 = vmatprep.subr.mxu0 0.0
  %769 = vmatpush2.msra.mxu0 0.0
  %770 = vmatprep.subr.mxu0 0.0
  %771 = vmatpush2.msra.mxu0 0.0
  %772 = vmatprep.subr.mxu0 0.0
  %773 = vmatpush2.msra.mxu0 0.0
  %774 = vmatprep.subr.mxu0 0.0
  %775 = vmatpush2.msra.mxu0 0.0
  %776 = vmatprep.subr.mxu0 0.0
  %777 = vmatpush2.msra.mxu0 0.0
  %778 = vmatprep.subr.mxu0 0.0
  %779 = vmatpush2.msra.mxu0 0.0
  %780 = vmatprep.subr.mxu0 0.0
  %781 = vmatpush2.msra.mxu0 0.0
  %782 = vmatprep.subr.mxu0 0.0
  %783 = vmatpush2.msra.mxu0 0.0
  %784 = vmatprep.subr.mxu0 0.0
  %785 = vmatpush2.msra.mxu0 0.0
  %786 = vmatprep.subr.mxu0 0.0
  %787 = vmatpush2.msra.mxu0 0.0
  %788 = vmatprep.subr.mxu0 0.0
  %789 = vmatpush2.msra.mxu0 0.0
  %790 = vmatprep.subr.mxu0 0.0
  %791 = vmatpush2.msra.mxu0 0.0
  %792 = vmatprep.subr.mxu0 0.0
  %793 = vmatpush2.msra.mxu0 0.0
  %794 = vmatprep.mubr.f32.mxu0 0.0
  %795 = vmatmul.mubr.f32.gmra.mxu0 %v728
  %v796 = vpop.f32.mrf.mxu0
  %v797 = vadd.f32 0.0, %v796
  %v798 = vpop.f32.mrf.mxu0
  %799 = vdwg.mxu0
  %v800 = vadd.f32 %v720, %v797
  %v801 = vxor.u32 %v800, 2147483648
  %v802 = vmul.f32 %v801, 1.442695
  %v803 = vpow.pop %v802
  %v804 = vadd.f32 %v803, 1.0
  %v805 = vrcp.pop %v804
  %v806 = vmul.f32 1.0, %v805
  %v807 = vtanh.pop %v800
  %v808 = vmul.f32 %v806, 0.0
  %810 = vrot.lane.b32.xlu0 %v807, 32
  %v811 = vpop.permute.xlu0 %810
  %v813 = vmul.f32 %v806, %v811
  %815 = vrot.lane.b32.xlu0 %v813, 32
  %v816 = vpop.permute.xlu0 %815
  %v818 = vadd.f32 %v808, %v816
  %v819 = vtanh.pop %v818
  %821 = vrot.lane.b32.xlu0 %v819, 32
  %v822 = vpop.permute.xlu0 %821
  %v824 = vmul.f32 %v806, %v822
  %826 = vrot.lane.b32.xlu0 %v824, 64
  %v827 = vpop.permute.xlu0 %826
  %v828 = vsel %vm726, %v827, 0
  %830 = vmatprep.subr.mxu0 0.0
  %831 = vmatpush1.msra.mxu0 0.0
  %832 = vmatprep.subr.mxu0 0.0
  %833 = vmatpush1.msra.mxu0 0.0
  %834 = vmatprep.subr.mxu0 0.0
  %835 = vmatpush1.msra.mxu0 0.0
  %836 = vmatprep.subr.mxu0 0.0
  %837 = vmatpush1.msra.mxu0 0.0
  %838 = vmatprep.subr.mxu0 0.0
  %839 = vmatpush1.msra.mxu0 0.0
  %840 = vmatprep.subr.mxu0 0.0
  %841 = vmatpush1.msra.mxu0 0.0
  %842 = vmatprep.subr.mxu0 0.0
  %843 = vmatpush1.msra.mxu0 0.0
  %844 = vmatprep.subr.mxu0 0.0
  %845 = vmatpush1.msra.mxu0 0.0
  %846 = vmatprep.subr.mxu0 0.0
  %847 = vmatpush1.msra.mxu0 0.0
  %848 = vmatprep.subr.mxu0 0.0
  %849 = vmatpush1.msra.mxu0 0.0
  %850 = vmatprep.subr.mxu0 0.0
  %851 = vmatpush1.msra.mxu0 0.0
  %852 = vmatprep.subr.mxu0 0.0
  %853 = vmatpush1.msra.mxu0 0.0
  %854 = vmatprep.subr.mxu0 0.0
  %855 = vmatpush1.msra.mxu0 %v725
  %856 = vmatprep.subr.mxu0 0.0
  %857 = vmatpush1.msra.mxu0 %v724
  %858 = vmatprep.subr.mxu0 0.0
  %859 = vmatpush1.msra.mxu0 %v723
  %860 = vmatprep.subr.mxu0 0.0
  %861 = vmatpush1.msra.mxu0 %v722
  %862 = vmatprep.subr.mxu0 0.0
  %863 = vmatpush2.msra.mxu0 0.0
  %864 = vmatprep.subr.mxu0 0.0
  %865 = vmatpush2.msra.mxu0 0.0
  %866 = vmatprep.subr.mxu0 0.0
  %867 = vmatpush2.msra.mxu0 0.0
  %868 = vmatprep.subr.mxu0 0.0
  %869 = vmatpush2.msra.mxu0 0.0
  %870 = vmatprep.subr.mxu0 0.0
  %871 = vmatpush2.msra.mxu0 0.0
  %872 = vmatprep.subr.mxu0 0.0
  %873 = vmatpush2.msra.mxu0 0.0
  %874 = vmatprep.subr.mxu0 0.0
  %875 = vmatpush2.msra.mxu0 0.0
  %876 = vmatprep.subr.mxu0 0.0
  %877 = vmatpush2.msra.mxu0 0.0
  %878 = vmatprep.subr.mxu0 0.0
  %879 = vmatpush2.msra.mxu0 0.0
  %880 = vmatprep.subr.mxu0 0.0
  %881 = vmatpush2.msra.mxu0 0.0
  %882 = vmatprep.subr.mxu0 0.0
  %883 = vmatpush2.msra.mxu0 0.0
  %884 = vmatprep.subr.mxu0 0.0
  %885 = vmatpush2.msra.mxu0 0.0
  %886 = vmatprep.subr.mxu0 0.0
  %887 = vmatpush2.msra.mxu0 0.0
  %888 = vmatprep.subr.mxu0 0.0
  %889 = vmatpush2.msra.mxu0 0.0
  %890 = vmatprep.subr.mxu0 0.0
  %891 = vmatpush2.msra.mxu0 0.0
  %892 = vmatprep.subr.mxu0 0.0
  %893 = vmatpush2.msra.mxu0 0.0
  %894 = vmatprep.mubr.f32.mxu0 0.0
  %895 = vmatmul.mubr.f32.gmra.mxu0 %v828
  %v896 = vpop.f32.mrf.mxu0
  %v897 = vadd.f32 0.0, %v896
  %v898 = vpop.f32.mrf.mxu0
  %899 = vdwg.mxu0
  %v901 = vrot.slane %v897, 6
  %v903 = vadd.f32 %v720, %v901
  %v904 = vxor.u32 %v903, 2147483648
  %v905 = vmul.f32 %v904, 1.442695
  %v906 = vpow.pop %v905
  %v907 = vadd.f32 %v906, 1.0
  %v908 = vrcp.pop %v907
  %v909 = vmul.f32 1.0, %v908
  %v910 = vtanh.pop %v903
  %v912 = vrot.slane %v818, 6
  %v914 = vmul.f32 %v909, %v912
  %916 = vrot.lane.b32.xlu0 %v910, 32
  %v917 = vpop.permute.xlu0 %916
  %v919 = vmul.f32 %v909, %v917
  %921 = vrot.lane.b32.xlu0 %v919, 32
  %v922 = vpop.permute.xlu0 %921
  %v924 = vadd.f32 %v914, %v922
  %v925 = vtanh.pop %v924
  %927 = vrot.lane.b32.xlu0 %v925, 32
  %v928 = vpop.permute.xlu0 %927
  %v930 = vmul.f32 %v909, %v928
  %v932 = vrot.slane %v930, 2
  %933 = vrot.lane.b32.xlu0 %v932, 64
  %v934 = vpop.permute.xlu0 %933
  %v935 = vsel %vm726, %v934, 0
  %937 = vmatprep.subr.mxu0 0.0
  %938 = vmatpush1.msra.mxu0 0.0
  %939 = vmatprep.subr.mxu0 0.0
  %940 = vmatpush1.msra.mxu0 0.0
  %941 = vmatprep.subr.mxu0 0.0
  %942 = vmatpush1.msra.mxu0 0.0
  %943 = vmatprep.subr.mxu0 0.0
  %944 = vmatpush1.msra.mxu0 0.0
  %945 = vmatprep.subr.mxu0 0.0
  %946 = vmatpush1.msra.mxu0 0.0
  %947 = vmatprep.subr.mxu0 0.0
  %948 = vmatpush1.msra.mxu0 0.0
  %949 = vmatprep.subr.mxu0 0.0
  %950 = vmatpush1.msra.mxu0 0.0
  %951 = vmatprep.subr.mxu0 0.0
  %952 = vmatpush1.msra.mxu0 0.0
  %953 = vmatprep.subr.mxu0 0.0
  %954 = vmatpush1.msra.mxu0 0.0
  %955 = vmatprep.subr.mxu0 0.0
  %956 = vmatpush1.msra.mxu0 0.0
  %957 = vmatprep.subr.mxu0 0.0
  %958 = vmatpush1.msra.mxu0 0.0
  %959 = vmatprep.subr.mxu0 0.0
  %960 = vmatpush1.msra.mxu0 0.0
  %961 = vmatprep.subr.mxu0 0.0
  %962 = vmatpush1.msra.mxu0 %v725
  %963 = vmatprep.subr.mxu0 0.0
  %964 = vmatpush1.msra.mxu0 %v724
  %965 = vmatprep.subr.mxu0 0.0
  %966 = vmatpush1.msra.mxu0 %v723
  %967 = vmatprep.subr.mxu0 0.0
  %968 = vmatpush1.msra.mxu0 %v722
  %969 = vmatprep.subr.mxu0 0.0
  %970 = vmatpush2.msra.mxu0 0.0
  %971 = vmatprep.subr.mxu0 0.0
  %972 = vmatpush2.msra.mxu0 0.0
  %973 = vmatprep.subr.mxu0 0.0
  %974 = vmatpush2.msra.mxu0 0.0
  %975 = vmatprep.subr.mxu0 0.0
  %976 = vmatpush2.msra.mxu0 0.0
  %977 = vmatprep.subr.mxu0 0.0
  %978 = vmatpush2.msra.mxu0 0.0
  %979 = vmatprep.subr.mxu0 0.0
  %980 = vmatpush2.msra.mxu0 0.0
  %981 = vmatprep.subr.mxu0 0.0
  %982 = vmatpush2.msra.mxu0 0.0
  %983 = vmatprep.subr.mxu0 0.0
  %984 = vmatpush2.msra.mxu0 0.0
  %985 = vmatprep.subr.mxu0 0.0
  %986 = vmatpush2.msra.mxu0 0.0
  %987 = vmatprep.subr.mxu0 0.0
  %988 = vmatpush2.msra.mxu0 0.0
  %989 = vmatprep.subr.mxu0 0.0
  %990 = vmatpush2.msra.mxu0 0.0
  %991 = vmatprep.subr.mxu0 0.0
  %992 = vmatpush2.msra.mxu0 0.0
  %993 = vmatprep.subr.mxu0 0.0
  %994 = vmatpush2.msra.mxu0 0.0
  %995 = vmatprep.subr.mxu0 0.0
  %996 = vmatpush2.msra.mxu0 0.0
  %997 = vmatprep.subr.mxu0 0.0
  %998 = vmatpush2.msra.mxu0 0.0
  %999 = vmatprep.subr.mxu0 0.0
  %1000 = vmatpush2.msra.mxu0 0.0
  %1001 = vmatprep.mubr.f32.mxu0 0.0
  %1002 = vmatmul.mubr.f32.gmra.mxu0 %v935
  %v1003 = vpop.f32.mrf.mxu0
  %v1004 = vadd.f32 0.0, %v1003
  %v1005 = vpop.f32.mrf.mxu0
  %1006 = vdwg.mxu0
  %v1008 = vrot.slane %v1004, 4
  %v1010 = vadd.f32 %v720, %v1008
  %v1011 = vxor.u32 %v1010, 2147483648
  %v1012 = vmul.f32 %v1011, 1.442695
  %v1013 = vpow.pop %v1012
  %v1014 = vadd.f32 %v1013, 1.0
  %v1015 = vrcp.pop %v1014
  %v1016 = vmul.f32 1.0, %v1015
  %v1017 = vtanh.pop %v1010
  %v1019 = vrot.slane %v924, 6
  %v1021 = vmul.f32 %v1016, %v1019
  %1023 = vrot.lane.b32.xlu0 %v1017, 32
  %v1024 = vpop.permute.xlu0 %1023
  %v1026 = vmul.f32 %v1016, %v1024
  %1028 = vrot.lane.b32.xlu0 %v1026, 32
  %v1029 = vpop.permute.xlu0 %1028
  %v1031 = vadd.f32 %v1021, %v1029
  %v1032 = vtanh.pop %v1031
  %1034 = vrot.lane.b32.xlu0 %v1032, 32
  %v1035 = vpop.permute.xlu0 %1034
  %v1037 = vmul.f32 %v1016, %v1035
  %v1039 = vrot.slane %v1037, 4
  %1040 = vrot.lane.b32.xlu0 %v1039, 64
  %v1041 = vpop.permute.xlu0 %1040
  %v1042 = vsel %vm726, %v1041, 0
  %1044 = vmatprep.subr.mxu0 0.0
  %1045 = vmatpush1.msra.mxu0 0.0
  %1046 = vmatprep.subr.mxu0 0.0
  %1047 = vmatpush1.msra.mxu0 0.0
  %1048 = vmatprep.subr.mxu0 0.0
  %1049 = vmatpush1.msra.mxu0 0.0
  %1050 = vmatprep.subr.mxu0 0.0
  %1051 = vmatpush1.msra.mxu0 0.0
  %1052 = vmatprep.subr.mxu0 0.0
  %1053 = vmatpush1.msra.mxu0 0.0
  %1054 = vmatprep.subr.mxu0 0.0
  %1055 = vmatpush1.msra.mxu0 0.0
  %1056 = vmatprep.subr.mxu0 0.0
  %1057 = vmatpush1.msra.mxu0 0.0
  %1058 = vmatprep.subr.mxu0 0.0
  %1059 = vmatpush1.msra.mxu0 0.0
  %1060 = vmatprep.subr.mxu0 0.0
  %1061 = vmatpush1.msra.mxu0 0.0
  %1062 = vmatprep.subr.mxu0 0.0
  %1063 = vmatpush1.msra.mxu0 0.0
  %1064 = vmatprep.subr.mxu0 0.0
  %1065 = vmatpush1.msra.mxu0 0.0
  %1066 = vmatprep.subr.mxu0 0.0
  %1067 = vmatpush1.msra.mxu0 0.0
  %1068 = vmatprep.subr.mxu0 0.0
  %1069 = vmatpush1.msra.mxu0 %v725
  %1070 = vmatprep.subr.mxu0 0.0
  %1071 = vmatpush1.msra.mxu0 %v724
  %1072 = vmatprep.subr.mxu0 0.0
  %1073 = vmatpush1.msra.mxu0 %v723
  %1074 = vmatprep.subr.mxu0 0.0
  %1075 = vmatpush1.msra.mxu0 %v722
  %1076 = vmatprep.subr.mxu0 0.0
  %1077 = vmatpush2.msra.mxu0 0.0
  %1078 = vmatprep.subr.mxu0 0.0
  %1079 = vmatpush2.msra.mxu0 0.0
  %1080 = vmatprep.subr.mxu0 0.0
  %1081 = vmatpush2.msra.mxu0 0.0
  %1082 = vmatprep.subr.mxu0 0.0
  %1083 = vmatpush2.msra.mxu0 0.0
  %1084 = vmatprep.subr.mxu0 0.0
  %1085 = vmatpush2.msra.mxu0 0.0
  %1086 = vmatprep.subr.mxu0 0.0
  %1087 = vmatpush2.msra.mxu0 0.0
  %1088 = vmatprep.subr.mxu0 0.0
  %1089 = vmatpush2.msra.mxu0 0.0
  %1090 = vmatprep.subr.mxu0 0.0
  %1091 = vmatpush2.msra.mxu0 0.0
  %1092 = vmatprep.subr.mxu0 0.0
  %1093 = vmatpush2.msra.mxu0 0.0
  %1094 = vmatprep.subr.mxu0 0.0
  %1095 = vmatpush2.msra.mxu0 0.0
  %1096 = vmatprep.subr.mxu0 0.0
  %1097 = vmatpush2.msra.mxu0 0.0
  %1098 = vmatprep.subr.mxu0 0.0
  %1099 = vmatpush2.msra.mxu0 0.0
  %1100 = vmatprep.subr.mxu0 0.0
  %1101 = vmatpush2.msra.mxu0 0.0
  %1102 = vmatprep.subr.mxu0 0.0
  %1103 = vmatpush2.msra.mxu0 0.0
  %1104 = vmatprep.subr.mxu0 0.0
  %1105 = vmatpush2.msra.mxu0 0.0
  %1106 = vmatprep.subr.mxu0 0.0
  %1107 = vmatpush2.msra.mxu0 0.0
  %1108 = vmatprep.mubr.f32.mxu0 0.0
  %1109 = vmatmul.mubr.f32.gmra.mxu0 %v1042
  %v1110 = vpop.f32.mrf.mxu0
  %v1111 = vadd.f32 0.0, %v1110
  %v1112 = vpop.f32.mrf.mxu0
  %1113 = vdwg.mxu0
  %v1115 = vrot.slane %v1111, 2
  %v1117 = vadd.f32 %v720, %v1115
  %v1118 = vxor.u32 %v1117, 2147483648
  %v1119 = vmul.f32 %v1118, 1.442695
  %v1120 = vpow.pop %v1119
  %v1121 = vadd.f32 %v1120, 1.0
  %v1122 = vrcp.pop %v1121
  %v1123 = vmul.f32 1.0, %v1122
  %v1124 = vtanh.pop %v1117
  %v1126 = vrot.slane %v1031, 6
  %v1128 = vmul.f32 %v1123, %v1126
  %1130 = vrot.lane.b32.xlu0 %v1124, 32
  %v1131 = vpop.permute.xlu0 %1130
  %v1133 = vmul.f32 %v1123, %v1131
  %1135 = vrot.lane.b32.xlu0 %v1133, 32
  %v1136 = vpop.permute.xlu0 %1135
  %v1138 = vadd.f32 %v1128, %v1136
  %v1139 = vtanh.pop %v1138
  %1141 = vrot.lane.b32.xlu0 %v1139, 32
  %v1142 = vpop.permute.xlu0 %1141
  %v1144 = vmul.f32 %v1123, %v1142
  %v1146 = vrot.slane %v1144, 6
  %1147 = vrot.lane.b32.xlu0 %v1146, 64
  %v1148 = vpop.permute.xlu0 %1147
  %v1149 = vsel %vm726, %v1148, 0
  %1151 = vmatprep.subr.mxu0 0.0
  %1152 = vmatpush1.msra.mxu0 0.0
  %1153 = vmatprep.subr.mxu0 0.0
  %1154 = vmatpush1.msra.mxu0 0.0
  %1155 = vmatprep.subr.mxu0 0.0
  %1156 = vmatpush1.msra.mxu0 0.0
  %1157 = vmatprep.subr.mxu0 0.0
  %1158 = vmatpush1.msra.mxu0 0.0
  %1159 = vmatprep.subr.mxu0 0.0
  %1160 = vmatpush1.msra.mxu0 0.0
  %1161 = vmatprep.subr.mxu0 0.0
  %1162 = vmatpush1.msra.mxu0 0.0
  %1163 = vmatprep.subr.mxu0 0.0
  %1164 = vmatpush1.msra.mxu0 0.0
  %1165 = vmatprep.subr.mxu0 0.0
  %1166 = vmatpush1.msra.mxu0 0.0
  %1167 = vmatprep.subr.mxu0 0.0
  %1168 = vmatpush1.msra.mxu0 0.0
  %1169 = vmatprep.subr.mxu0 0.0
  %1170 = vmatpush1.msra.mxu0 0.0
  %1171 = vmatprep.subr.mxu0 0.0
  %1172 = vmatpush1.msra.mxu0 0.0
  %1173 = vmatprep.subr.mxu0 0.0
  %1174 = vmatpush1.msra.mxu0 0.0
  %1175 = vmatprep.subr.mxu0 0.0
  %1176 = vmatpush1.msra.mxu0 %v725
  %1177 = vmatprep.subr.mxu0 0.0
  %1178 = vmatpush1.msra.mxu0 %v724
  %1179 = vmatprep.subr.mxu0 0.0
  %1180 = vmatpush1.msra.mxu0 %v723
  %1181 = vmatprep.subr.mxu0 0.0
  %1182 = vmatpush1.msra.mxu0 %v722
  %1183 = vmatprep.subr.mxu0 0.0
  %1184 = vmatpush2.msra.mxu0 0.0
  %1185 = vmatprep.subr.mxu0 0.0
  %1186 = vmatpush2.msra.mxu0 0.0
  %1187 = vmatprep.subr.mxu0 0.0
  %1188 = vmatpush2.msra.mxu0 0.0
  %1189 = vmatprep.subr.mxu0 0.0
  %1190 = vmatpush2.msra.mxu0 0.0
  %1191 = vmatprep.subr.mxu0 0.0
  %1192 = vmatpush2.msra.mxu0 0.0
  %1193 = vmatprep.subr.mxu0 0.0
  %1194 = vmatpush2.msra.mxu0 0.0
  %1195 = vmatprep.subr.mxu0 0.0
  %1196 = vmatpush2.msra.mxu0 0.0
  %1197 = vmatprep.subr.mxu0 0.0
  %1198 = vmatpush2.msra.mxu0 0.0
  %1199 = vmatprep.subr.mxu0 0.0
  %1200 = vmatpush2.msra.mxu0 0.0
  %1201 = vmatprep.subr.mxu0 0.0
  %1202 = vmatpush2.msra.mxu0 0.0
  %1203 = vmatprep.subr.mxu0 0.0
  %1204 = vmatpush2.msra.mxu0 0.0
  %1205 = vmatprep.subr.mxu0 0.0
  %1206 = vmatpush2.msra.mxu0 0.0
  %1207 = vmatprep.subr.mxu0 0.0
  %1208 = vmatpush2.msra.mxu0 0.0
  %1209 = vmatprep.subr.mxu0 0.0
  %1210 = vmatpush2.msra.mxu0 0.0
  %1211 = vmatprep.subr.mxu0 0.0
  %1212 = vmatpush2.msra.mxu0 0.0
  %1213 = vmatprep.subr.mxu0 0.0
  %1214 = vmatpush2.msra.mxu0 0.0
  %1215 = vmatprep.mubr.f32.mxu0 0.0
  %1216 = vmatmul.mubr.f32.gmra.mxu0 %v1149
  %v1217 = vpop.f32.mrf.mxu0
  %v1218 = vadd.f32 0.0, %v1217
  %v1219 = vpop.f32.mrf.mxu0
  %1220 = vdwg.mxu0
  %v1221 = vadd.f32 %v721, %v1218
  %v1222 = vxor.u32 %v1221, 2147483648
  %v1223 = vmul.f32 %v1222, 1.442695
  %v1224 = vpow.pop %v1223
  %v1225 = vadd.f32 %v1224, 1.0
  %v1226 = vrcp.pop %v1225
  %v1227 = vmul.f32 1.0, %v1226
  %v1228 = vtanh.pop %v1221
  %v1230 = vrot.slane %v1138, 6
  %v1232 = vmul.f32 %v1227, %v1230
  %1234 = vrot.lane.b32.xlu0 %v1228, 32
  %v1235 = vpop.permute.xlu0 %1234
  %v1237 = vmul.f32 %v1227, %v1235
  %1239 = vrot.lane.b32.xlu0 %v1237, 32
  %v1240 = vpop.permute.xlu0 %1239
  %v1242 = vadd.f32 %v1232, %v1240
  %v1243 = vtanh.pop %v1242
  %1245 = vrot.lane.b32.xlu0 %v1243, 32
  %v1246 = vpop.permute.xlu0 %1245
  %v1248 = vmul.f32 %v1227, %v1246
  %1250 = vrot.lane.b32.xlu0 %v1248, 64
  %v1251 = vpop.permute.xlu0 %1250
  %v1252 = vsel %vm726, %v1251, 0
  %1254 = vmatprep.subr.mxu0 0.0
  %1255 = vmatpush1.msra.mxu0 0.0
  %1256 = vmatprep.subr.mxu0 0.0
  %1257 = vmatpush1.msra.mxu0 0.0
  %1258 = vmatprep.subr.mxu0 0.0
  %1259 = vmatpush1.msra.mxu0 0.0
  %1260 = vmatprep.subr.mxu0 0.0
  %1261 = vmatpush1.msra.mxu0 0.0
  %1262 = vmatprep.subr.mxu0 0.0
  %1263 = vmatpush1.msra.mxu0 0.0
  %1264 = vmatprep.subr.mxu0 0.0
  %1265 = vmatpush1.msra.mxu0 0.0
  %1266 = vmatprep.subr.mxu0 0.0
  %1267 = vmatpush1.msra.mxu0 0.0
  %1268 = vmatprep.subr.mxu0 0.0
  %1269 = vmatpush1.msra.mxu0 0.0
  %1270 = vmatprep.subr.mxu0 0.0
  %1271 = vmatpush1.msra.mxu0 0.0
  %1272 = vmatprep.subr.mxu0 0.0
  %1273 = vmatpush1.msra.mxu0 0.0
  %1274 = vmatprep.subr.mxu0 0.0
  %1275 = vmatpush1.msra.mxu0 0.0
  %1276 = vmatprep.subr.mxu0 0.0
  %1277 = vmatpush1.msra.mxu0 0.0
  %1278 = vmatprep.subr.mxu0 0.0
  %1279 = vmatpush1.msra.mxu0 %v725
  %1280 = vmatprep.subr.mxu0 0.0
  %1281 = vmatpush1.msra.mxu0 %v724
  %1282 = vmatprep.subr.mxu0 0.0
  %1283 = vmatpush1.msra.mxu0 %v723
  %1284 = vmatprep.subr.mxu0 0.0
  %1285 = vmatpush1.msra.mxu0 %v722
  %1286 = vmatprep.subr.mxu0 0.0
  %1287 = vmatpush2.msra.mxu0 0.0
  %1288 = vmatprep.subr.mxu0 0.0
  %1289 = vmatpush2.msra.mxu0 0.0
  %1290 = vmatprep.subr.mxu0 0.0
  %1291 = vmatpush2.msra.mxu0 0.0
  %1292 = vmatprep.subr.mxu0 0.0
  %1293 = vmatpush2.msra.mxu0 0.0
  %1294 = vmatprep.subr.mxu0 0.0
  %1295 = vmatpush2.msra.mxu0 0.0
  %1296 = vmatprep.subr.mxu0 0.0
  %1297 = vmatpush2.msra.mxu0 0.0
  %1298 = vmatprep.subr.mxu0 0.0
  %1299 = vmatpush2.msra.mxu0 0.0
  %1300 = vmatprep.subr.mxu0 0.0
  %1301 = vmatpush2.msra.mxu0 0.0
  %1302 = vmatprep.subr.mxu0 0.0
  %1303 = vmatpush2.msra.mxu0 0.0
  %1304 = vmatprep.subr.mxu0 0.0
  %1305 = vmatpush2.msra.mxu0 0.0
  %1306 = vmatprep.subr.mxu0 0.0
  %1307 = vmatpush2.msra.mxu0 0.0
  %1308 = vmatprep.subr.mxu0 0.0
  %1309 = vmatpush2.msra.mxu0 0.0
  %1310 = vmatprep.subr.mxu0 0.0
  %1311 = vmatpush2.msra.mxu0 0.0
  %1312 = vmatprep.subr.mxu0 0.0
  %1313 = vmatpush2.msra.mxu0 0.0
  %1314 = vmatprep.subr.mxu0 0.0
  %1315 = vmatpush2.msra.mxu0 0.0
  %1316 = vmatprep.subr.mxu0 0.0
  %1317 = vmatpush2.msra.mxu0 0.0
  %1318 = vmatprep.mubr.f32.mxu0 0.0
  %1319 = vmatmul.mubr.f32.gmra.mxu0 %v1252
  %v1320 = vpop.f32.mrf.mxu0
  %v1321 = vadd.f32 0.0, %v1320
  %v1322 = vpop.f32.mrf.mxu0
  %1323 = vdwg.mxu0
  %v1325 = vrot.slane %v1321, 6
  %v1327 = vadd.f32 %v721, %v1325
  %v1328 = vxor.u32 %v1327, 2147483648
  %v1329 = vmul.f32 %v1328, 1.442695
  %v1330 = vpow.pop %v1329
  %v1331 = vadd.f32 %v1330, 1.0
  %v1332 = vrcp.pop %v1331
  %v1333 = vmul.f32 1.0, %v1332
  %v1334 = vtanh.pop %v1327
  %v1336 = vrot.slane %v1242, 6
  %v1338 = vmul.f32 %v1333, %v1336
  %1340 = vrot.lane.b32.xlu0 %v1334, 32
  %v1341 = vpop.permute.xlu0 %1340
  %v1343 = vmul.f32 %v1333, %v1341
  %1345 = vrot.lane.b32.xlu0 %v1343, 32
  %v1346 = vpop.permute.xlu0 %1345
  %v1348 = vadd.f32 %v1338, %v1346
  %v1349 = vtanh.pop %v1348
  %1351 = vrot.lane.b32.xlu0 %v1349, 32
  %v1352 = vpop.permute.xlu0 %1351
  %v1354 = vmul.f32 %v1333, %v1352
  %v1356 = vrot.slane %v1354, 2
  %1357 = vrot.lane.b32.xlu0 %v1356, 64
  %v1358 = vpop.permute.xlu0 %1357
  %v1359 = vsel %vm726, %v1358, 0
  %1361 = vmatprep.subr.mxu0 0.0
  %1362 = vmatpush1.msra.mxu0 0.0
  %1363 = vmatprep.subr.mxu0 0.0
  %1364 = vmatpush1.msra.mxu0 0.0
  %1365 = vmatprep.subr.mxu0 0.0
  %1366 = vmatpush1.msra.mxu0 0.0
  %1367 = vmatprep.subr.mxu0 0.0
  %1368 = vmatpush1.msra.mxu0 0.0
  %1369 = vmatprep.subr.mxu0 0.0
  %1370 = vmatpush1.msra.mxu0 0.0
  %1371 = vmatprep.subr.mxu0 0.0
  %1372 = vmatpush1.msra.mxu0 0.0
  %1373 = vmatprep.subr.mxu0 0.0
  %1374 = vmatpush1.msra.mxu0 0.0
  %1375 = vmatprep.subr.mxu0 0.0
  %1376 = vmatpush1.msra.mxu0 0.0
  %1377 = vmatprep.subr.mxu0 0.0
  %1378 = vmatpush1.msra.mxu0 0.0
  %1379 = vmatprep.subr.mxu0 0.0
  %1380 = vmatpush1.msra.mxu0 0.0
  %1381 = vmatprep.subr.mxu0 0.0
  %1382 = vmatpush1.msra.mxu0 0.0
  %1383 = vmatprep.subr.mxu0 0.0
  %1384 = vmatpush1.msra.mxu0 0.0
  %1385 = vmatprep.subr.mxu0 0.0
  %1386 = vmatpush1.msra.mxu0 %v725
  %1387 = vmatprep.subr.mxu0 0.0
  %1388 = vmatpush1.msra.mxu0 %v724
  %1389 = vmatprep.subr.mxu0 0.0
  %1390 = vmatpush1.msra.mxu0 %v723
  %1391 = vmatprep.subr.mxu0 0.0
  %1392 = vmatpush1.msra.mxu0 %v722
  %1393 = vmatprep.subr.mxu0 0.0
  %1394 = vmatpush2.msra.mxu0 0.0
  %1395 = vmatprep.subr.mxu0 0.0
  %1396 = vmatpush2.msra.mxu0 0.0
  %1397 = vmatprep.subr.mxu0 0.0
  %1398 = vmatpush2.msra.mxu0 0.0
  %1399 = vmatprep.subr.mxu0 0.0
  %1400 = vmatpush2.msra.mxu0 0.0
  %1401 = vmatprep.subr.mxu0 0.0
  %1402 = vmatpush2.msra.mxu0 0.0
  %1403 = vmatprep.subr.mxu0 0.0
  %1404 = vmatpush2.msra.mxu0 0.0
  %1405 = vmatprep.subr.mxu0 0.0
  %1406 = vmatpush2.msra.mxu0 0.0
  %1407 = vmatprep.subr.mxu0 0.0
  %1408 = vmatpush2.msra.mxu0 0.0
  %1409 = vmatprep.subr.mxu0 0.0
  %1410 = vmatpush2.msra.mxu0 0.0
  %1411 = vmatprep.subr.mxu0 0.0
  %1412 = vmatpush2.msra.mxu0 0.0
  %1413 = vmatprep.subr.mxu0 0.0
  %1414 = vmatpush2.msra.mxu0 0.0
  %1415 = vmatprep.subr.mxu0 0.0
  %1416 = vmatpush2.msra.mxu0 0.0
  %1417 = vmatprep.subr.mxu0 0.0
  %1418 = vmatpush2.msra.mxu0 0.0
  %1419 = vmatprep.subr.mxu0 0.0
  %1420 = vmatpush2.msra.mxu0 0.0
  %1421 = vmatprep.subr.mxu0 0.0
  %1422 = vmatpush2.msra.mxu0 0.0
  %1423 = vmatprep.subr.mxu0 0.0
  %1424 = vmatpush2.msra.mxu0 0.0
  %1425 = vmatprep.mubr.f32.mxu0 0.0
  %1426 = vmatmul.mubr.f32.gmra.mxu0 %v1359
  %v1427 = vpop.f32.mrf.mxu0
  %v1428 = vadd.f32 0.0, %v1427
  %v1429 = vpop.f32.mrf.mxu0
  %1430 = vdwg.mxu0
  %v1432 = vrot.slane %v1428, 4
  %v1434 = vadd.f32 %v721, %v1432
  %v1435 = vxor.u32 %v1434, 2147483648
  %v1436 = vmul.f32 %v1435, 1.442695
  %v1437 = vpow.pop %v1436
  %v1438 = vadd.f32 %v1437, 1.0
  %v1439 = vrcp.pop %v1438
  %v1440 = vmul.f32 1.0, %v1439
  %v1441 = vtanh.pop %v1434
  %v1443 = vrot.slane %v1348, 6
  %v1445 = vmul.f32 %v1440, %v1443
  %1447 = vrot.lane.b32.xlu0 %v1441, 32
  %v1448 = vpop.permute.xlu0 %1447
  %v1450 = vmul.f32 %v1440, %v1448
  %1452 = vrot.lane.b32.xlu0 %v1450, 32
  %v1453 = vpop.permute.xlu0 %1452
  %v1455 = vadd.f32 %v1445, %v1453
  %v1456 = vtanh.pop %v1455
  %1458 = vrot.lane.b32.xlu0 %v1456, 32
  %v1459 = vpop.permute.xlu0 %1458
  %v1461 = vmul.f32 %v1440, %v1459
  %v1463 = vrot.slane %v1461, 4
  %1464 = vrot.lane.b32.xlu0 %v1463, 64
  %v1465 = vpop.permute.xlu0 %1464
  %v1466 = vsel %vm726, %v1465, 0
  %1468 = vmatprep.subr.mxu0 0.0
  %1469 = vmatpush1.msra.mxu0 0.0
  %1470 = vmatprep.subr.mxu0 0.0
  %1471 = vmatpush1.msra.mxu0 0.0
  %1472 = vmatprep.subr.mxu0 0.0
  %1473 = vmatpush1.msra.mxu0 0.0
  %1474 = vmatprep.subr.mxu0 0.0
  %1475 = vmatpush1.msra.mxu0 0.0
  %1476 = vmatprep.subr.mxu0 0.0
  %1477 = vmatpush1.msra.mxu0 0.0
  %1478 = vmatprep.subr.mxu0 0.0
  %1479 = vmatpush1.msra.mxu0 0.0
  %1480 = vmatprep.subr.mxu0 0.0
  %1481 = vmatpush1.msra.mxu0 0.0
  %1482 = vmatprep.subr.mxu0 0.0
  %1483 = vmatpush1.msra.mxu0 0.0
  %1484 = vmatprep.subr.mxu0 0.0
  %1485 = vmatpush1.msra.mxu0 0.0
  %1486 = vmatprep.subr.mxu0 0.0
  %1487 = vmatpush1.msra.mxu0 0.0
  %1488 = vmatprep.subr.mxu0 0.0
  %1489 = vmatpush1.msra.mxu0 0.0
  %1490 = vmatprep.subr.mxu0 0.0
  %1491 = vmatpush1.msra.mxu0 0.0
  %1492 = vmatprep.subr.mxu0 0.0
  %1493 = vmatpush1.msra.mxu0 %v725
  %1494 = vmatprep.subr.mxu0 0.0
  %1495 = vmatpush1.msra.mxu0 %v724
  %1496 = vmatprep.subr.mxu0 0.0
  %1497 = vmatpush1.msra.mxu0 %v723
  %1498 = vmatprep.subr.mxu0 0.0
  %1499 = vmatpush1.msra.mxu0 %v722
  %1500 = vmatprep.subr.mxu0 0.0
  %1501 = vmatpush2.msra.mxu0 0.0
  %1502 = vmatprep.subr.mxu0 0.0
  %1503 = vmatpush2.msra.mxu0 0.0
  %1504 = vmatprep.subr.mxu0 0.0
  %1505 = vmatpush2.msra.mxu0 0.0
  %1506 = vmatprep.subr.mxu0 0.0
  %1507 = vmatpush2.msra.mxu0 0.0
  %1508 = vmatprep.subr.mxu0 0.0
  %1509 = vmatpush2.msra.mxu0 0.0
  %1510 = vmatprep.subr.mxu0 0.0
  %1511 = vmatpush2.msra.mxu0 0.0
  %1512 = vmatprep.subr.mxu0 0.0
  %1513 = vmatpush2.msra.mxu0 0.0
  %1514 = vmatprep.subr.mxu0 0.0
  %1515 = vmatpush2.msra.mxu0 0.0
  %1516 = vmatprep.subr.mxu0 0.0
  %1517 = vmatpush2.msra.mxu0 0.0
  %1518 = vmatprep.subr.mxu0 0.0
  %1519 = vmatpush2.msra.mxu0 0.0
  %1520 = vmatprep.subr.mxu0 0.0
  %1521 = vmatpush2.msra.mxu0 0.0
  %1522 = vmatprep.subr.mxu0 0.0
  %1523 = vmatpush2.msra.mxu0 0.0
  %1524 = vmatprep.subr.mxu0 0.0
  %1525 = vmatpush2.msra.mxu0 0.0
  %1526 = vmatprep.subr.mxu0 0.0
  %1527 = vmatpush2.msra.mxu0 0.0
  %1528 = vmatprep.subr.mxu0 0.0
  %1529 = vmatpush2.msra.mxu0 0.0
  %1530 = vmatprep.subr.mxu0 0.0
  %1531 = vmatpush2.msra.mxu0 0.0
  %1532 = vmatprep.mubr.f32.mxu0 0.0
  %1533 = vmatmul.mubr.f32.gmra.mxu0 %v1466
  %v1534 = vpop.f32.mrf.mxu0
  %v1535 = vadd.f32 0.0, %v1534
  %v1536 = vpop.f32.mrf.mxu0
  %1537 = vdwg.mxu0
  %v1539 = vrot.slane %v1535, 2
  %v1541 = vadd.f32 %v721, %v1539
  %v1542 = vxor.u32 %v1541, 2147483648
  %v1543 = vmul.f32 %v1542, 1.442695
  %v1544 = vpow.pop %v1543
  %v1545 = vadd.f32 %v1544, 1.0
  %v1546 = vrcp.pop %v1545
  %v1547 = vmul.f32 1.0, %v1546
  %v1548 = vtanh.pop %v1541
  %v1550 = vrot.slane %v1455, 6
  %v1552 = vmul.f32 %v1547, %v1550
  %1554 = vrot.lane.b32.xlu0 %v1548, 32
  %v1555 = vpop.permute.xlu0 %1554
  %v1557 = vmul.f32 %v1547, %v1555
  %1559 = vrot.lane.b32.xlu0 %v1557, 32
  %v1560 = vpop.permute.xlu0 %1559
  %v1562 = vadd.f32 %v1552, %v1560
  %v1563 = vtanh.pop %v1562
  %1565 = vrot.lane.b32.xlu0 %v1563, 32
  %v1566 = vpop.permute.xlu0 %1565
  %v1568 = vmul.f32 %v1547, %v1566
  %v1569 = vsel %vm695, %v824, %v930
  %v1570 = vsel %vm126, %v1569, %v1037
  %v1571 = vsel %vm702, %v1570, %v1144
  %v1572 = vsel %vm695, %v1248, %v1354
  %v1573 = vsel %vm126, %v1572, %v1461
  %v1574 = vsel %vm702, %v1573, %v1568
  %v1575 = vld [vmem:[%s8] sm:$0xff]
  %v1576 = vld [vmem:[%s8 + $0x8] sm:$0xff]
  %v1577 = vld [vmem:[%s8 + $0x10] sm:$0xff]
  %v1578 = vld [vmem:[%s8 + $0x18] sm:$0xff]
  %v1579 = vld [vmem:[%s10] sm:$0x1]
  %v1581 = vlaneseq
  %v1582 = vshrl.u32 %v1581, 7
  %v1583 = vsub.s32 0, %v1582
  %v1584 = vrot.slane %v1579, %v1583
  %1588 = vrot.lane.b32.xlu0 %v1571, 64
  %v1589 = vpop.permute.xlu0 %1588
  %1590 = vrot.lane.b32.xlu0 %v1574, 64
  %v1591 = vpop.permute.xlu0 %1590
  %v1592 = vsel %vm726, %v1589, 0
  %v1594 = vsel %vm726, %v1591, 0
  %1596 = vmatprep.subr.mxu0 0.0
  %1597 = vmatpush1.msra.mxu0 0.0
  %1598 = vmatprep.subr.mxu0 0.0
  %1599 = vmatpush1.msra.mxu0 0.0
  %1600 = vmatprep.subr.mxu0 0.0
  %1601 = vmatpush1.msra.mxu0 0.0
  %1602 = vmatprep.subr.mxu0 0.0
  %1603 = vmatpush1.msra.mxu0 0.0
  %1604 = vmatprep.subr.mxu0 0.0
  %1605 = vmatpush1.msra.mxu0 0.0
  %1606 = vmatprep.subr.mxu0 0.0
  %1607 = vmatpush1.msra.mxu0 0.0
  %1608 = vmatprep.subr.mxu0 0.0
  %1609 = vmatpush1.msra.mxu0 0.0
  %1610 = vmatprep.subr.mxu0 0.0
  %1611 = vmatpush1.msra.mxu0 0.0
  %1612 = vmatprep.subr.mxu0 0.0
  %1613 = vmatpush1.msra.mxu0 0.0
  %1614 = vmatprep.subr.mxu0 0.0
  %1615 = vmatpush1.msra.mxu0 0.0
  %1616 = vmatprep.subr.mxu0 0.0
  %1617 = vmatpush1.msra.mxu0 0.0
  %1618 = vmatprep.subr.mxu0 0.0
  %1619 = vmatpush1.msra.mxu0 0.0
  %1620 = vmatprep.subr.mxu0 0.0
  %1621 = vmatpush1.msra.mxu0 %v1578
  %1622 = vmatprep.subr.mxu0 0.0
  %1623 = vmatpush1.msra.mxu0 %v1577
  %1624 = vmatprep.subr.mxu0 0.0
  %1625 = vmatpush1.msra.mxu0 %v1576
  %1626 = vmatprep.subr.mxu0 0.0
  %1627 = vmatpush1.msra.mxu0 %v1575
  %1628 = vmatprep.subr.mxu0 0.0
  %1629 = vmatpush2.msra.mxu0 0.0
  %1630 = vmatprep.subr.mxu0 0.0
  %1631 = vmatpush2.msra.mxu0 0.0
  %1632 = vmatprep.subr.mxu0 0.0
  %1633 = vmatpush2.msra.mxu0 0.0
  %1634 = vmatprep.subr.mxu0 0.0
  %1635 = vmatpush2.msra.mxu0 0.0
  %1636 = vmatprep.subr.mxu0 0.0
  %1637 = vmatpush2.msra.mxu0 0.0
  %1638 = vmatprep.subr.mxu0 0.0
  %1639 = vmatpush2.msra.mxu0 0.0
  %1640 = vmatprep.subr.mxu0 0.0
  %1641 = vmatpush2.msra.mxu0 0.0
  %1642 = vmatprep.subr.mxu0 0.0
  %1643 = vmatpush2.msra.mxu0 0.0
  %1644 = vmatprep.subr.mxu0 0.0
  %1645 = vmatpush2.msra.mxu0 0.0
  %1646 = vmatprep.subr.mxu0 0.0
  %1647 = vmatpush2.msra.mxu0 0.0
  %1648 = vmatprep.subr.mxu0 0.0
  %1649 = vmatpush2.msra.mxu0 0.0
  %1650 = vmatprep.subr.mxu0 0.0
  %1651 = vmatpush2.msra.mxu0 0.0
  %1652 = vmatprep.subr.mxu0 0.0
  %1653 = vmatpush2.msra.mxu0 0.0
  %1654 = vmatprep.subr.mxu0 0.0
  %1655 = vmatpush2.msra.mxu0 0.0
  %1656 = vmatprep.subr.mxu0 0.0
  %1657 = vmatpush2.msra.mxu0 0.0
  %1658 = vmatprep.subr.mxu0 0.0
  %1659 = vmatpush2.msra.mxu0 0.0
  %1660 = vmatprep.mubr.f32.mxu0 0.0
  %1661 = vmatmul.mubr.f32.gmra.mxu0 %v1592
  %v1662 = vpop.f32.mrf.mxu0
  %v1663 = vadd.f32 %v1584, %v1662
  %v1664 = vpop.f32.mrf.mxu0
  %1665 = vmatprep.mubr.f32.mxu0 0.0
  %1666 = vmatmul.mubr.f32.gmra.mxu0 %v1594
  %v1667 = vpop.f32.mrf.mxu0
  %v1668 = vadd.f32 %v1584, %v1667
  %v1669 = vpop.f32.mrf.mxu0
  %1670 = vdwg.mxu0
  %v1671 = vld [vmem:[%s9] sm:$0xff]
  %v1672 = vld [vmem:[%s9 + $0x8] sm:$0xff]
  %v1673 = vld [vmem:[%s9 + $0x10] sm:$0xff]
  %v1674 = vld [vmem:[%s9 + $0x18] sm:$0xff]
  %1675 = vmatprep.subr.mxu0 0.0
  %1676 = vmatpush1.msra.mxu0 0.0
  %1677 = vmatprep.subr.mxu0 0.0
  %1678 = vmatpush1.msra.mxu0 0.0
  %1679 = vmatprep.subr.mxu0 0.0
  %1680 = vmatpush1.msra.mxu0 0.0
  %1681 = vmatprep.subr.mxu0 0.0
  %1682 = vmatpush1.msra.mxu0 0.0
  %1683 = vmatprep.subr.mxu0 0.0
  %1684 = vmatpush1.msra.mxu0 0.0
  %1685 = vmatprep.subr.mxu0 0.0
  %1686 = vmatpush1.msra.mxu0 0.0
  %1687 = vmatprep.subr.mxu0 0.0
  %1688 = vmatpush1.msra.mxu0 0.0
  %1689 = vmatprep.subr.mxu0 0.0
  %1690 = vmatpush1.msra.mxu0 0.0
  %1691 = vmatprep.subr.mxu0 0.0
  %1692 = vmatpush1.msra.mxu0 0.0
  %1693 = vmatprep.subr.mxu0 0.0
  %1694 = vmatpush1.msra.mxu0 0.0
  %1695 = vmatprep.subr.mxu0 0.0
  %1696 = vmatpush1.msra.mxu0 0.0
  %1697 = vmatprep.subr.mxu0 0.0
  %1698 = vmatpush1.msra.mxu0 0.0
  %1699 = vmatprep.subr.mxu0 0.0
  %1700 = vmatpush1.msra.mxu0 %v1674
  %1701 = vmatprep.subr.mxu0 0.0
  %1702 = vmatpush1.msra.mxu0 %v1673
  %1703 = vmatprep.subr.mxu0 0.0
  %1704 = vmatpush1.msra.mxu0 %v1672
  %1705 = vmatprep.subr.mxu0 0.0
  %1706 = vmatpush1.msra.mxu0 %v1671
  %1707 = vmatprep.subr.mxu0 0.0
  %1708 = vmatpush2.msra.mxu0 0.0
  %1709 = vmatprep.subr.mxu0 0.0
  %1710 = vmatpush2.msra.mxu0 0.0
  %1711 = vmatprep.subr.mxu0 0.0
  %1712 = vmatpush2.msra.mxu0 0.0
  %1713 = vmatprep.subr.mxu0 0.0
  %1714 = vmatpush2.msra.mxu0 0.0
  %1715 = vmatprep.subr.mxu0 0.0
  %1716 = vmatpush2.msra.mxu0 0.0
  %1717 = vmatprep.subr.mxu0 0.0
  %1718 = vmatpush2.msra.mxu0 0.0
  %1719 = vmatprep.subr.mxu0 0.0
  %1720 = vmatpush2.msra.mxu0 0.0
  %1721 = vmatprep.subr.mxu0 0.0
  %1722 = vmatpush2.msra.mxu0 0.0
  %1723 = vmatprep.subr.mxu0 0.0
  %1724 = vmatpush2.msra.mxu0 0.0
  %1725 = vmatprep.subr.mxu0 0.0
  %1726 = vmatpush2.msra.mxu0 0.0
  %1727 = vmatprep.subr.mxu0 0.0
  %1728 = vmatpush2.msra.mxu0 0.0
  %1729 = vmatprep.subr.mxu0 0.0
  %1730 = vmatpush2.msra.mxu0 0.0
  %1731 = vmatprep.subr.mxu0 0.0
  %1732 = vmatpush2.msra.mxu0 0.0
  %1733 = vmatprep.subr.mxu0 0.0
  %1734 = vmatpush2.msra.mxu0 0.0
  %1735 = vmatprep.subr.mxu0 0.0
  %1736 = vmatpush2.msra.mxu0 0.0
  %1737 = vmatprep.subr.mxu0 0.0
  %1738 = vmatpush2.msra.mxu0 0.0
  %1739 = vmatprep.mubr.f32.mxu0 0.0
  %1740 = vmatmul.mubr.f32.gmra.mxu0 %v728
  %v1741 = vpop.f32.mrf.mxu0
  %v1742 = vadd.f32 0.0, %v1741
  %v1743 = vpop.f32.mrf.mxu0
  %1744 = vdwg.mxu0
  %v1745 = vadd.f32 %v1663, %v1742
  %v1746 = vxor.u32 %v1745, 2147483648
  %v1747 = vmul.f32 %v1746, 1.442695
  %v1748 = vpow.pop %v1747
  %v1749 = vadd.f32 %v1748, 1.0
  %v1750 = vrcp.pop %v1749
  %v1751 = vmul.f32 1.0, %v1750
  %v1752 = vtanh.pop %v1745
  %v1753 = vmul.f32 %v1751, 0.0
  %1755 = vrot.lane.b32.xlu0 %v1752, 32
  %v1756 = vpop.permute.xlu0 %1755
  %v1758 = vmul.f32 %v1751, %v1756
  %1760 = vrot.lane.b32.xlu0 %v1758, 32
  %v1761 = vpop.permute.xlu0 %1760
  %v1763 = vadd.f32 %v1753, %v1761
  %v1764 = vtanh.pop %v1763
  %1766 = vrot.lane.b32.xlu0 %v1764, 32
  %v1767 = vpop.permute.xlu0 %1766
  %v1769 = vmul.f32 %v1751, %v1767
  %1771 = vrot.lane.b32.xlu0 %v1769, 64
  %v1772 = vpop.permute.xlu0 %1771
  %v1773 = vsel %vm726, %v1772, 0
  %1775 = vmatprep.subr.mxu0 0.0
  %1776 = vmatpush1.msra.mxu0 0.0
  %1777 = vmatprep.subr.mxu0 0.0
  %1778 = vmatpush1.msra.mxu0 0.0
  %1779 = vmatprep.subr.mxu0 0.0
  %1780 = vmatpush1.msra.mxu0 0.0
  %1781 = vmatprep.subr.mxu0 0.0
  %1782 = vmatpush1.msra.mxu0 0.0
  %1783 = vmatprep.subr.mxu0 0.0
  %1784 = vmatpush1.msra.mxu0 0.0
  %1785 = vmatprep.subr.mxu0 0.0
  %1786 = vmatpush1.msra.mxu0 0.0
  %1787 = vmatprep.subr.mxu0 0.0
  %1788 = vmatpush1.msra.mxu0 0.0
  %1789 = vmatprep.subr.mxu0 0.0
  %1790 = vmatpush1.msra.mxu0 0.0
  %1791 = vmatprep.subr.mxu0 0.0
  %1792 = vmatpush1.msra.mxu0 0.0
  %1793 = vmatprep.subr.mxu0 0.0
  %1794 = vmatpush1.msra.mxu0 0.0
  %1795 = vmatprep.subr.mxu0 0.0
  %1796 = vmatpush1.msra.mxu0 0.0
  %1797 = vmatprep.subr.mxu0 0.0
  %1798 = vmatpush1.msra.mxu0 0.0
  %1799 = vmatprep.subr.mxu0 0.0
  %1800 = vmatpush1.msra.mxu0 %v1674
  %1801 = vmatprep.subr.mxu0 0.0
  %1802 = vmatpush1.msra.mxu0 %v1673
  %1803 = vmatprep.subr.mxu0 0.0
  %1804 = vmatpush1.msra.mxu0 %v1672
  %1805 = vmatprep.subr.mxu0 0.0
  %1806 = vmatpush1.msra.mxu0 %v1671
  %1807 = vmatprep.subr.mxu0 0.0
  %1808 = vmatpush2.msra.mxu0 0.0
  %1809 = vmatprep.subr.mxu0 0.0
  %1810 = vmatpush2.msra.mxu0 0.0
  %1811 = vmatprep.subr.mxu0 0.0
  %1812 = vmatpush2.msra.mxu0 0.0
  %1813 = vmatprep.subr.mxu0 0.0
  %1814 = vmatpush2.msra.mxu0 0.0
  %1815 = vmatprep.subr.mxu0 0.0
  %1816 = vmatpush2.msra.mxu0 0.0
  %1817 = vmatprep.subr.mxu0 0.0
  %1818 = vmatpush2.msra.mxu0 0.0
  %1819 = vmatprep.subr.mxu0 0.0
  %1820 = vmatpush2.msra.mxu0 0.0
  %1821 = vmatprep.subr.mxu0 0.0
  %1822 = vmatpush2.msra.mxu0 0.0
  %1823 = vmatprep.subr.mxu0 0.0
  %1824 = vmatpush2.msra.mxu0 0.0
  %1825 = vmatprep.subr.mxu0 0.0
  %1826 = vmatpush2.msra.mxu0 0.0
  %1827 = vmatprep.subr.mxu0 0.0
  %1828 = vmatpush2.msra.mxu0 0.0
  %1829 = vmatprep.subr.mxu0 0.0
  %1830 = vmatpush2.msra.mxu0 0.0
  %1831 = vmatprep.subr.mxu0 0.0
  %1832 = vmatpush2.msra.mxu0 0.0
  %1833 = vmatprep.subr.mxu0 0.0
  %1834 = vmatpush2.msra.mxu0 0.0
  %1835 = vmatprep.subr.mxu0 0.0
  %1836 = vmatpush2.msra.mxu0 0.0
  %1837 = vmatprep.subr.mxu0 0.0
  %1838 = vmatpush2.msra.mxu0 0.0
  %1839 = vmatprep.mubr.f32.mxu0 0.0
  %1840 = vmatmul.mubr.f32.gmra.mxu0 %v1773
  %v1841 = vpop.f32.mrf.mxu0
  %v1842 = vadd.f32 0.0, %v1841
  %v1843 = vpop.f32.mrf.mxu0
  %1844 = vdwg.mxu0
  %v1846 = vrot.slane %v1842, 6
  %v1848 = vadd.f32 %v1663, %v1846
  %v1849 = vxor.u32 %v1848, 2147483648
  %v1850 = vmul.f32 %v1849, 1.442695
  %v1851 = vpow.pop %v1850
  %v1852 = vadd.f32 %v1851, 1.0
  %v1853 = vrcp.pop %v1852
  %v1854 = vmul.f32 1.0, %v1853
  %v1855 = vtanh.pop %v1848
  %v1857 = vrot.slane %v1763, 6
  %v1859 = vmul.f32 %v1854, %v1857
  %1861 = vrot.lane.b32.xlu0 %v1855, 32
  %v1862 = vpop.permute.xlu0 %1861
  %v1864 = vmul.f32 %v1854, %v1862
  %1866 = vrot.lane.b32.xlu0 %v1864, 32
  %v1867 = vpop.permute.xlu0 %1866
  %v1869 = vadd.f32 %v1859, %v1867
  %v1870 = vtanh.pop %v1869
  %1872 = vrot.lane.b32.xlu0 %v1870, 32
  %v1873 = vpop.permute.xlu0 %1872
  %v1875 = vmul.f32 %v1854, %v1873
  %v1877 = vrot.slane %v1875, 2
  %1878 = vrot.lane.b32.xlu0 %v1877, 64
  %v1879 = vpop.permute.xlu0 %1878
  %v1880 = vsel %vm726, %v1879, 0
  %1882 = vmatprep.subr.mxu0 0.0
  %1883 = vmatpush1.msra.mxu0 0.0
  %1884 = vmatprep.subr.mxu0 0.0
  %1885 = vmatpush1.msra.mxu0 0.0
  %1886 = vmatprep.subr.mxu0 0.0
  %1887 = vmatpush1.msra.mxu0 0.0
  %1888 = vmatprep.subr.mxu0 0.0
  %1889 = vmatpush1.msra.mxu0 0.0
  %1890 = vmatprep.subr.mxu0 0.0
  %1891 = vmatpush1.msra.mxu0 0.0
  %1892 = vmatprep.subr.mxu0 0.0
  %1893 = vmatpush1.msra.mxu0 0.0
  %1894 = vmatprep.subr.mxu0 0.0
  %1895 = vmatpush1.msra.mxu0 0.0
  %1896 = vmatprep.subr.mxu0 0.0
  %1897 = vmatpush1.msra.mxu0 0.0
  %1898 = vmatprep.subr.mxu0 0.0
  %1899 = vmatpush1.msra.mxu0 0.0
  %1900 = vmatprep.subr.mxu0 0.0
  %1901 = vmatpush1.msra.mxu0 0.0
  %1902 = vmatprep.subr.mxu0 0.0
  %1903 = vmatpush1.msra.mxu0 0.0
  %1904 = vmatprep.subr.mxu0 0.0
  %1905 = vmatpush1.msra.mxu0 0.0
  %1906 = vmatprep.subr.mxu0 0.0
  %1907 = vmatpush1.msra.mxu0 %v1674
  %1908 = vmatprep.subr.mxu0 0.0
  %1909 = vmatpush1.msra.mxu0 %v1673
  %1910 = vmatprep.subr.mxu0 0.0
  %1911 = vmatpush1.msra.mxu0 %v1672
  %1912 = vmatprep.subr.mxu0 0.0
  %1913 = vmatpush1.msra.mxu0 %v1671
  %1914 = vmatprep.subr.mxu0 0.0
  %1915 = vmatpush2.msra.mxu0 0.0
  %1916 = vmatprep.subr.mxu0 0.0
  %1917 = vmatpush2.msra.mxu0 0.0
  %1918 = vmatprep.subr.mxu0 0.0
  %1919 = vmatpush2.msra.mxu0 0.0
  %1920 = vmatprep.subr.mxu0 0.0
  %1921 = vmatpush2.msra.mxu0 0.0
  %1922 = vmatprep.subr.mxu0 0.0
  %1923 = vmatpush2.msra.mxu0 0.0
  %1924 = vmatprep.subr.mxu0 0.0
  %1925 = vmatpush2.msra.mxu0 0.0
  %1926 = vmatprep.subr.mxu0 0.0
  %1927 = vmatpush2.msra.mxu0 0.0
  %1928 = vmatprep.subr.mxu0 0.0
  %1929 = vmatpush2.msra.mxu0 0.0
  %1930 = vmatprep.subr.mxu0 0.0
  %1931 = vmatpush2.msra.mxu0 0.0
  %1932 = vmatprep.subr.mxu0 0.0
  %1933 = vmatpush2.msra.mxu0 0.0
  %1934 = vmatprep.subr.mxu0 0.0
  %1935 = vmatpush2.msra.mxu0 0.0
  %1936 = vmatprep.subr.mxu0 0.0
  %1937 = vmatpush2.msra.mxu0 0.0
  %1938 = vmatprep.subr.mxu0 0.0
  %1939 = vmatpush2.msra.mxu0 0.0
  %1940 = vmatprep.subr.mxu0 0.0
  %1941 = vmatpush2.msra.mxu0 0.0
  %1942 = vmatprep.subr.mxu0 0.0
  %1943 = vmatpush2.msra.mxu0 0.0
  %1944 = vmatprep.subr.mxu0 0.0
  %1945 = vmatpush2.msra.mxu0 0.0
  %1946 = vmatprep.mubr.f32.mxu0 0.0
  %1947 = vmatmul.mubr.f32.gmra.mxu0 %v1880
  %v1948 = vpop.f32.mrf.mxu0
  %v1949 = vadd.f32 0.0, %v1948
  %v1950 = vpop.f32.mrf.mxu0
  %1951 = vdwg.mxu0
  %v1953 = vrot.slane %v1949, 4
  %v1955 = vadd.f32 %v1663, %v1953
  %v1956 = vxor.u32 %v1955, 2147483648
  %v1957 = vmul.f32 %v1956, 1.442695
  %v1958 = vpow.pop %v1957
  %v1959 = vadd.f32 %v1958, 1.0
  %v1960 = vrcp.pop %v1959
  %v1961 = vmul.f32 1.0, %v1960
  %v1962 = vtanh.pop %v1955
  %v1964 = vrot.slane %v1869, 6
  %v1966 = vmul.f32 %v1961, %v1964
  %1968 = vrot.lane.b32.xlu0 %v1962, 32
  %v1969 = vpop.permute.xlu0 %1968
  %v1971 = vmul.f32 %v1961, %v1969
  %1973 = vrot.lane.b32.xlu0 %v1971, 32
  %v1974 = vpop.permute.xlu0 %1973
  %v1976 = vadd.f32 %v1966, %v1974
  %v1977 = vtanh.pop %v1976
  %1979 = vrot.lane.b32.xlu0 %v1977, 32
  %v1980 = vpop.permute.xlu0 %1979
  %v1982 = vmul.f32 %v1961, %v1980
  %v1984 = vrot.slane %v1982, 4
  %1985 = vrot.lane.b32.xlu0 %v1984, 64
  %v1986 = vpop.permute.xlu0 %1985
  %v1987 = vsel %vm726, %v1986, 0
  %1989 = vmatprep.subr.mxu0 0.0
  %1990 = vmatpush1.msra.mxu0 0.0
  %1991 = vmatprep.subr.mxu0 0.0
  %1992 = vmatpush1.msra.mxu0 0.0
  %1993 = vmatprep.subr.mxu0 0.0
  %1994 = vmatpush1.msra.mxu0 0.0
  %1995 = vmatprep.subr.mxu0 0.0
  %1996 = vmatpush1.msra.mxu0 0.0
  %1997 = vmatprep.subr.mxu0 0.0
  %1998 = vmatpush1.msra.mxu0 0.0
  %1999 = vmatprep.subr.mxu0 0.0
  %2000 = vmatpush1.msra.mxu0 0.0
  %2001 = vmatprep.subr.mxu0 0.0
  %2002 = vmatpush1.msra.mxu0 0.0
  %2003 = vmatprep.subr.mxu0 0.0
  %2004 = vmatpush1.msra.mxu0 0.0
  %2005 = vmatprep.subr.mxu0 0.0
  %2006 = vmatpush1.msra.mxu0 0.0
  %2007 = vmatprep.subr.mxu0 0.0
  %2008 = vmatpush1.msra.mxu0 0.0
  %2009 = vmatprep.subr.mxu0 0.0
  %2010 = vmatpush1.msra.mxu0 0.0
  %2011 = vmatprep.subr.mxu0 0.0
  %2012 = vmatpush1.msra.mxu0 0.0
  %2013 = vmatprep.subr.mxu0 0.0
  %2014 = vmatpush1.msra.mxu0 %v1674
  %2015 = vmatprep.subr.mxu0 0.0
  %2016 = vmatpush1.msra.mxu0 %v1673
  %2017 = vmatprep.subr.mxu0 0.0
  %2018 = vmatpush1.msra.mxu0 %v1672
  %2019 = vmatprep.subr.mxu0 0.0
  %2020 = vmatpush1.msra.mxu0 %v1671
  %2021 = vmatprep.subr.mxu0 0.0
  %2022 = vmatpush2.msra.mxu0 0.0
  %2023 = vmatprep.subr.mxu0 0.0
  %2024 = vmatpush2.msra.mxu0 0.0
  %2025 = vmatprep.subr.mxu0 0.0
  %2026 = vmatpush2.msra.mxu0 0.0
  %2027 = vmatprep.subr.mxu0 0.0
  %2028 = vmatpush2.msra.mxu0 0.0
  %2029 = vmatprep.subr.mxu0 0.0
  %2030 = vmatpush2.msra.mxu0 0.0
  %2031 = vmatprep.subr.mxu0 0.0
  %2032 = vmatpush2.msra.mxu0 0.0
  %2033 = vmatprep.subr.mxu0 0.0
  %2034 = vmatpush2.msra.mxu0 0.0
  %2035 = vmatprep.subr.mxu0 0.0
  %2036 = vmatpush2.msra.mxu0 0.0
  %2037 = vmatprep.subr.mxu0 0.0
  %2038 = vmatpush2.msra.mxu0 0.0
  %2039 = vmatprep.subr.mxu0 0.0
  %2040 = vmatpush2.msra.mxu0 0.0
  %2041 = vmatprep.subr.mxu0 0.0
  %2042 = vmatpush2.msra.mxu0 0.0
  %2043 = vmatprep.subr.mxu0 0.0
  %2044 = vmatpush2.msra.mxu0 0.0
  %2045 = vmatprep.subr.mxu0 0.0
  %2046 = vmatpush2.msra.mxu0 0.0
  %2047 = vmatprep.subr.mxu0 0.0
  %2048 = vmatpush2.msra.mxu0 0.0
  %2049 = vmatprep.subr.mxu0 0.0
  %2050 = vmatpush2.msra.mxu0 0.0
  %2051 = vmatprep.subr.mxu0 0.0
  %2052 = vmatpush2.msra.mxu0 0.0
  %2053 = vmatprep.mubr.f32.mxu0 0.0
  %2054 = vmatmul.mubr.f32.gmra.mxu0 %v1987
  %v2055 = vpop.f32.mrf.mxu0
  %v2056 = vadd.f32 0.0, %v2055
  %v2057 = vpop.f32.mrf.mxu0
  %2058 = vdwg.mxu0
  %v2060 = vrot.slane %v2056, 2
  %v2062 = vadd.f32 %v1663, %v2060
  %v2063 = vxor.u32 %v2062, 2147483648
  %v2064 = vmul.f32 %v2063, 1.442695
  %v2065 = vpow.pop %v2064
  %v2066 = vadd.f32 %v2065, 1.0
  %v2067 = vrcp.pop %v2066
  %v2068 = vmul.f32 1.0, %v2067
  %v2069 = vtanh.pop %v2062
  %v2071 = vrot.slane %v1976, 6
  %v2073 = vmul.f32 %v2068, %v2071
  %2075 = vrot.lane.b32.xlu0 %v2069, 32
  %v2076 = vpop.permute.xlu0 %2075
  %v2078 = vmul.f32 %v2068, %v2076
  %2080 = vrot.lane.b32.xlu0 %v2078, 32
  %v2081 = vpop.permute.xlu0 %2080
  %v2083 = vadd.f32 %v2073, %v2081
  %v2084 = vtanh.pop %v2083
  %2086 = vrot.lane.b32.xlu0 %v2084, 32
  %v2087 = vpop.permute.xlu0 %2086
  %v2089 = vmul.f32 %v2068, %v2087
  %v2091 = vrot.slane %v2089, 6
  %2092 = vrot.lane.b32.xlu0 %v2091, 64
  %v2093 = vpop.permute.xlu0 %2092
  %v2094 = vsel %vm726, %v2093, 0
  %2096 = vmatprep.subr.mxu0 0.0
  %2097 = vmatpush1.msra.mxu0 0.0
  %2098 = vmatprep.subr.mxu0 0.0
  %2099 = vmatpush1.msra.mxu0 0.0
  %2100 = vmatprep.subr.mxu0 0.0
  %2101 = vmatpush1.msra.mxu0 0.0
  %2102 = vmatprep.subr.mxu0 0.0
  %2103 = vmatpush1.msra.mxu0 0.0
  %2104 = vmatprep.subr.mxu0 0.0
  %2105 = vmatpush1.msra.mxu0 0.0
  %2106 = vmatprep.subr.mxu0 0.0
  %2107 = vmatpush1.msra.mxu0 0.0
  %2108 = vmatprep.subr.mxu0 0.0
  %2109 = vmatpush1.msra.mxu0 0.0
  %2110 = vmatprep.subr.mxu0 0.0
  %2111 = vmatpush1.msra.mxu0 0.0
  %2112 = vmatprep.subr.mxu0 0.0
  %2113 = vmatpush1.msra.mxu0 0.0
  %2114 = vmatprep.subr.mxu0 0.0
  %2115 = vmatpush1.msra.mxu0 0.0
  %2116 = vmatprep.subr.mxu0 0.0
  %2117 = vmatpush1.msra.mxu0 0.0
  %2118 = vmatprep.subr.mxu0 0.0
  %2119 = vmatpush1.msra.mxu0 0.0
  %2120 = vmatprep.subr.mxu0 0.0
  %2121 = vmatpush1.msra.mxu0 %v1674
  %2122 = vmatprep.subr.mxu0 0.0
  %2123 = vmatpush1.msra.mxu0 %v1673
  %2124 = vmatprep.subr.mxu0 0.0
  %2125 = vmatpush1.msra.mxu0 %v1672
  %2126 = vmatprep.subr.mxu0 0.0
  %2127 = vmatpush1.msra.mxu0 %v1671
  %2128 = vmatprep.subr.mxu0 0.0
  %2129 = vmatpush2.msra.mxu0 0.0
  %2130 = vmatprep.subr.mxu0 0.0
  %2131 = vmatpush2.msra.mxu0 0.0
  %2132 = vmatprep.subr.mxu0 0.0
  %2133 = vmatpush2.msra.mxu0 0.0
  %2134 = vmatprep.subr.mxu0 0.0
  %2135 = vmatpush2.msra.mxu0 0.0
  %2136 = vmatprep.subr.mxu0 0.0
  %2137 = vmatpush2.msra.mxu0 0.0
  %2138 = vmatprep.subr.mxu0 0.0
  %2139 = vmatpush2.msra.mxu0 0.0
  %2140 = vmatprep.subr.mxu0 0.0
  %2141 = vmatpush2.msra.mxu0 0.0
  %2142 = vmatprep.subr.mxu0 0.0
  %2143 = vmatpush2.msra.mxu0 0.0
  %2144 = vmatprep.subr.mxu0 0.0
  %2145 = vmatpush2.msra.mxu0 0.0
  %2146 = vmatprep.subr.mxu0 0.0
  %2147 = vmatpush2.msra.mxu0 0.0
  %2148 = vmatprep.subr.mxu0 0.0
  %2149 = vmatpush2.msra.mxu0 0.0
  %2150 = vmatprep.subr.mxu0 0.0
  %2151 = vmatpush2.msra.mxu0 0.0
  %2152 = vmatprep.subr.mxu0 0.0
  %2153 = vmatpush2.msra.mxu0 0.0
  %2154 = vmatprep.subr.mxu0 0.0
  %2155 = vmatpush2.msra.mxu0 0.0
  %2156 = vmatprep.subr.mxu0 0.0
  %2157 = vmatpush2.msra.mxu0 0.0
  %2158 = vmatprep.subr.mxu0 0.0
  %2159 = vmatpush2.msra.mxu0 0.0
  %2160 = vmatprep.mubr.f32.mxu0 0.0
  %2161 = vmatmul.mubr.f32.gmra.mxu0 %v2094
  %v2162 = vpop.f32.mrf.mxu0
  %v2163 = vadd.f32 0.0, %v2162
  %v2164 = vpop.f32.mrf.mxu0
  %2165 = vdwg.mxu0
  %v2166 = vadd.f32 %v1668, %v2163
  %v2167 = vxor.u32 %v2166, 2147483648
  %v2168 = vmul.f32 %v2167, 1.442695
  %v2169 = vpow.pop %v2168
  %v2170 = vadd.f32 %v2169, 1.0
  %v2171 = vrcp.pop %v2170
  %v2172 = vmul.f32 1.0, %v2171
  %v2173 = vtanh.pop %v2166
  %v2175 = vrot.slane %v2083, 6
  %v2177 = vmul.f32 %v2172, %v2175
  %2179 = vrot.lane.b32.xlu0 %v2173, 32
  %v2180 = vpop.permute.xlu0 %2179
  %v2182 = vmul.f32 %v2172, %v2180
  %2184 = vrot.lane.b32.xlu0 %v2182, 32
  %v2185 = vpop.permute.xlu0 %2184
  %v2187 = vadd.f32 %v2177, %v2185
  %v2188 = vtanh.pop %v2187
  %2190 = vrot.lane.b32.xlu0 %v2188, 32
  %v2191 = vpop.permute.xlu0 %2190
  %v2193 = vmul.f32 %v2172, %v2191
  %2195 = vrot.lane.b32.xlu0 %v2193, 64
  %v2196 = vpop.permute.xlu0 %2195
  %v2197 = vsel %vm726, %v2196, 0
  %2199 = vmatprep.subr.mxu0 0.0
  %2200 = vmatpush1.msra.mxu0 0.0
  %2201 = vmatprep.subr.mxu0 0.0
  %2202 = vmatpush1.msra.mxu0 0.0
  %2203 = vmatprep.subr.mxu0 0.0
  %2204 = vmatpush1.msra.mxu0 0.0
  %2205 = vmatprep.subr.mxu0 0.0
  %2206 = vmatpush1.msra.mxu0 0.0
  %2207 = vmatprep.subr.mxu0 0.0
  %2208 = vmatpush1.msra.mxu0 0.0
  %2209 = vmatprep.subr.mxu0 0.0
  %2210 = vmatpush1.msra.mxu0 0.0
  %2211 = vmatprep.subr.mxu0 0.0
  %2212 = vmatpush1.msra.mxu0 0.0
  %2213 = vmatprep.subr.mxu0 0.0
  %2214 = vmatpush1.msra.mxu0 0.0
  %2215 = vmatprep.subr.mxu0 0.0
  %2216 = vmatpush1.msra.mxu0 0.0
  %2217 = vmatprep.subr.mxu0 0.0
  %2218 = vmatpush1.msra.mxu0 0.0
  %2219 = vmatprep.subr.mxu0 0.0
  %2220 = vmatpush1.msra.mxu0 0.0
  %2221 = vmatprep.subr.mxu0 0.0
  %2222 = vmatpush1.msra.mxu0 0.0
  %2223 = vmatprep.subr.mxu0 0.0
  %2224 = vmatpush1.msra.mxu0 %v1674
  %2225 = vmatprep.subr.mxu0 0.0
  %2226 = vmatpush1.msra.mxu0 %v1673
  %2227 = vmatprep.subr.mxu0 0.0
  %2228 = vmatpush1.msra.mxu0 %v1672
  %2229 = vmatprep.subr.mxu0 0.0
  %2230 = vmatpush1.msra.mxu0 %v1671
  %2231 = vmatprep.subr.mxu0 0.0
  %2232 = vmatpush2.msra.mxu0 0.0
  %2233 = vmatprep.subr.mxu0 0.0
  %2234 = vmatpush2.msra.mxu0 0.0
  %2235 = vmatprep.subr.mxu0 0.0
  %2236 = vmatpush2.msra.mxu0 0.0
  %2237 = vmatprep.subr.mxu0 0.0
  %2238 = vmatpush2.msra.mxu0 0.0
  %2239 = vmatprep.subr.mxu0 0.0
  %2240 = vmatpush2.msra.mxu0 0.0
  %2241 = vmatprep.subr.mxu0 0.0
  %2242 = vmatpush2.msra.mxu0 0.0
  %2243 = vmatprep.subr.mxu0 0.0
  %2244 = vmatpush2.msra.mxu0 0.0
  %2245 = vmatprep.subr.mxu0 0.0
  %2246 = vmatpush2.msra.mxu0 0.0
  %2247 = vmatprep.subr.mxu0 0.0
  %2248 = vmatpush2.msra.mxu0 0.0
  %2249 = vmatprep.subr.mxu0 0.0
  %2250 = vmatpush2.msra.mxu0 0.0
  %2251 = vmatprep.subr.mxu0 0.0
  %2252 = vmatpush2.msra.mxu0 0.0
  %2253 = vmatprep.subr.mxu0 0.0
  %2254 = vmatpush2.msra.mxu0 0.0
  %2255 = vmatprep.subr.mxu0 0.0
  %2256 = vmatpush2.msra.mxu0 0.0
  %2257 = vmatprep.subr.mxu0 0.0
  %2258 = vmatpush2.msra.mxu0 0.0
  %2259 = vmatprep.subr.mxu0 0.0
  %2260 = vmatpush2.msra.mxu0 0.0
  %2261 = vmatprep.subr.mxu0 0.0
  %2262 = vmatpush2.msra.mxu0 0.0
  %2263 = vmatprep.mubr.f32.mxu0 0.0
  %2264 = vmatmul.mubr.f32.gmra.mxu0 %v2197
  %v2265 = vpop.f32.mrf.mxu0
  %v2266 = vadd.f32 0.0, %v2265
  %v2267 = vpop.f32.mrf.mxu0
  %2268 = vdwg.mxu0
  %v2270 = vrot.slane %v2266, 6
  %v2272 = vadd.f32 %v1668, %v2270
  %v2273 = vxor.u32 %v2272, 2147483648
  %v2274 = vmul.f32 %v2273, 1.442695
  %v2275 = vpow.pop %v2274
  %v2276 = vadd.f32 %v2275, 1.0
  %v2277 = vrcp.pop %v2276
  %v2278 = vmul.f32 1.0, %v2277
  %v2279 = vtanh.pop %v2272
  %v2281 = vrot.slane %v2187, 6
  %v2283 = vmul.f32 %v2278, %v2281
  %2285 = vrot.lane.b32.xlu0 %v2279, 32
  %v2286 = vpop.permute.xlu0 %2285
  %v2288 = vmul.f32 %v2278, %v2286
  %2290 = vrot.lane.b32.xlu0 %v2288, 32
  %v2291 = vpop.permute.xlu0 %2290
  %v2293 = vadd.f32 %v2283, %v2291
  %v2294 = vtanh.pop %v2293
  %2296 = vrot.lane.b32.xlu0 %v2294, 32
  %v2297 = vpop.permute.xlu0 %2296
  %v2299 = vmul.f32 %v2278, %v2297
  %v2301 = vrot.slane %v2299, 2
  %2302 = vrot.lane.b32.xlu0 %v2301, 64
  %v2303 = vpop.permute.xlu0 %2302
  %v2304 = vsel %vm726, %v2303, 0
  %2306 = vmatprep.subr.mxu0 0.0
  %2307 = vmatpush1.msra.mxu0 0.0
  %2308 = vmatprep.subr.mxu0 0.0
  %2309 = vmatpush1.msra.mxu0 0.0
  %2310 = vmatprep.subr.mxu0 0.0
  %2311 = vmatpush1.msra.mxu0 0.0
  %2312 = vmatprep.subr.mxu0 0.0
  %2313 = vmatpush1.msra.mxu0 0.0
  %2314 = vmatprep.subr.mxu0 0.0
  %2315 = vmatpush1.msra.mxu0 0.0
  %2316 = vmatprep.subr.mxu0 0.0
  %2317 = vmatpush1.msra.mxu0 0.0
  %2318 = vmatprep.subr.mxu0 0.0
  %2319 = vmatpush1.msra.mxu0 0.0
  %2320 = vmatprep.subr.mxu0 0.0
  %2321 = vmatpush1.msra.mxu0 0.0
  %2322 = vmatprep.subr.mxu0 0.0
  %2323 = vmatpush1.msra.mxu0 0.0
  %2324 = vmatprep.subr.mxu0 0.0
  %2325 = vmatpush1.msra.mxu0 0.0
  %2326 = vmatprep.subr.mxu0 0.0
  %2327 = vmatpush1.msra.mxu0 0.0
  %2328 = vmatprep.subr.mxu0 0.0
  %2329 = vmatpush1.msra.mxu0 0.0
  %2330 = vmatprep.subr.mxu0 0.0
  %2331 = vmatpush1.msra.mxu0 %v1674
  %2332 = vmatprep.subr.mxu0 0.0
  %2333 = vmatpush1.msra.mxu0 %v1673
  %2334 = vmatprep.subr.mxu0 0.0
  %2335 = vmatpush1.msra.mxu0 %v1672
  %2336 = vmatprep.subr.mxu0 0.0
  %2337 = vmatpush1.msra.mxu0 %v1671
  %2338 = vmatprep.subr.mxu0 0.0
  %2339 = vmatpush2.msra.mxu0 0.0
  %2340 = vmatprep.subr.mxu0 0.0
  %2341 = vmatpush2.msra.mxu0 0.0
  %2342 = vmatprep.subr.mxu0 0.0
  %2343 = vmatpush2.msra.mxu0 0.0
  %2344 = vmatprep.subr.mxu0 0.0
  %2345 = vmatpush2.msra.mxu0 0.0
  %2346 = vmatprep.subr.mxu0 0.0
  %2347 = vmatpush2.msra.mxu0 0.0
  %2348 = vmatprep.subr.mxu0 0.0
  %2349 = vmatpush2.msra.mxu0 0.0
  %2350 = vmatprep.subr.mxu0 0.0
  %2351 = vmatpush2.msra.mxu0 0.0
  %2352 = vmatprep.subr.mxu0 0.0
  %2353 = vmatpush2.msra.mxu0 0.0
  %2354 = vmatprep.subr.mxu0 0.0
  %2355 = vmatpush2.msra.mxu0 0.0
  %2356 = vmatprep.subr.mxu0 0.0
  %2357 = vmatpush2.msra.mxu0 0.0
  %2358 = vmatprep.subr.mxu0 0.0
  %2359 = vmatpush2.msra.mxu0 0.0
  %2360 = vmatprep.subr.mxu0 0.0
  %2361 = vmatpush2.msra.mxu0 0.0
  %2362 = vmatprep.subr.mxu0 0.0
  %2363 = vmatpush2.msra.mxu0 0.0
  %2364 = vmatprep.subr.mxu0 0.0
  %2365 = vmatpush2.msra.mxu0 0.0
  %2366 = vmatprep.subr.mxu0 0.0
  %2367 = vmatpush2.msra.mxu0 0.0
  %2368 = vmatprep.subr.mxu0 0.0
  %2369 = vmatpush2.msra.mxu0 0.0
  %2370 = vmatprep.mubr.f32.mxu0 0.0
  %2371 = vmatmul.mubr.f32.gmra.mxu0 %v2304
  %v2372 = vpop.f32.mrf.mxu0
  %v2373 = vadd.f32 0.0, %v2372
  %v2374 = vpop.f32.mrf.mxu0
  %2375 = vdwg.mxu0
  %v2377 = vrot.slane %v2373, 4
  %v2379 = vadd.f32 %v1668, %v2377
  %v2380 = vxor.u32 %v2379, 2147483648
  %v2381 = vmul.f32 %v2380, 1.442695
  %v2382 = vpow.pop %v2381
  %v2383 = vadd.f32 %v2382, 1.0
  %v2384 = vrcp.pop %v2383
  %v2385 = vmul.f32 1.0, %v2384
  %v2386 = vtanh.pop %v2379
  %v2388 = vrot.slane %v2293, 6
  %v2390 = vmul.f32 %v2385, %v2388
  %2392 = vrot.lane.b32.xlu0 %v2386, 32
  %v2393 = vpop.permute.xlu0 %2392
  %v2395 = vmul.f32 %v2385, %v2393
  %2397 = vrot.lane.b32.xlu0 %v2395, 32
  %v2398 = vpop.permute.xlu0 %2397
  %v2400 = vadd.f32 %v2390, %v2398
  %v2401 = vtanh.pop %v2400
  %2403 = vrot.lane.b32.xlu0 %v2401, 32
  %v2404 = vpop.permute.xlu0 %2403
  %v2406 = vmul.f32 %v2385, %v2404
  %v2408 = vrot.slane %v2406, 4
  %2409 = vrot.lane.b32.xlu0 %v2408, 64
  %v2410 = vpop.permute.xlu0 %2409
  %v2411 = vsel %vm726, %v2410, 0
  %2413 = vmatprep.subr.mxu0 0.0
  %2414 = vmatpush1.msra.mxu0 0.0
  %2415 = vmatprep.subr.mxu0 0.0
  %2416 = vmatpush1.msra.mxu0 0.0
  %2417 = vmatprep.subr.mxu0 0.0
  %2418 = vmatpush1.msra.mxu0 0.0
  %2419 = vmatprep.subr.mxu0 0.0
  %2420 = vmatpush1.msra.mxu0 0.0
  %2421 = vmatprep.subr.mxu0 0.0
  %2422 = vmatpush1.msra.mxu0 0.0
  %2423 = vmatprep.subr.mxu0 0.0
  %2424 = vmatpush1.msra.mxu0 0.0
  %2425 = vmatprep.subr.mxu0 0.0
  %2426 = vmatpush1.msra.mxu0 0.0
  %2427 = vmatprep.subr.mxu0 0.0
  %2428 = vmatpush1.msra.mxu0 0.0
  %2429 = vmatprep.subr.mxu0 0.0
  %2430 = vmatpush1.msra.mxu0 0.0
  %2431 = vmatprep.subr.mxu0 0.0
  %2432 = vmatpush1.msra.mxu0 0.0
  %2433 = vmatprep.subr.mxu0 0.0
  %2434 = vmatpush1.msra.mxu0 0.0
  %2435 = vmatprep.subr.mxu0 0.0
  %2436 = vmatpush1.msra.mxu0 0.0
  %2437 = vmatprep.subr.mxu0 0.0
  %2438 = vmatpush1.msra.mxu0 %v1674
  %2439 = vmatprep.subr.mxu0 0.0
  %2440 = vmatpush1.msra.mxu0 %v1673
  %2441 = vmatprep.subr.mxu0 0.0
  %2442 = vmatpush1.msra.mxu0 %v1672
  %2443 = vmatprep.subr.mxu0 0.0
  %2444 = vmatpush1.msra.mxu0 %v1671
  %2445 = vmatprep.subr.mxu0 0.0
  %2446 = vmatpush2.msra.mxu0 0.0
  %2447 = vmatprep.subr.mxu0 0.0
  %2448 = vmatpush2.msra.mxu0 0.0
  %2449 = vmatprep.subr.mxu0 0.0
  %2450 = vmatpush2.msra.mxu0 0.0
  %2451 = vmatprep.subr.mxu0 0.0
  %2452 = vmatpush2.msra.mxu0 0.0
  %2453 = vmatprep.subr.mxu0 0.0
  %2454 = vmatpush2.msra.mxu0 0.0
  %2455 = vmatprep.subr.mxu0 0.0
  %2456 = vmatpush2.msra.mxu0 0.0
  %2457 = vmatprep.subr.mxu0 0.0
  %2458 = vmatpush2.msra.mxu0 0.0
  %2459 = vmatprep.subr.mxu0 0.0
  %2460 = vmatpush2.msra.mxu0 0.0
  %2461 = vmatprep.subr.mxu0 0.0
  %2462 = vmatpush2.msra.mxu0 0.0
  %2463 = vmatprep.subr.mxu0 0.0
  %2464 = vmatpush2.msra.mxu0 0.0
  %2465 = vmatprep.subr.mxu0 0.0
  %2466 = vmatpush2.msra.mxu0 0.0
  %2467 = vmatprep.subr.mxu0 0.0
  %2468 = vmatpush2.msra.mxu0 0.0
  %2469 = vmatprep.subr.mxu0 0.0
  %2470 = vmatpush2.msra.mxu0 0.0
  %2471 = vmatprep.subr.mxu0 0.0
  %2472 = vmatpush2.msra.mxu0 0.0
  %2473 = vmatprep.subr.mxu0 0.0
  %2474 = vmatpush2.msra.mxu0 0.0
  %2475 = vmatprep.subr.mxu0 0.0
  %2476 = vmatpush2.msra.mxu0 0.0
  %2477 = vmatprep.mubr.f32.mxu0 0.0
  %2478 = vmatmul.mubr.f32.gmra.mxu0 %v2411
  %v2479 = vpop.f32.mrf.mxu0
  %v2480 = vadd.f32 0.0, %v2479
  %v2481 = vpop.f32.mrf.mxu0
  %2482 = vdwg.mxu0
  %v2484 = vrot.slane %v2480, 2
  %v2486 = vadd.f32 %v1668, %v2484
  %v2487 = vxor.u32 %v2486, 2147483648
  %v2488 = vmul.f32 %v2487, 1.442695
  %v2489 = vpow.pop %v2488
  %v2490 = vadd.f32 %v2489, 1.0
  %v2491 = vrcp.pop %v2490
  %v2492 = vmul.f32 1.0, %v2491
  %v2493 = vtanh.pop %v2486
  %v2495 = vrot.slane %v2400, 6
  %v2497 = vmul.f32 %v2492, %v2495
  %2499 = vrot.lane.b32.xlu0 %v2493, 32
  %v2500 = vpop.permute.xlu0 %2499
  %v2502 = vmul.f32 %v2492, %v2500
  %2504 = vrot.lane.b32.xlu0 %v2502, 32
  %v2505 = vpop.permute.xlu0 %2504
  %v2507 = vadd.f32 %v2497, %v2505
  %v2508 = vtanh.pop %v2507
  %2510 = vrot.lane.b32.xlu0 %v2508, 32
  %v2511 = vpop.permute.xlu0 %2510
  %v2513 = vmul.f32 %v2492, %v2511
  %v2514 = vsel %vm695, %v1769, %v1875
  %v2515 = vsel %vm126, %v2514, %v1982
  %v2516 = vsel %vm702, %v2515, %v2089
  %v2517 = vsel %vm695, %v2193, %v2299
  %v2518 = vsel %vm126, %v2517, %v2406
  %v2519 = vsel %vm702, %v2518, %v2513
  %v2520 = vld [vmem:[%s11] sm:$0xff]
  %v2521 = vld [vmem:[%s11 + $0x8] sm:$0xff]
  %v2522 = vld [vmem:[%s11 + $0x10] sm:$0xff]
  %v2523 = vld [vmem:[%s11 + $0x18] sm:$0xff]
  %v2524 = vld [vmem:[%s12] sm:$0x1]
  %v2526 = vlaneseq
  %v2527 = vshrl.u32 %v2526, 7
  %v2528 = vsub.s32 0, %v2527
  %v2529 = vrot.slane %v2524, %v2528
  %2533 = vrot.lane.b32.xlu0 %v2516, 64
  %v2534 = vpop.permute.xlu0 %2533
  %2535 = vrot.lane.b32.xlu0 %v2519, 64
  %v2536 = vpop.permute.xlu0 %2535
  %v2537 = vsel %vm726, %v2534, 0
  %v2539 = vsel %vm726, %v2536, 0
  %2541 = vmatprep.subr.mxu0 0.0
  %2542 = vmatpush1.msra.mxu0 0.0
  %2543 = vmatprep.subr.mxu0 0.0
  %2544 = vmatpush1.msra.mxu0 0.0
  %2545 = vmatprep.subr.mxu0 0.0
  %2546 = vmatpush1.msra.mxu0 0.0
  %2547 = vmatprep.subr.mxu0 0.0
  %2548 = vmatpush1.msra.mxu0 0.0
  %2549 = vmatprep.subr.mxu0 0.0
  %2550 = vmatpush1.msra.mxu0 0.0
  %2551 = vmatprep.subr.mxu0 0.0
  %2552 = vmatpush1.msra.mxu0 0.0
  %2553 = vmatprep.subr.mxu0 0.0
  %2554 = vmatpush1.msra.mxu0 0.0
  %2555 = vmatprep.subr.mxu0 0.0
  %2556 = vmatpush1.msra.mxu0 0.0
  %2557 = vmatprep.subr.mxu0 0.0
  %2558 = vmatpush1.msra.mxu0 0.0
  %2559 = vmatprep.subr.mxu0 0.0
  %2560 = vmatpush1.msra.mxu0 0.0
  %2561 = vmatprep.subr.mxu0 0.0
  %2562 = vmatpush1.msra.mxu0 0.0
  %2563 = vmatprep.subr.mxu0 0.0
  %2564 = vmatpush1.msra.mxu0 0.0
  %2565 = vmatprep.subr.mxu0 0.0
  %2566 = vmatpush1.msra.mxu0 %v2523
  %2567 = vmatprep.subr.mxu0 0.0
  %2568 = vmatpush1.msra.mxu0 %v2522
  %2569 = vmatprep.subr.mxu0 0.0
  %2570 = vmatpush1.msra.mxu0 %v2521
  %2571 = vmatprep.subr.mxu0 0.0
  %2572 = vmatpush1.msra.mxu0 %v2520
  %2573 = vmatprep.subr.mxu0 0.0
  %2574 = vmatpush2.msra.mxu0 0.0
  %2575 = vmatprep.subr.mxu0 0.0
  %2576 = vmatpush2.msra.mxu0 0.0
  %2577 = vmatprep.subr.mxu0 0.0
  %2578 = vmatpush2.msra.mxu0 0.0
  %2579 = vmatprep.subr.mxu0 0.0
  %2580 = vmatpush2.msra.mxu0 0.0
  %2581 = vmatprep.subr.mxu0 0.0
  %2582 = vmatpush2.msra.mxu0 0.0
  %2583 = vmatprep.subr.mxu0 0.0
  %2584 = vmatpush2.msra.mxu0 0.0
  %2585 = vmatprep.subr.mxu0 0.0
  %2586 = vmatpush2.msra.mxu0 0.0
  %2587 = vmatprep.subr.mxu0 0.0
  %2588 = vmatpush2.msra.mxu0 0.0
  %2589 = vmatprep.subr.mxu0 0.0
  %2590 = vmatpush2.msra.mxu0 0.0
  %2591 = vmatprep.subr.mxu0 0.0
  %2592 = vmatpush2.msra.mxu0 0.0
  %2593 = vmatprep.subr.mxu0 0.0
  %2594 = vmatpush2.msra.mxu0 0.0
  %2595 = vmatprep.subr.mxu0 0.0
  %2596 = vmatpush2.msra.mxu0 0.0
  %2597 = vmatprep.subr.mxu0 0.0
  %2598 = vmatpush2.msra.mxu0 0.0
  %2599 = vmatprep.subr.mxu0 0.0
  %2600 = vmatpush2.msra.mxu0 0.0
  %2601 = vmatprep.subr.mxu0 0.0
  %2602 = vmatpush2.msra.mxu0 0.0
  %2603 = vmatprep.subr.mxu0 0.0
  %2604 = vmatpush2.msra.mxu0 0.0
  %2605 = vmatprep.mubr.f32.mxu0 0.0
  %2606 = vmatmul.mubr.f32.gmra.mxu0 %v2537
  %v2607 = vpop.f32.mrf.mxu0
  %v2608 = vadd.f32 %v2529, %v2607
  %v2609 = vpop.f32.mrf.mxu0
  %2610 = vmatprep.mubr.f32.mxu0 0.0
  %2611 = vmatmul.mubr.f32.gmra.mxu0 %v2539
  %v2612 = vpop.f32.mrf.mxu0
  %v2613 = vadd.f32 %v2529, %v2612
  %v2614 = vpop.f32.mrf.mxu0
  %2615 = vdwg.mxu0
  %vm2616 = vcmask 48128
  %2617 = vst.msk [vmem:[%s13] sm:$0xff] %vm2616, %v2608
  %2618 = vst.msk [vmem:[%s13 + $0x8] sm:$0xff] %vm2616, %v2613
  // Predicated region
  $region54: #{tpu_custom_call.1} parent=0 // pred_check
    _
  $region55: #{tpu_custom_call.1} parent=0 // pred_check_branch
    %2620 = sbr.rel (0) target = $region57
  $region56: #{tpu_custom_call.1} parent=0 // pred_region
    _
  $region57: #{tpu_custom_call.1} parent=0 // pred_fallthru
    _
  // Predicated region
  $region58: #{tpu_custom_call.1} parent=0 // pred_check
    _
  $region59: #{tpu_custom_call.1} parent=0 // pred_check_branch
    %2622 = sbr.rel (0) target = $region61
  $region60: #{tpu_custom_call.1} parent=0 // pred_region
    _
  $region61: #{tpu_custom_call.1} parent=0 // pred_fallthru
    _

</llo_original>
